<compile_context>
chip_gen: v7x
topology: tpu7x:2x2x1
jax: 0.10.0
libtpu: 0.0.40
codegen_flags: <defaults>
</compile_context>

<pallas_src>
import math

import jax
import jax.numpy as jnp
from jax.experimental import pallas as pl

# ------------------------- configuration (small, consistent with the module) -------------------------
B = 8                      # batch
IMAGE_SIZE = 2             # -> num_patches = max_seq_len = 2
PATCH_SIZE = 1             # -> dim_input = 1
SEQ = IMAGE_SIZE // PATCH_SIZE
DIM_INPUT = PATCH_SIZE

DIM = 32                   # transformer / condition dim  (model=dict(dim=32, ...))
DEPTH = 2                  # transformer depth
HEADS = 4
DIM_HEAD = 8
INNER = HEADS * DIM_HEAD   # 32
FF = 4 * DIM               # 128
MLP_DEPTH = 2
MLP_WIDTH = DIM            # default(mlp_width, dim)
LN_EPS = 1e-5

# ElucidatedDiffusion constants (defaults)
SIGMA_DATA = 0.5
P_MEAN = -1.2
P_STD = 1.2

assert SEQ == 2 and DIM_INPUT == 1   # the reference forward is written for scalar (x1 -> x2) pairs

# ------------------------- packed parameter slab layout -------------------------
P_COLS = 128   # lane-dense slab width


def _alloc_layout():
    off = {}
    r = 0

    def take(name, rows):
        nonlocal r
        if rows > 1:                       # keep multi-row blocks sublane (8) aligned
            r = (r + 7) // 8 * 8
        off[name] = r
        r += rows

    for l in range(DEPTH):
        take(f"wqkv{l}", DIM)              # [DIM, 3*INNER]  fused Q|K|V
        take(f"wo{l}", INNER)              # [INNER, DIM]
        take(f"ffw1{l}", DIM)              # [DIM, FF]
        take(f"ffw2{l}", FF)               # [FF, DIM]
        for nm in ("ln1g", "ln1b", "ln2g", "ln2b", "ffb1", "ffb2"):
            take(f"{nm}{l}", 1)
    take("seg", INNER)                     # [INNER, HEADS] head-block indicator
    take("segT", HEADS)                    # [HEADS, INNER]
    take("tw_sin", DIM // 2)               # time-emb weight, sin rows
    take("tw_cos", DIM // 2)               # time-emb weight, cos rows
    take("lnfg", 1); take("lnfb", 1)
    take("projw", 1); take("projb", 1)
    take("start", 1)
    for s in range(SEQ):
        take(f"pos{s}", 1)
    take("sinw", 1)
    take("tw_time", 1); take("tb", 1)
    take("blkb2", 1)                       # [1, MLP_DEPTH]
    for l in range(MLP_DEPTH):
        take(f"blkb1_{l}", 1)
        take(f"blkw1_{l}", 1)              # Linear(1, W) weight as a row
        take(f"blkw2T_{l}", 1)             # Linear(W, 1) weight transposed to a row
        take(f"adawT_{l}", 1)              # AdaLN gamma weight [DIM,1] transposed
        take(f"gowT_{l}", 1)               # block_out_gamma weight [DIM,1] transposed
    return off, (r + 7) // 8 * 8


P_OFF, P_ROWS = _alloc_layout()


# ------------------------- the fused kernel -------------------------
def fused_forward_kernel(inp_ref, sigma_ref, noise_ref, p_ref, loss_ref, loss_nw_ref):
    f32 = jnp.float32

    def prow(name, w):                       # [1, w] parameter row
        r = P_OFF[name]
        return p_ref[r:r + 1, 0:w]

    def pmat(name, rows, cols):              # [rows, cols] parameter matrix
        r = P_OFF[name]
        return p_ref[r:r + rows, 0:cols]

    def layer_norm(x, g, b):
        mu = jnp.mean(x, axis=-1, keepdims=True)
        var = jnp.mean(jnp.square(x - mu), axis=-1, keepdims=True)
        return (x - mu) * jax.lax.rsqrt(var + LN_EPS) * g + b

    inp = inp_ref[...].astype(f32)           # [B, 2]
    Bb = inp.shape[0]
    x1 = inp[:, 0:1]                         # [B, 1]
    x2 = inp[:, 1:2]

    seg = pmat("seg", INNER, HEADS)          # [INNER, HEADS]
    segT = pmat("segT", HEADS, INNER)        # [HEADS, INNER]
    scale = 1.0 / math.sqrt(DIM_HEAD)

    # ---- causal transformer decoder, token-major layout: rows [0:B]=pos0, [B:2B]=pos1 ----
    # TODO(synk): x-transformers `Decoder` internals are not in the provided source; approximated
    #             as a standard pre-LN causal MHA + GELU feed-forward stack with a final LayerNorm.
    def transformer(h):                      # h: [2B, DIM]
        for l in range(DEPTH):
            n1 = layer_norm(h, prow(f"ln1g{l}", DIM), prow(f"ln1b{l}", DIM))
            qkv = jnp.dot(n1, pmat(f"wqkv{l}", DIM, 3 * INNER),
                          preferred_element_type=f32)                        # [2B, 3*INNER]
            q1 = qkv[Bb:, 0:INNER]
            k0 = qkv[:Bb, INNER:2 * INNER]
            k1 = qkv[Bb:, INNER:2 * INNER]
            v0 = qkv[:Bb, 2 * INNER:3 * INNER]
            v1 = qkv[Bb:, 2 * INNER:3 * INNER]
            # SEQ==2 causal attention: pos-0 attends only to itself -> output is v0.
            # pos-1 per-head scores via block-diagonal head-indicator matmuls (no head loop).
            s0 = jnp.dot(q1 * k0, seg, preferred_element_type=f32) * scale   # [B, H]
            s1 = jnp.dot(q1 * k1, seg, preferred_element_type=f32) * scale
            m = jnp.maximum(s0, s1)
            e0 = jnp.exp(s0 - m)
            e1 = jnp.exp(s1 - m)
            inv = pl.reciprocal(e0 + e1, approx=True)
            w0 = jnp.dot(e0 * inv, segT, preferred_element_type=f32)         # [B, INNER]
            w1 = jnp.dot(e1 * inv, segT, preferred_element_type=f32)
            attn = jnp.concatenate([v0, w0 * v0 + w1 * v1], axis=0)          # [2B, INNER]
            h = h + jnp.dot(attn, pmat(f"wo{l}", INNER, DIM), preferred_element_type=f32)

            n2 = layer_norm(h, prow(f"ln2g{l}", DIM), prow(f"ln2b{l}", DIM))
            f = jnp.dot(n2, pmat(f"ffw1{l}", DIM, FF), preferred_element_type=f32) \
                + prow(f"ffb1{l}", FF)
            f = jax.nn.gelu(f, approximate=True)
            h = h + jnp.dot(f, pmat(f"ffw2{l}", FF, DIM), preferred_element_type=f32) \
                + prow(f"ffb2{l}", DIM)
        return layer_norm(h, prow("lnfg", DIM), prow("lnfb", DIM))

    projw = prow("projw", DIM)
    projb = prow("projb", DIM)
    pos0 = prow("pos0", DIM)
    pos1 = prow("pos1", DIM)
    start = prow("start", DIM)

    x1_proj = x1 * projw + projb             # proj_in with dim_input == 1 as a broadcast
    x2_proj = x2 * projw + projb

    # stage 1: (start_token, proj(x1)) + pos -> transformer -> last-position output
    h1 = jnp.concatenate(
        [jnp.broadcast_to(start + pos0, (Bb, DIM)), x1_proj + pos1], axis=0)
    x1_out = transformer(h1)[Bb:, :]         # [B, DIM]

    # stage 2: (x1_out, proj(x2)) + pos -> transformer -> conditioning for every token
    h2 = jnp.concatenate([x1_out + pos0, x2_proj + pos1], axis=0)
    cond = transformer(h2)                   # [2B, DIM], token-major (pos, batch) order

    # ---- ElucidatedDiffusion training loss (row order is token-major; means are order-invariant) ----
    target = jnp.concatenate([x1, x2], axis=0)            # [2B, 1]  == pack_one(seq) reordered
    sigma = sigma_ref[...]                                # [2B, 1]
    noise = noise_ref[...]                                # [2B, 1]

    sd2 = SIGMA_DATA * SIGMA_DATA
    sig2 = sigma * sigma
    noised = target + sigma * noise
    c_in = jax.lax.rsqrt(sig2 + sd2)
    c_skip = sd2 / (sig2 + sd2)
    c_out = sigma * SIGMA_DATA * jax.lax.rsqrt(sig2 + sd2)
    times = jnp.log(jnp.maximum(sigma, 1e-20)) * 0.25     # c_noise(sigma)

    # MLP.to_time_emb: [times | sin | cos] @ W done as three partial products (no 33-wide concat)
    freqs = times * prow("sinw", DIM // 2) * (2.0 * math.pi)                 # [2B, DIM/2]
    t_emb = (times * prow("tw_time", DIM)
             + jnp.dot(jnp.sin(freqs), pmat("tw_sin", DIM // 2, DIM), preferred_element_type=f32)
             + jnp.dot(jnp.cos(freqs), pmat("tw_cos", DIM // 2, DIM), preferred_element_type=f32)
             + prow("tb", DIM))
    c = jax.nn.silu(t_emb + cond)                         # conditioned signal, [2B, DIM]

    # ---- MLP denoiser on c_in * noised (dim_input == 1) ----
    d = c_in * noised                                     # [2B, 1]
    for l in range(MLP_DEPTH):
        residual = d
        mu = jnp.mean(d, axis=-1, keepdims=True)          # AdaptiveLayerNorm (no affine)
        var = jnp.mean(jnp.square(d - mu), axis=-1, keepdims=True)
        normed = (d - mu) * jax.lax.rsqrt(var + LN_EPS)
        gamma = jnp.sum(c * prow(f"adawT_{l}", DIM), axis=-1, keepdims=True)
        xb = normed * (gamma + 1.0)
        hb = xb * prow(f"blkw1_{l}", MLP_WIDTH) + prow(f"blkb1_{l}", MLP_WIDTH)   # Linear(1, W)
        hb = jax.nn.silu(hb)
        b2 = p_ref[P_OFF["blkb2"]:P_OFF["blkb2"] + 1, l:l + 1]                    # [1, 1]
        o = jnp.sum(hb * prow(f"blkw2T_{l}", MLP_WIDTH), axis=-1, keepdims=True) + b2
        g2 = jnp.sum(c * prow(f"gowT_{l}", DIM), axis=-1, keepdims=True)
        d = o * (g2 + 1.0) + residual

    # preconditioned output; clamp_during_sampling=True is the module default and
    # preconditioned_network_forward applies it on the training path as well -> keep the clamp.
    pred = c_skip * noised + c_out * d
    pred = jnp.clip(pred, -1.0, 1.0)

    per_row = jnp.mean(jnp.square(pred - target), axis=-1, keepdims=True)    # [2B, 1]
    weight = (sig2 + sd2) / (sig2 * sd2)                                     # loss_weight(sigma)
    loss_ref[...] = jnp.mean(per_row * weight, axis=0, keepdims=True)
    loss_nw_ref[...] = jnp.mean(per_row, axis=0, keepdims=True)


# ------------------------- wrapper -------------------------
def _full_spec(a):
    """Whole-array block (grid=(1,)): block_shape == array shape satisfies TPU tiling rules."""
    zeros = (0,) * a.ndim
    return pl.BlockSpec(a.shape, lambda i, _z=zeros: _z)


def image_autoregressive_diffusion_forward(inputs, packed_params, key):
    """inputs: [B, 2] -> (diffusion_loss, diffusion_loss_noweight)."""
    b = inputs.shape[0]
    n = b * SEQ
    # ElucidatedDiffusion.forward randomness (torch.randn -> jax.random, deterministic here)
    k_sig, k_noise = jax.random.split(key)
    sigma = jnp.exp(P_MEAN + P_STD * jax.random.normal(k_sig, (n, 1), jnp.float32))
    noise = jax.random.normal(k_noise, (n, DIM_INPUT), jnp.float32)

    ins = (inputs.astype(jnp.float32), sigma, noise, packed_params)
    loss, loss_nw = pl.pallas_call(
        fused_forward_kernel,
        out_shape=(jax.ShapeDtypeStruct((1, 1), jnp.float32),
                   jax.ShapeDtypeStruct((1, 1), jnp.float32)),
        grid=(1,),
        in_specs=[_full_spec(a) for a in ins],
        out_specs=(pl.BlockSpec((1, 1), lambda i: (0, 0)),
                   pl.BlockSpec((1, 1), lambda i: (0, 0))),
    )(*ins)
    return loss[0, 0], loss_nw[0, 0]


# ------------------------- parameters (deterministic, shapes per module __init__) -------------------------
def init_packed_params(key):
    ks = iter(jax.random.split(key, 32))
    nrm = lambda shape, s=0.02: jax.random.normal(next(ks), shape, jnp.float32) * s
    buf = jnp.zeros((P_ROWS, P_COLS), jnp.float32)

    def put(name, val):
        nonlocal buf
        val = jnp.asarray(val, jnp.float32)
        if val.ndim == 1:
            val = val[None, :]
        r = P_OFF[name]
        buf = buf.at[r:r + val.shape[0], 0:val.shape[1]].set(val)

    for l in range(DEPTH):
        put(f"wqkv{l}", nrm((DIM, 3 * INNER)))          # fused Wq|Wk|Wv
        put(f"wo{l}", nrm((INNER, DIM)))
        put(f"ffw1{l}", nrm((DIM, FF)))
        put(f"ffw2{l}", nrm((FF, DIM)))
        put(f"ln1g{l}", jnp.ones((DIM,)))
        put(f"ln1b{l}", jnp.zeros((DIM,)))
        put(f"ln2g{l}", jnp.ones((DIM,)))
        put(f"ln2b{l}", jnp.zeros((DIM,)))
        put(f"ffb1{l}", nrm((FF,)))
        put(f"ffb2{l}", nrm((DIM,)))
    # head-block indicator constants (packed so the kernel needs no iota / relayout)
    head_of = jnp.arange(INNER) // DIM_HEAD
    seg = (head_of[:, None] == jnp.arange(HEADS)[None, :]).astype(jnp.float32)
    put("seg", seg)
    put("segT", seg.T)
    put("lnfg", jnp.ones((DIM,)))
    put("lnfb", jnp.zeros((DIM,)))
    put("projw", nrm((1, DIM)))
    put("projb", nrm((DIM,)))
    put("start", jnp.zeros((DIM,)))                                  # nn.Parameter(zeros)
    pos = jax.random.normal(next(ks), (SEQ, DIM), jnp.float32)       # nn.Embedding ~ N(0,1)
    for s in range(SEQ):
        put(f"pos{s}", pos[s])
    put("sinw", jax.random.normal(next(ks), (DIM // 2,), jnp.float32))   # randn in __init__
    tw = nrm((DIM + 1, DIM))                                         # Linear(dim_cond+1, dim_cond)
    put("tw_time", tw[0])
    put("tw_sin", tw[1:1 + DIM // 2])
    put("tw_cos", tw[1 + DIM // 2:])
    put("tb", nrm((DIM,)))
    put("blkb2", nrm((MLP_DEPTH,)))
    for l in range(MLP_DEPTH):
        put(f"blkb1_{l}", nrm((MLP_WIDTH,)))
        put(f"blkw1_{l}", nrm((DIM_INPUT, MLP_WIDTH)))
        put(f"blkw2T_{l}", nrm((MLP_WIDTH,)))                        # [W,1] weight, transposed
        put(f"adawT_{l}", jnp.zeros((DIM,)))                         # nn.init.zeros_
        put(f"gowT_{l}", jnp.zeros((DIM,)))                          # nn.init.zeros_
    return buf


if __name__ == "__main__":
    key = jax.random.PRNGKey(0)
    k_param, k_in, k_fwd = jax.random.split(key, 3)
    packed = init_packed_params(k_param)
    inputs = jax.random.normal(k_in, (B, 2), jnp.float32)   # ImageAutoregressiveDiffusion takes [B, 2]

    fwd = jax.jit(image_autoregressive_diffusion_forward)
    loss, loss_nw = fwd(inputs, packed, k_fwd)
    jax.block_until_ready((loss, loss_nw))
    print("KERNEL_OK")
</pallas_src>

<mosaic_0001>
module attributes {stable_mosaic.version = 11 : i64} {
  func.func @fused_forward_kernel(%arg0: i32, %arg1: memref<8x2xf32, #tpu.memory_space<vmem>>, %arg2: memref<16x1xf32, #tpu.memory_space<vmem>>, %arg3: memref<16x1xf32, #tpu.memory_space<vmem>>, %arg4: memref<560x128xf32, #tpu.memory_space<vmem>>, %arg5: memref<1x1xf32, #tpu.memory_space<vmem>>, %arg6: memref<1x1xf32, #tpu.memory_space<vmem>>) attributes {dimension_semantics = [#tpu.dimension_semantics<arbitrary>], iteration_bounds = array<i64: 1>, scalar_prefetch = 0 : i64, scratch_operands = 0 : i64, tpu.core_type = #tpu.core_type<tc>, window_params = [{pipeline_mode = #tpu.pipeline_mode<synchronous>, transform_indices = @transform_0, window_bounds = array<i64: 8, 2>}, {pipeline_mode = #tpu.pipeline_mode<synchronous>, transform_indices = @transform_1, window_bounds = array<i64: 16, 1>}, {pipeline_mode = #tpu.pipeline_mode<synchronous>, transform_indices = @transform_2, window_bounds = array<i64: 16, 1>}, {pipeline_mode = #tpu.pipeline_mode<synchronous>, transform_indices = @transform_3, window_bounds = array<i64: 560, 128>}, {pipeline_mode = #tpu.pipeline_mode<synchronous>, transform_indices = @transform_4, window_bounds = array<i64: 1, 1>}, {pipeline_mode = #tpu.pipeline_mode<synchronous>, transform_indices = @transform_5, window_bounds = array<i64: 1, 1>}]} {
    %c0 = arith.constant 0 : index
    %c0_0 = arith.constant 0 : index
    %0 = vector.load %arg1[%c0, %c0_0] : memref<8x2xf32, #tpu.memory_space<vmem>>, vector<8x2xf32>
    %1 = vector.extract_strided_slice %0 {offsets = [0, 0], sizes = [8, 1], strides = [1, 1]} : vector<8x2xf32> to vector<8x1xf32>
    %2 = vector.extract_strided_slice %0 {offsets = [0, 1], sizes = [8, 1], strides = [1, 1]} : vector<8x2xf32> to vector<8x1xf32>
    %c464 = arith.constant 464 : index
    %c0_1 = arith.constant 0 : index
    %3 = vector.load %arg4[%c464, %c0_1] : memref<560x128xf32, #tpu.memory_space<vmem>>, vector<32x4xf32>
    %c496 = arith.constant 496 : index
    %c0_2 = arith.constant 0 : index
    %4 = vector.load %arg4[%c496, %c0_2] : memref<560x128xf32, #tpu.memory_space<vmem>>, vector<4x32xf32>
    %c538 = arith.constant 538 : index
    %c0_3 = arith.constant 0 : index
    %5 = vector.load %arg4[%c538, %c0_3] : memref<560x128xf32, #tpu.memory_space<vmem>>, vector<1x32xf32>
    %c539 = arith.constant 539 : index
    %c0_4 = arith.constant 0 : index
    %6 = vector.load %arg4[%c539, %c0_4] : memref<560x128xf32, #tpu.memory_space<vmem>>, vector<1x32xf32>
    %c541 = arith.constant 541 : index
    %c0_5 = arith.constant 0 : index
    %7 = vector.load %arg4[%c541, %c0_5] : memref<560x128xf32, #tpu.memory_space<vmem>>, vector<1x32xf32>
    %c542 = arith.constant 542 : index
    %c0_6 = arith.constant 0 : index
    %8 = vector.load %arg4[%c542, %c0_6] : memref<560x128xf32, #tpu.memory_space<vmem>>, vector<1x32xf32>
    %c540 = arith.constant 540 : index
    %c0_7 = arith.constant 0 : index
    %9 = vector.load %arg4[%c540, %c0_7] : memref<560x128xf32, #tpu.memory_space<vmem>>, vector<1x32xf32>
    %10 = vector.broadcast %1 : vector<8x1xf32> to vector<8x32xf32>
    %11 = vector.broadcast %5 : vector<1x32xf32> to vector<8x32xf32>
    %12 = arith.mulf %10, %11 : vector<8x32xf32>
    %13 = vector.broadcast %6 : vector<1x32xf32> to vector<8x32xf32>
    %14 = arith.addf %12, %13 : vector<8x32xf32>
    %15 = vector.broadcast %2 : vector<8x1xf32> to vector<8x32xf32>
    %16 = vector.broadcast %5 : vector<1x32xf32> to vector<8x32xf32>
    %17 = arith.mulf %15, %16 : vector<8x32xf32>
    %18 = vector.broadcast %6 : vector<1x32xf32> to vector<8x32xf32>
    %19 = arith.addf %17, %18 : vector<8x32xf32>
    %20 = arith.addf %9, %7 : vector<1x32xf32>
    %21 = vector.shape_cast %20 : vector<1x32xf32> to vector<1x32xf32>
    %22 = vector.broadcast %21 : vector<1x32xf32> to vector<8x32xf32>
    %23 = vector.broadcast %8 : vector<1x32xf32> to vector<8x32xf32>
    %24 = arith.addf %14, %23 : vector<8x32xf32>
    %25 = tpu.concatenate %22, %24 in 0 : vector<8x32xf32>, vector<8x32xf32> -> vector<16x32xf32>
    %c224 = arith.constant 224 : index
    %c0_8 = arith.constant 0 : index
    %26 = vector.load %arg4[%c224, %c0_8] : memref<560x128xf32, #tpu.memory_space<vmem>>, vector<1x32xf32>
    %c225 = arith.constant 225 : index
    %c0_9 = arith.constant 0 : index
    %27 = vector.load %arg4[%c225, %c0_9] : memref<560x128xf32, #tpu.memory_space<vmem>>, vector<1x32xf32>
    %cst = arith.constant dense<0.000000e+00> : vector<16xf32>
    %28 = vector.multi_reduction <add>, %25, %cst [1] : vector<16x32xf32> to vector<16xf32>
    %29 = vector.shape_cast %28 : vector<16xf32> to vector<16x1xf32>
    %cst_10 = arith.constant 3.200000e+01 : f32
    %30 = vector.broadcast %cst_10 : f32 to vector<16x1xf32>
    %31 = arith.divf %29, %30 : vector<16x1xf32>
    %32 = vector.broadcast %31 : vector<16x1xf32> to vector<16x32xf32>
    %33 = arith.subf %25, %32 : vector<16x32xf32>
    %34 = arith.mulf %33, %33 : vector<16x32xf32>
    %cst_11 = arith.constant dense<0.000000e+00> : vector<16xf32>
    %35 = vector.multi_reduction <add>, %34, %cst_11 [1] : vector<16x32xf32> to vector<16xf32>
    %36 = vector.shape_cast %35 : vector<16xf32> to vector<16x1xf32>
    %cst_12 = arith.constant 3.200000e+01 : f32
    %37 = vector.broadcast %cst_12 : f32 to vector<16x1xf32>
    %38 = arith.divf %36, %37 : vector<16x1xf32>
    %39 = vector.broadcast %31 : vector<16x1xf32> to vector<16x32xf32>
    %40 = arith.subf %25, %39 : vector<16x32xf32>
    %cst_13 = arith.constant 9.99999974E-6 : f32
    %41 = vector.broadcast %cst_13 : f32 to vector<16x1xf32>
    %42 = arith.addf %38, %41 : vector<16x1xf32>
    %43 = math.rsqrt %42 : vector<16x1xf32>
    %44 = vector.broadcast %43 : vector<16x1xf32> to vector<16x32xf32>
    %45 = arith.mulf %40, %44 : vector<16x32xf32>
    %46 = vector.broadcast %26 : vector<1x32xf32> to vector<16x32xf32>
    %47 = arith.mulf %45, %46 : vector<16x32xf32>
    %48 = vector.broadcast %27 : vector<1x32xf32> to vector<16x32xf32>
    %49 = arith.addf %47, %48 : vector<16x32xf32>
    %c0_14 = arith.constant 0 : index
    %c0_15 = arith.constant 0 : index
    %50 = vector.load %arg4[%c0_14, %c0_15] : memref<560x128xf32, #tpu.memory_space<vmem>>, vector<32x96xf32>
    %cst_16 = arith.constant dense<0.000000e+00> : vector<16x96xf32>
    %51 = tpu.matmul %49, %50, %cst_16 {dimension_numbers = #tpu.dot_dimension_numbers<[1], [0], [0], [1], [0, 0, 1, 1], [], []>} : vector<16x32xf32>, vector<32x96xf32>, vector<16x96xf32> -> vector<16x96xf32>
    %52 = vector.extract_strided_slice %51 {offsets = [8, 0], sizes = [8, 32], strides = [1, 1]} : vector<16x96xf32> to vector<8x32xf32>
    %53 = vector.extract_strided_slice %51 {offsets = [0, 32], sizes = [8, 32], strides = [1, 1]} : vector<16x96xf32> to vector<8x32xf32>
    %54 = vector.extract_strided_slice %51 {offsets = [8, 32], sizes = [8, 32], strides = [1, 1]} : vector<16x96xf32> to vector<8x32xf32>
    %55 = vector.extract_strided_slice %51 {offsets = [0, 64], sizes = [8, 32], strides = [1, 1]} : vector<16x96xf32> to vector<8x32xf32>
    %56 = vector.extract_strided_slice %51 {offsets = [8, 64], sizes = [8, 32], strides = [1, 1]} : vector<16x96xf32> to vector<8x32xf32>
    %57 = arith.mulf %52, %53 : vector<8x32xf32>
    %cst_17 = arith.constant dense<0.000000e+00> : vector<8x4xf32>
    %58 = tpu.matmul %57, %3, %cst_17 {dimension_numbers = #tpu.dot_dimension_numbers<[1], [0], [0], [1], [0, 0, 1, 1], [], []>} : vector<8x32xf32>, vector<32x4xf32>, vector<8x4xf32> -> vector<8x4xf32>
    %cst_18 = arith.constant 0.353553385 : f32
    %59 = vector.broadcast %cst_18 : f32 to vector<8x4xf32>
    %60 = arith.mulf %58, %59 : vector<8x4xf32>
    %61 = arith.mulf %52, %54 : vector<8x32xf32>
    %cst_19 = arith.constant dense<0.000000e+00> : vector<8x4xf32>
    %62 = tpu.matmul %61, %3, %cst_19 {dimension_numbers = #tpu.dot_dimension_numbers<[1], [0], [0], [1], [0, 0, 1, 1], [], []>} : vector<8x32xf32>, vector<32x4xf32>, vector<8x4xf32> -> vector<8x4xf32>
    %cst_20 = arith.constant 0.353553385 : f32
    %63 = vector.broadcast %cst_20 : f32 to vector<8x4xf32>
    %64 = arith.mulf %62, %63 : vector<8x4xf32>
    %65 = arith.maximumf %60, %64 : vector<8x4xf32>
    %66 = arith.subf %60, %65 : vector<8x4xf32>
    %67 = math.exp %66 : vector<8x4xf32>
    %68 = arith.subf %64, %65 : vector<8x4xf32>
    %69 = math.exp %68 : vector<8x4xf32>
    %70 = arith.addf %67, %69 : vector<8x4xf32>
    %71 = tpu.reciprocal %70 {approx = true} : vector<8x4xf32> -> vector<8x4xf32>
    %72 = arith.mulf %67, %71 : vector<8x4xf32>
    %cst_21 = arith.constant dense<0.000000e+00> : vector<8x32xf32>
    %73 = tpu.matmul %72, %4, %cst_21 {dimension_numbers = #tpu.dot_dimension_numbers<[1], [0], [0], [1], [0, 0, 1, 1], [], []>} : vector<8x4xf32>, vector<4x32xf32>, vector<8x32xf32> -> vector<8x32xf32>
    %74 = arith.mulf %69, %71 : vector<8x4xf32>
    %cst_22 = arith.constant dense<0.000000e+00> : vector<8x32xf32>
    %75 = tpu.matmul %74, %4, %cst_22 {dimension_numbers = #tpu.dot_dimension_numbers<[1], [0], [0], [1], [0, 0, 1, 1], [], []>} : vector<8x4xf32>, vector<4x32xf32>, vector<8x32xf32> -> vector<8x32xf32>
    %76 = arith.mulf %73, %55 : vector<8x32xf32>
    %77 = arith.mulf %75, %56 : vector<8x32xf32>
    %78 = arith.addf %76, %77 : vector<8x32xf32>
    %79 = tpu.concatenate %55, %78 in 0 : vector<8x32xf32>, vector<8x32xf32> -> vector<16x32xf32>
    %c32 = arith.constant 32 : index
    %c0_23 = arith.constant 0 : index
    %80 = vector.load %arg4[%c32, %c0_23] : memref<560x128xf32, #tpu.memory_space<vmem>>, vector<32x32xf32>
    %cst_24 = arith.constant dense<0.000000e+00> : vector<16x32xf32>
    %81 = tpu.matmul %79, %80, %cst_24 {dimension_numbers = #tpu.dot_dimension_numbers<[1], [0], [0], [1], [0, 0, 1, 1], [], []>} : vector<16x32xf32>, vector<32x32xf32>, vector<16x32xf32> -> vector<16x32xf32>
    %82 = arith.addf %25, %81 : vector<16x32xf32>
    %c226 = arith.constant 226 : index
    %c0_25 = arith.constant 0 : index
    %83 = vector.load %arg4[%c226, %c0_25] : memref<560x128xf32, #tpu.memory_space<vmem>>, vector<1x32xf32>
    %c227 = arith.constant 227 : index
    %c0_26 = arith.constant 0 : index
    %84 = vector.load %arg4[%c227, %c0_26] : memref<560x128xf32, #tpu.memory_space<vmem>>, vector<1x32xf32>
    %cst_27 = arith.constant dense<0.000000e+00> : vector<16xf32>
    %85 = vector.multi_reduction <add>, %82, %cst_27 [1] : vector<16x32xf32> to vector<16xf32>
    %86 = vector.shape_cast %85 : vector<16xf32> to vector<16x1xf32>
    %cst_28 = arith.constant 3.200000e+01 : f32
    %87 = vector.broadcast %cst_28 : f32 to vector<16x1xf32>
    %88 = arith.divf %86, %87 : vector<16x1xf32>
    %89 = vector.broadcast %88 : vector<16x1xf32> to vector<16x32xf32>
    %90 = arith.subf %82, %89 : vector<16x32xf32>
    %91 = arith.mulf %90, %90 : vector<16x32xf32>
    %cst_29 = arith.constant dense<0.000000e+00> : vector<16xf32>
    %92 = vector.multi_reduction <add>, %91, %cst_29 [1] : vector<16x32xf32> to vector<16xf32>
    %93 = vector.shape_cast %92 : vector<16xf32> to vector<16x1xf32>
    %cst_30 = arith.constant 3.200000e+01 : f32
    %94 = vector.broadcast %cst_30 : f32 to vector<16x1xf32>
    %95 = arith.divf %93, %94 : vector<16x1xf32>
    %96 = vector.broadcast %88 : vector<16x1xf32> to vector<16x32xf32>
    %97 = arith.subf %82, %96 : vector<16x32xf32>
    %cst_31 = arith.constant 9.99999974E-6 : f32
    %98 = vector.broadcast %cst_31 : f32 to vector<16x1xf32>
    %99 = arith.addf %95, %98 : vector<16x1xf32>
    %100 = math.rsqrt %99 : vector<16x1xf32>
    %101 = vector.broadcast %100 : vector<16x1xf32> to vector<16x32xf32>
    %102 = arith.mulf %97, %101 : vector<16x32xf32>
    %103 = vector.broadcast %83 : vector<1x32xf32> to vector<16x32xf32>
    %104 = arith.mulf %102, %103 : vector<16x32xf32>
    %105 = vector.broadcast %84 : vector<1x32xf32> to vector<16x32xf32>
    %106 = arith.addf %104, %105 : vector<16x32xf32>
    %c64 = arith.constant 64 : index
    %c0_32 = arith.constant 0 : index
    %107 = vector.load %arg4[%c64, %c0_32] : memref<560x128xf32, #tpu.memory_space<vmem>>, vector<32x128xf32>
    %cst_33 = arith.constant dense<0.000000e+00> : vector<16x128xf32>
    %108 = tpu.matmul %106, %107, %cst_33 {dimension_numbers = #tpu.dot_dimension_numbers<[1], [0], [0], [1], [0, 0, 1, 1], [], []>} : vector<16x32xf32>, vector<32x128xf32>, vector<16x128xf32> -> vector<16x128xf32>
    %c228 = arith.constant 228 : index
    %c0_34 = arith.constant 0 : index
    %109 = vector.load %arg4[%c228, %c0_34] : memref<560x128xf32, #tpu.memory_space<vmem>>, vector<1x128xf32>
    %110 = vector.broadcast %109 : vector<1x128xf32> to vector<16x128xf32>
    %111 = arith.addf %108, %110 : vector<16x128xf32>
    %112 = arith.mulf %111, %111 : vector<16x128xf32>
    %113 = arith.mulf %111, %112 : vector<16x128xf32>
    %cst_35 = arith.constant 4.471500e-02 : f32
    %114 = vector.broadcast %cst_35 : f32 to vector<16x128xf32>
    %115 = arith.mulf %114, %113 : vector<16x128xf32>
    %116 = arith.addf %111, %115 : vector<16x128xf32>
    %cst_36 = arith.constant 0.797884583 : f32
    %117 = vector.broadcast %cst_36 : f32 to vector<16x128xf32>
    %118 = arith.mulf %117, %116 : vector<16x128xf32>
    %119 = math.tanh %118 : vector<16x128xf32>
    %cst_37 = arith.constant 1.000000e+00 : f32
    %120 = vector.broadcast %cst_37 : f32 to vector<16x128xf32>
    %121 = arith.addf %120, %119 : vector<16x128xf32>
    %cst_38 = arith.constant 5.000000e-01 : f32
    %122 = vector.broadcast %cst_38 : f32 to vector<16x128xf32>
    %123 = arith.mulf %122, %121 : vector<16x128xf32>
    %124 = arith.mulf %111, %123 : vector<16x128xf32>
    %c96 = arith.constant 96 : index
    %c0_39 = arith.constant 0 : index
    %125 = vector.load %arg4[%c96, %c0_39] : memref<560x128xf32, #tpu.memory_space<vmem>>, vector<128x32xf32>
    %cst_40 = arith.constant dense<0.000000e+00> : vector<16x32xf32>
    %126 = tpu.matmul %124, %125, %cst_40 {dimension_numbers = #tpu.dot_dimension_numbers<[1], [0], [0], [1], [0, 0, 1, 1], [], []>} : vector<16x128xf32>, vector<128x32xf32>, vector<16x32xf32> -> vector<16x32xf32>
    %127 = arith.addf %82, %126 : vector<16x32xf32>
    %c229 = arith.constant 229 : index
    %c0_41 = arith.constant 0 : index
    %128 = vector.load %arg4[%c229, %c0_41] : memref<560x128xf32, #tpu.memory_space<vmem>>, vector<1x32xf32>
    %129 = vector.broadcast %128 : vector<1x32xf32> to vector<16x32xf32>
    %130 = arith.addf %127, %129 : vector<16x32xf32>
    %c456 = arith.constant 456 : index
    %c0_42 = arith.constant 0 : index
    %131 = vector.load %arg4[%c456, %c0_42] : memref<560x128xf32, #tpu.memory_space<vmem>>, vector<1x32xf32>
    %c457 = arith.constant 457 : index
    %c0_43 = arith.constant 0 : index
    %132 = vector.load %arg4[%c457, %c0_43] : memref<560x128xf32, #tpu.memory_space<vmem>>, vector<1x32xf32>
    %cst_44 = arith.constant dense<0.000000e+00> : vector<16xf32>
    %133 = vector.multi_reduction <add>, %130, %cst_44 [1] : vector<16x32xf32> to vector<16xf32>
    %134 = vector.shape_cast %133 : vector<16xf32> to vector<16x1xf32>
    %cst_45 = arith.constant 3.200000e+01 : f32
    %135 = vector.broadcast %cst_45 : f32 to vector<16x1xf32>
    %136 = arith.divf %134, %135 : vector<16x1xf32>
    %137 = vector.broadcast %136 : vector<16x1xf32> to vector<16x32xf32>
    %138 = arith.subf %130, %137 : vector<16x32xf32>
    %139 = arith.mulf %138, %138 : vector<16x32xf32>
    %cst_46 = arith.constant dense<0.000000e+00> : vector<16xf32>
    %140 = vector.multi_reduction <add>, %139, %cst_46 [1] : vector<16x32xf32> to vector<16xf32>
    %141 = vector.shape_cast %140 : vector<16xf32> to vector<16x1xf32>
    %cst_47 = arith.constant 3.200000e+01 : f32
    %142 = vector.broadcast %cst_47 : f32 to vector<16x1xf32>
    %143 = arith.divf %141, %142 : vector<16x1xf32>
    %144 = vector.broadcast %136 : vector<16x1xf32> to vector<16x32xf32>
    %145 = arith.subf %130, %144 : vector<16x32xf32>
    %cst_48 = arith.constant 9.99999974E-6 : f32
    %146 = vector.broadcast %cst_48 : f32 to vector<16x1xf32>
    %147 = arith.addf %143, %146 : vector<16x1xf32>
    %148 = math.rsqrt %147 : vector<16x1xf32>
    %149 = vector.broadcast %148 : vector<16x1xf32> to vector<16x32xf32>
    %150 = arith.mulf %145, %149 : vector<16x32xf32>
    %151 = vector.broadcast %131 : vector<1x32xf32> to vector<16x32xf32>
    %152 = arith.mulf %150, %151 : vector<16x32xf32>
    %153 = vector.broadcast %132 : vector<1x32xf32> to vector<16x32xf32>
    %154 = arith.addf %152, %153 : vector<16x32xf32>
    %c232 = arith.constant 232 : index
    %c0_49 = arith.constant 0 : index
    %155 = vector.load %arg4[%c232, %c0_49] : memref<560x128xf32, #tpu.memory_space<vmem>>, vector<32x96xf32>
    %cst_50 = arith.constant dense<0.000000e+00> : vector<16x96xf32>
    %156 = tpu.matmul %154, %155, %cst_50 {dimension_numbers = #tpu.dot_dimension_numbers<[1], [0], [0], [1], [0, 0, 1, 1], [], []>} : vector<16x32xf32>, vector<32x96xf32>, vector<16x96xf32> -> vector<16x96xf32>
    %157 = vector.extract_strided_slice %156 {offsets = [8, 0], sizes = [8, 32], strides = [1, 1]} : vector<16x96xf32> to vector<8x32xf32>
    %158 = vector.extract_strided_slice %156 {offsets = [0, 32], sizes = [8, 32], strides = [1, 1]} : vector<16x96xf32> to vector<8x32xf32>
    %159 = vector.extract_strided_slice %156 {offsets = [8, 32], sizes = [8, 32], strides = [1, 1]} : vector<16x96xf32> to vector<8x32xf32>
    %160 = vector.extract_strided_slice %156 {offsets = [0, 64], sizes = [8, 32], strides = [1, 1]} : vector<16x96xf32> to vector<8x32xf32>
    %161 = vector.extract_strided_slice %156 {offsets = [8, 64], sizes = [8, 32], strides = [1, 1]} : vector<16x96xf32> to vector<8x32xf32>
    %162 = arith.mulf %157, %158 : vector<8x32xf32>
    %cst_51 = arith.constant dense<0.000000e+00> : vector<8x4xf32>
    %163 = tpu.matmul %162, %3, %cst_51 {dimension_numbers = #tpu.dot_dimension_numbers<[1], [0], [0], [1], [0, 0, 1, 1], [], []>} : vector<8x32xf32>, vector<32x4xf32>, vector<8x4xf32> -> vector<8x4xf32>
    %cst_52 = arith.constant 0.353553385 : f32
    %164 = vector.broadcast %cst_52 : f32 to vector<8x4xf32>
    %165 = arith.mulf %163, %164 : vector<8x4xf32>
    %166 = arith.mulf %157, %159 : vector<8x32xf32>
    %cst_53 = arith.constant dense<0.000000e+00> : vector<8x4xf32>
    %167 = tpu.matmul %166, %3, %cst_53 {dimension_numbers = #tpu.dot_dimension_numbers<[1], [0], [0], [1], [0, 0, 1, 1], [], []>} : vector<8x32xf32>, vector<32x4xf32>, vector<8x4xf32> -> vector<8x4xf32>
    %cst_54 = arith.constant 0.353553385 : f32
    %168 = vector.broadcast %cst_54 : f32 to vector<8x4xf32>
    %169 = arith.mulf %167, %168 : vector<8x4xf32>
    %170 = arith.maximumf %165, %169 : vector<8x4xf32>
    %171 = arith.subf %165, %170 : vector<8x4xf32>
    %172 = math.exp %171 : vector<8x4xf32>
    %173 = arith.subf %169, %170 : vector<8x4xf32>
    %174 = math.exp %173 : vector<8x4xf32>
    %175 = arith.addf %172, %174 : vector<8x4xf32>
    %176 = tpu.reciprocal %175 {approx = true} : vector<8x4xf32> -> vector<8x4xf32>
    %177 = arith.mulf %172, %176 : vector<8x4xf32>
    %cst_55 = arith.constant dense<0.000000e+00> : vector<8x32xf32>
    %178 = tpu.matmul %177, %4, %cst_55 {dimension_numbers = #tpu.dot_dimension_numbers<[1], [0], [0], [1], [0, 0, 1, 1], [], []>} : vector<8x4xf32>, vector<4x32xf32>, vector<8x32xf32> -> vector<8x32xf32>
    %179 = arith.mulf %174, %176 : vector<8x4xf32>
    %cst_56 = arith.constant dense<0.000000e+00> : vector<8x32xf32>
    %180 = tpu.matmul %179, %4, %cst_56 {dimension_numbers = #tpu.dot_dimension_numbers<[1], [0], [0], [1], [0, 0, 1, 1], [], []>} : vector<8x4xf32>, vector<4x32xf32>, vector<8x32xf32> -> vector<8x32xf32>
    %181 = arith.mulf %178, %160 : vector<8x32xf32>
    %182 = arith.mulf %180, %161 : vector<8x32xf32>
    %183 = arith.addf %181, %182 : vector<8x32xf32>
    %184 = tpu.concatenate %160, %183 in 0 : vector<8x32xf32>, vector<8x32xf32> -> vector<16x32xf32>
    %c264 = arith.constant 264 : index
    %c0_57 = arith.constant 0 : index
    %185 = vector.load %arg4[%c264, %c0_57] : memref<560x128xf32, #tpu.memory_space<vmem>>, vector<32x32xf32>
    %cst_58 = arith.constant dense<0.000000e+00> : vector<16x32xf32>
    %186 = tpu.matmul %184, %185, %cst_58 {dimension_numbers = #tpu.dot_dimension_numbers<[1], [0], [0], [1], [0, 0, 1, 1], [], []>} : vector<16x32xf32>, vector<32x32xf32>, vector<16x32xf32> -> vector<16x32xf32>
    %187 = arith.addf %130, %186 : vector<16x32xf32>
    %c458 = arith.constant 458 : index
    %c0_59 = arith.constant 0 : index
    %188 = vector.load %arg4[%c458, %c0_59] : memref<560x128xf32, #tpu.memory_space<vmem>>, vector<1x32xf32>
    %c459 = arith.constant 459 : index
    %c0_60 = arith.constant 0 : index
    %189 = vector.load %arg4[%c459, %c0_60] : memref<560x128xf32, #tpu.memory_space<vmem>>, vector<1x32xf32>
    %cst_61 = arith.constant dense<0.000000e+00> : vector<16xf32>
    %190 = vector.multi_reduction <add>, %187, %cst_61 [1] : vector<16x32xf32> to vector<16xf32>
    %191 = vector.shape_cast %190 : vector<16xf32> to vector<16x1xf32>
    %cst_62 = arith.constant 3.200000e+01 : f32
    %192 = vector.broadcast %cst_62 : f32 to vector<16x1xf32>
    %193 = arith.divf %191, %192 : vector<16x1xf32>
    %194 = vector.broadcast %193 : vector<16x1xf32> to vector<16x32xf32>
    %195 = arith.subf %187, %194 : vector<16x32xf32>
    %196 = arith.mulf %195, %195 : vector<16x32xf32>
    %cst_63 = arith.constant dense<0.000000e+00> : vector<16xf32>
    %197 = vector.multi_reduction <add>, %196, %cst_63 [1] : vector<16x32xf32> to vector<16xf32>
    %198 = vector.shape_cast %197 : vector<16xf32> to vector<16x1xf32>
    %cst_64 = arith.constant 3.200000e+01 : f32
    %199 = vector.broadcast %cst_64 : f32 to vector<16x1xf32>
    %200 = arith.divf %198, %199 : vector<16x1xf32>
    %201 = vector.broadcast %193 : vector<16x1xf32> to vector<16x32xf32>
    %202 = arith.subf %187, %201 : vector<16x32xf32>
    %cst_65 = arith.constant 9.99999974E-6 : f32
    %203 = vector.broadcast %cst_65 : f32 to vector<16x1xf32>
    %204 = arith.addf %200, %203 : vector<16x1xf32>
    %205 = math.rsqrt %204 : vector<16x1xf32>
    %206 = vector.broadcast %205 : vector<16x1xf32> to vector<16x32xf32>
    %207 = arith.mulf %202, %206 : vector<16x32xf32>
    %208 = vector.broadcast %188 : vector<1x32xf32> to vector<16x32xf32>
    %209 = arith.mulf %207, %208 : vector<16x32xf32>
    %210 = vector.broadcast %189 : vector<1x32xf32> to vector<16x32xf32>
    %211 = arith.addf %209, %210 : vector<16x32xf32>
    %c296 = arith.constant 296 : index
    %c0_66 = arith.constant 0 : index
    %212 = vector.load %arg4[%c296, %c0_66] : memref<560x128xf32, #tpu.memory_space<vmem>>, vector<32x128xf32>
    %cst_67 = arith.constant dense<0.000000e+00> : vector<16x128xf32>
    %213 = tpu.matmul %211, %212, %cst_67 {dimension_numbers = #tpu.dot_dimension_numbers<[1], [0], [0], [1], [0, 0, 1, 1], [], []>} : vector<16x32xf32>, vector<32x128xf32>, vector<16x128xf32> -> vector<16x128xf32>
    %c460 = arith.constant 460 : index
    %c0_68 = arith.constant 0 : index
    %214 = vector.load %arg4[%c460, %c0_68] : memref<560x128xf32, #tpu.memory_space<vmem>>, vector<1x128xf32>
    %215 = vector.broadcast %214 : vector<1x128xf32> to vector<16x128xf32>
    %216 = arith.addf %213, %215 : vector<16x128xf32>
    %217 = arith.mulf %216, %216 : vector<16x128xf32>
    %218 = arith.mulf %216, %217 : vector<16x128xf32>
    %cst_69 = arith.constant 4.471500e-02 : f32
    %219 = vector.broadcast %cst_69 : f32 to vector<16x128xf32>
    %220 = arith.mulf %219, %218 : vector<16x128xf32>
    %221 = arith.addf %216, %220 : vector<16x128xf32>
    %cst_70 = arith.constant 0.797884583 : f32
    %222 = vector.broadcast %cst_70 : f32 to vector<16x128xf32>
    %223 = arith.mulf %222, %221 : vector<16x128xf32>
    %224 = math.tanh %223 : vector<16x128xf32>
    %cst_71 = arith.constant 1.000000e+00 : f32
    %225 = vector.broadcast %cst_71 : f32 to vector<16x128xf32>
    %226 = arith.addf %225, %224 : vector<16x128xf32>
    %cst_72 = arith.constant 5.000000e-01 : f32
    %227 = vector.broadcast %cst_72 : f32 to vector<16x128xf32>
    %228 = arith.mulf %227, %226 : vector<16x128xf32>
    %229 = arith.mulf %216, %228 : vector<16x128xf32>
    %c328 = arith.constant 328 : index
    %c0_73 = arith.constant 0 : index
    %230 = vector.load %arg4[%c328, %c0_73] : memref<560x128xf32, #tpu.memory_space<vmem>>, vector<128x32xf32>
    %cst_74 = arith.constant dense<0.000000e+00> : vector<16x32xf32>
    %231 = tpu.matmul %229, %230, %cst_74 {dimension_numbers = #tpu.dot_dimension_numbers<[1], [0], [0], [1], [0, 0, 1, 1], [], []>} : vector<16x128xf32>, vector<128x32xf32>, vector<16x32xf32> -> vector<16x32xf32>
    %232 = arith.addf %187, %231 : vector<16x32xf32>
    %c461 = arith.constant 461 : index
    %c0_75 = arith.constant 0 : index
    %233 = vector.load %arg4[%c461, %c0_75] : memref<560x128xf32, #tpu.memory_space<vmem>>, vector<1x32xf32>
    %234 = vector.broadcast %233 : vector<1x32xf32> to vector<16x32xf32>
    %235 = arith.addf %232, %234 : vector<16x32xf32>
    %c536 = arith.constant 536 : index
    %c0_76 = arith.constant 0 : index
    %236 = vector.load %arg4[%c536, %c0_76] : memref<560x128xf32, #tpu.memory_space<vmem>>, vector<1x32xf32>
    %c537 = arith.constant 537 : index
    %c0_77 = arith.constant 0 : index
    %237 = vector.load %arg4[%c537, %c0_77] : memref<560x128xf32, #tpu.memory_space<vmem>>, vector<1x32xf32>
    %cst_78 = arith.constant dense<0.000000e+00> : vector<16xf32>
    %238 = vector.multi_reduction <add>, %235, %cst_78 [1] : vector<16x32xf32> to vector<16xf32>
    %239 = vector.shape_cast %238 : vector<16xf32> to vector<16x1xf32>
    %cst_79 = arith.constant 3.200000e+01 : f32
    %240 = vector.broadcast %cst_79 : f32 to vector<16x1xf32>
    %241 = arith.divf %239, %240 : vector<16x1xf32>
    %242 = vector.broadcast %241 : vector<16x1xf32> to vector<16x32xf32>
    %243 = arith.subf %235, %242 : vector<16x32xf32>
    %244 = arith.mulf %243, %243 : vector<16x32xf32>
    %cst_80 = arith.constant dense<0.000000e+00> : vector<16xf32>
    %245 = vector.multi_reduction <add>, %244, %cst_80 [1] : vector<16x32xf32> to vector<16xf32>
    %246 = vector.shape_cast %245 : vector<16xf32> to vector<16x1xf32>
    %cst_81 = arith.constant 3.200000e+01 : f32
    %247 = vector.broadcast %cst_81 : f32 to vector<16x1xf32>
    %248 = arith.divf %246, %247 : vector<16x1xf32>
    %249 = vector.broadcast %241 : vector<16x1xf32> to vector<16x32xf32>
    %250 = arith.subf %235, %249 : vector<16x32xf32>
    %cst_82 = arith.constant 9.99999974E-6 : f32
    %251 = vector.broadcast %cst_82 : f32 to vector<16x1xf32>
    %252 = arith.addf %248, %251 : vector<16x1xf32>
    %253 = math.rsqrt %252 : vector<16x1xf32>
    %254 = vector.broadcast %253 : vector<16x1xf32> to vector<16x32xf32>
    %255 = arith.mulf %250, %254 : vector<16x32xf32>
    %256 = vector.broadcast %236 : vector<1x32xf32> to vector<16x32xf32>
    %257 = arith.mulf %255, %256 : vector<16x32xf32>
    %258 = vector.broadcast %237 : vector<1x32xf32> to vector<16x32xf32>
    %259 = arith.addf %257, %258 : vector<16x32xf32>
    %260 = vector.extract_strided_slice %259 {offsets = [8, 0], sizes = [8, 32], strides = [1, 1]} : vector<16x32xf32> to vector<8x32xf32>
    %261 = vector.broadcast %7 : vector<1x32xf32> to vector<8x32xf32>
    %262 = arith.addf %260, %261 : vector<8x32xf32>
    %263 = vector.broadcast %8 : vector<1x32xf32> to vector<8x32xf32>
    %264 = arith.addf %19, %263 : vector<8x32xf32>
    %265 = tpu.concatenate %262, %264 in 0 : vector<8x32xf32>, vector<8x32xf32> -> vector<16x32xf32>
    %c224_83 = arith.constant 224 : index
    %c0_84 = arith.constant 0 : index
    %266 = vector.load %arg4[%c224_83, %c0_84] : memref<560x128xf32, #tpu.memory_space<vmem>>, vector<1x32xf32>
    %c225_85 = arith.constant 225 : index
    %c0_86 = arith.constant 0 : index
    %267 = vector.load %arg4[%c225_85, %c0_86] : memref<560x128xf32, #tpu.memory_space<vmem>>, vector<1x32xf32>
    %cst_87 = arith.constant dense<0.000000e+00> : vector<16xf32>
    %268 = vector.multi_reduction <add>, %265, %cst_87 [1] : vector<16x32xf32> to vector<16xf32>
    %269 = vector.shape_cast %268 : vector<16xf32> to vector<16x1xf32>
    %cst_88 = arith.constant 3.200000e+01 : f32
    %270 = vector.broadcast %cst_88 : f32 to vector<16x1xf32>
    %271 = arith.divf %269, %270 : vector<16x1xf32>
    %272 = vector.broadcast %271 : vector<16x1xf32> to vector<16x32xf32>
    %273 = arith.subf %265, %272 : vector<16x32xf32>
    %274 = arith.mulf %273, %273 : vector<16x32xf32>
    %cst_89 = arith.constant dense<0.000000e+00> : vector<16xf32>
    %275 = vector.multi_reduction <add>, %274, %cst_89 [1] : vector<16x32xf32> to vector<16xf32>
    %276 = vector.shape_cast %275 : vector<16xf32> to vector<16x1xf32>
    %cst_90 = arith.constant 3.200000e+01 : f32
    %277 = vector.broadcast %cst_90 : f32 to vector<16x1xf32>
    %278 = arith.divf %276, %277 : vector<16x1xf32>
    %279 = vector.broadcast %271 : vector<16x1xf32> to vector<16x32xf32>
    %280 = arith.subf %265, %279 : vector<16x32xf32>
    %cst_91 = arith.constant 9.99999974E-6 : f32
    %281 = vector.broadcast %cst_91 : f32 to vector<16x1xf32>
    %282 = arith.addf %278, %281 : vector<16x1xf32>
    %283 = math.rsqrt %282 : vector<16x1xf32>
    %284 = vector.broadcast %283 : vector<16x1xf32> to vector<16x32xf32>
    %285 = arith.mulf %280, %284 : vector<16x32xf32>
    %286 = vector.broadcast %266 : vector<1x32xf32> to vector<16x32xf32>
    %287 = arith.mulf %285, %286 : vector<16x32xf32>
    %288 = vector.broadcast %267 : vector<1x32xf32> to vector<16x32xf32>
    %289 = arith.addf %287, %288 : vector<16x32xf32>
    %c0_92 = arith.constant 0 : index
    %c0_93 = arith.constant 0 : index
    %290 = vector.load %arg4[%c0_92, %c0_93] : memref<560x128xf32, #tpu.memory_space<vmem>>, vector<32x96xf32>
    %cst_94 = arith.constant dense<0.000000e+00> : vector<16x96xf32>
    %291 = tpu.matmul %289, %290, %cst_94 {dimension_numbers = #tpu.dot_dimension_numbers<[1], [0], [0], [1], [0, 0, 1, 1], [], []>} : vector<16x32xf32>, vector<32x96xf32>, vector<16x96xf32> -> vector<16x96xf32>
    %292 = vector.extract_strided_slice %291 {offsets = [8, 0], sizes = [8, 32], strides = [1, 1]} : vector<16x96xf32> to vector<8x32xf32>
    %293 = vector.extract_strided_slice %291 {offsets = [0, 32], sizes = [8, 32], strides = [1, 1]} : vector<16x96xf32> to vector<8x32xf32>
    %294 = vector.extract_strided_slice %291 {offsets = [8, 32], sizes = [8, 32], strides = [1, 1]} : vector<16x96xf32> to vector<8x32xf32>
    %295 = vector.extract_strided_slice %291 {offsets = [0, 64], sizes = [8, 32], strides = [1, 1]} : vector<16x96xf32> to vector<8x32xf32>
    %296 = vector.extract_strided_slice %291 {offsets = [8, 64], sizes = [8, 32], strides = [1, 1]} : vector<16x96xf32> to vector<8x32xf32>
    %297 = arith.mulf %292, %293 : vector<8x32xf32>
    %cst_95 = arith.constant dense<0.000000e+00> : vector<8x4xf32>
    %298 = tpu.matmul %297, %3, %cst_95 {dimension_numbers = #tpu.dot_dimension_numbers<[1], [0], [0], [1], [0, 0, 1, 1], [], []>} : vector<8x32xf32>, vector<32x4xf32>, vector<8x4xf32> -> vector<8x4xf32>
    %cst_96 = arith.constant 0.353553385 : f32
    %299 = vector.broadcast %cst_96 : f32 to vector<8x4xf32>
    %300 = arith.mulf %298, %299 : vector<8x4xf32>
    %301 = arith.mulf %292, %294 : vector<8x32xf32>
    %cst_97 = arith.constant dense<0.000000e+00> : vector<8x4xf32>
    %302 = tpu.matmul %301, %3, %cst_97 {dimension_numbers = #tpu.dot_dimension_numbers<[1], [0], [0], [1], [0, 0, 1, 1], [], []>} : vector<8x32xf32>, vector<32x4xf32>, vector<8x4xf32> -> vector<8x4xf32>
    %cst_98 = arith.constant 0.353553385 : f32
    %303 = vector.broadcast %cst_98 : f32 to vector<8x4xf32>
    %304 = arith.mulf %302, %303 : vector<8x4xf32>
    %305 = arith.maximumf %300, %304 : vector<8x4xf32>
    %306 = arith.subf %300, %305 : vector<8x4xf32>
    %307 = math.exp %306 : vector<8x4xf32>
    %308 = arith.subf %304, %305 : vector<8x4xf32>
    %309 = math.exp %308 : vector<8x4xf32>
    %310 = arith.addf %307, %309 : vector<8x4xf32>
    %311 = tpu.reciprocal %310 {approx = true} : vector<8x4xf32> -> vector<8x4xf32>
    %312 = arith.mulf %307, %311 : vector<8x4xf32>
    %cst_99 = arith.constant dense<0.000000e+00> : vector<8x32xf32>
    %313 = tpu.matmul %312, %4, %cst_99 {dimension_numbers = #tpu.dot_dimension_numbers<[1], [0], [0], [1], [0, 0, 1, 1], [], []>} : vector<8x4xf32>, vector<4x32xf32>, vector<8x32xf32> -> vector<8x32xf32>
    %314 = arith.mulf %309, %311 : vector<8x4xf32>
    %cst_100 = arith.constant dense<0.000000e+00> : vector<8x32xf32>
    %315 = tpu.matmul %314, %4, %cst_100 {dimension_numbers = #tpu.dot_dimension_numbers<[1], [0], [0], [1], [0, 0, 1, 1], [], []>} : vector<8x4xf32>, vector<4x32xf32>, vector<8x32xf32> -> vector<8x32xf32>
    %316 = arith.mulf %313, %295 : vector<8x32xf32>
    %317 = arith.mulf %315, %296 : vector<8x32xf32>
    %318 = arith.addf %316, %317 : vector<8x32xf32>
    %319 = tpu.concatenate %295, %318 in 0 : vector<8x32xf32>, vector<8x32xf32> -> vector<16x32xf32>
    %c32_101 = arith.constant 32 : index
    %c0_102 = arith.constant 0 : index
    %320 = vector.load %arg4[%c32_101, %c0_102] : memref<560x128xf32, #tpu.memory_space<vmem>>, vector<32x32xf32>
    %cst_103 = arith.constant dense<0.000000e+00> : vector<16x32xf32>
    %321 = tpu.matmul %319, %320, %cst_103 {dimension_numbers = #tpu.dot_dimension_numbers<[1], [0], [0], [1], [0, 0, 1, 1], [], []>} : vector<16x32xf32>, vector<32x32xf32>, vector<16x32xf32> -> vector<16x32xf32>
    %322 = arith.addf %265, %321 : vector<16x32xf32>
    %c226_104 = arith.constant 226 : index
    %c0_105 = arith.constant 0 : index
    %323 = vector.load %arg4[%c226_104, %c0_105] : memref<560x128xf32, #tpu.memory_space<vmem>>, vector<1x32xf32>
    %c227_106 = arith.constant 227 : index
    %c0_107 = arith.constant 0 : index
    %324 = vector.load %arg4[%c227_106, %c0_107] : memref<560x128xf32, #tpu.memory_space<vmem>>, vector<1x32xf32>
    %cst_108 = arith.constant dense<0.000000e+00> : vector<16xf32>
    %325 = vector.multi_reduction <add>, %322, %cst_108 [1] : vector<16x32xf32> to vector<16xf32>
    %326 = vector.shape_cast %325 : vector<16xf32> to vector<16x1xf32>
    %cst_109 = arith.constant 3.200000e+01 : f32
    %327 = vector.broadcast %cst_109 : f32 to vector<16x1xf32>
    %328 = arith.divf %326, %327 : vector<16x1xf32>
    %329 = vector.broadcast %328 : vector<16x1xf32> to vector<16x32xf32>
    %330 = arith.subf %322, %329 : vector<16x32xf32>
    %331 = arith.mulf %330, %330 : vector<16x32xf32>
    %cst_110 = arith.constant dense<0.000000e+00> : vector<16xf32>
    %332 = vector.multi_reduction <add>, %331, %cst_110 [1] : vector<16x32xf32> to vector<16xf32>
    %333 = vector.shape_cast %332 : vector<16xf32> to vector<16x1xf32>
    %cst_111 = arith.constant 3.200000e+01 : f32
    %334 = vector.broadcast %cst_111 : f32 to vector<16x1xf32>
    %335 = arith.divf %333, %334 : vector<16x1xf32>
    %336 = vector.broadcast %328 : vector<16x1xf32> to vector<16x32xf32>
    %337 = arith.subf %322, %336 : vector<16x32xf32>
    %cst_112 = arith.constant 9.99999974E-6 : f32
    %338 = vector.broadcast %cst_112 : f32 to vector<16x1xf32>
    %339 = arith.addf %335, %338 : vector<16x1xf32>
    %340 = math.rsqrt %339 : vector<16x1xf32>
    %341 = vector.broadcast %340 : vector<16x1xf32> to vector<16x32xf32>
    %342 = arith.mulf %337, %341 : vector<16x32xf32>
    %343 = vector.broadcast %323 : vector<1x32xf32> to vector<16x32xf32>
    %344 = arith.mulf %342, %343 : vector<16x32xf32>
    %345 = vector.broadcast %324 : vector<1x32xf32> to vector<16x32xf32>
    %346 = arith.addf %344, %345 : vector<16x32xf32>
    %c64_113 = arith.constant 64 : index
    %c0_114 = arith.constant 0 : index
    %347 = vector.load %arg4[%c64_113, %c0_114] : memref<560x128xf32, #tpu.memory_space<vmem>>, vector<32x128xf32>
    %cst_115 = arith.constant dense<0.000000e+00> : vector<16x128xf32>
    %348 = tpu.matmul %346, %347, %cst_115 {dimension_numbers = #tpu.dot_dimension_numbers<[1], [0], [0], [1], [0, 0, 1, 1], [], []>} : vector<16x32xf32>, vector<32x128xf32>, vector<16x128xf32> -> vector<16x128xf32>
    %c228_116 = arith.constant 228 : index
    %c0_117 = arith.constant 0 : index
    %349 = vector.load %arg4[%c228_116, %c0_117] : memref<560x128xf32, #tpu.memory_space<vmem>>, vector<1x128xf32>
    %350 = vector.broadcast %349 : vector<1x128xf32> to vector<16x128xf32>
    %351 = arith.addf %348, %350 : vector<16x128xf32>
    %352 = arith.mulf %351, %351 : vector<16x128xf32>
    %353 = arith.mulf %351, %352 : vector<16x128xf32>
    %cst_118 = arith.constant 4.471500e-02 : f32
    %354 = vector.broadcast %cst_118 : f32 to vector<16x128xf32>
    %355 = arith.mulf %354, %353 : vector<16x128xf32>
    %356 = arith.addf %351, %355 : vector<16x128xf32>
    %cst_119 = arith.constant 0.797884583 : f32
    %357 = vector.broadcast %cst_119 : f32 to vector<16x128xf32>
    %358 = arith.mulf %357, %356 : vector<16x128xf32>
    %359 = math.tanh %358 : vector<16x128xf32>
    %cst_120 = arith.constant 1.000000e+00 : f32
    %360 = vector.broadcast %cst_120 : f32 to vector<16x128xf32>
    %361 = arith.addf %360, %359 : vector<16x128xf32>
    %cst_121 = arith.constant 5.000000e-01 : f32
    %362 = vector.broadcast %cst_121 : f32 to vector<16x128xf32>
    %363 = arith.mulf %362, %361 : vector<16x128xf32>
    %364 = arith.mulf %351, %363 : vector<16x128xf32>
    %c96_122 = arith.constant 96 : index
    %c0_123 = arith.constant 0 : index
    %365 = vector.load %arg4[%c96_122, %c0_123] : memref<560x128xf32, #tpu.memory_space<vmem>>, vector<128x32xf32>
    %cst_124 = arith.constant dense<0.000000e+00> : vector<16x32xf32>
    %366 = tpu.matmul %364, %365, %cst_124 {dimension_numbers = #tpu.dot_dimension_numbers<[1], [0], [0], [1], [0, 0, 1, 1], [], []>} : vector<16x128xf32>, vector<128x32xf32>, vector<16x32xf32> -> vector<16x32xf32>
    %367 = arith.addf %322, %366 : vector<16x32xf32>
    %c229_125 = arith.constant 229 : index
    %c0_126 = arith.constant 0 : index
    %368 = vector.load %arg4[%c229_125, %c0_126] : memref<560x128xf32, #tpu.memory_space<vmem>>, vector<1x32xf32>
    %369 = vector.broadcast %368 : vector<1x32xf32> to vector<16x32xf32>
    %370 = arith.addf %367, %369 : vector<16x32xf32>
    %c456_127 = arith.constant 456 : index
    %c0_128 = arith.constant 0 : index
    %371 = vector.load %arg4[%c456_127, %c0_128] : memref<560x128xf32, #tpu.memory_space<vmem>>, vector<1x32xf32>
    %c457_129 = arith.constant 457 : index
    %c0_130 = arith.constant 0 : index
    %372 = vector.load %arg4[%c457_129, %c0_130] : memref<560x128xf32, #tpu.memory_space<vmem>>, vector<1x32xf32>
    %cst_131 = arith.constant dense<0.000000e+00> : vector<16xf32>
    %373 = vector.multi_reduction <add>, %370, %cst_131 [1] : vector<16x32xf32> to vector<16xf32>
    %374 = vector.shape_cast %373 : vector<16xf32> to vector<16x1xf32>
    %cst_132 = arith.constant 3.200000e+01 : f32
    %375 = vector.broadcast %cst_132 : f32 to vector<16x1xf32>
    %376 = arith.divf %374, %375 : vector<16x1xf32>
    %377 = vector.broadcast %376 : vector<16x1xf32> to vector<16x32xf32>
    %378 = arith.subf %370, %377 : vector<16x32xf32>
    %379 = arith.mulf %378, %378 : vector<16x32xf32>
    %cst_133 = arith.constant dense<0.000000e+00> : vector<16xf32>
    %380 = vector.multi_reduction <add>, %379, %cst_133 [1] : vector<16x32xf32> to vector<16xf32>
    %381 = vector.shape_cast %380 : vector<16xf32> to vector<16x1xf32>
    %cst_134 = arith.constant 3.200000e+01 : f32
    %382 = vector.broadcast %cst_134 : f32 to vector<16x1xf32>
    %383 = arith.divf %381, %382 : vector<16x1xf32>
    %384 = vector.broadcast %376 : vector<16x1xf32> to vector<16x32xf32>
    %385 = arith.subf %370, %384 : vector<16x32xf32>
    %cst_135 = arith.constant 9.99999974E-6 : f32
    %386 = vector.broadcast %cst_135 : f32 to vector<16x1xf32>
    %387 = arith.addf %383, %386 : vector<16x1xf32>
    %388 = math.rsqrt %387 : vector<16x1xf32>
    %389 = vector.broadcast %388 : vector<16x1xf32> to vector<16x32xf32>
    %390 = arith.mulf %385, %389 : vector<16x32xf32>
    %391 = vector.broadcast %371 : vector<1x32xf32> to vector<16x32xf32>
    %392 = arith.mulf %390, %391 : vector<16x32xf32>
    %393 = vector.broadcast %372 : vector<1x32xf32> to vector<16x32xf32>
    %394 = arith.addf %392, %393 : vector<16x32xf32>
    %c232_136 = arith.constant 232 : index
    %c0_137 = arith.constant 0 : index
    %395 = vector.load %arg4[%c232_136, %c0_137] : memref<560x128xf32, #tpu.memory_space<vmem>>, vector<32x96xf32>
    %cst_138 = arith.constant dense<0.000000e+00> : vector<16x96xf32>
    %396 = tpu.matmul %394, %395, %cst_138 {dimension_numbers = #tpu.dot_dimension_numbers<[1], [0], [0], [1], [0, 0, 1, 1], [], []>} : vector<16x32xf32>, vector<32x96xf32>, vector<16x96xf32> -> vector<16x96xf32>
    %397 = vector.extract_strided_slice %396 {offsets = [8, 0], sizes = [8, 32], strides = [1, 1]} : vector<16x96xf32> to vector<8x32xf32>
    %398 = vector.extract_strided_slice %396 {offsets = [0, 32], sizes = [8, 32], strides = [1, 1]} : vector<16x96xf32> to vector<8x32xf32>
    %399 = vector.extract_strided_slice %396 {offsets = [8, 32], sizes = [8, 32], strides = [1, 1]} : vector<16x96xf32> to vector<8x32xf32>
    %400 = vector.extract_strided_slice %396 {offsets = [0, 64], sizes = [8, 32], strides = [1, 1]} : vector<16x96xf32> to vector<8x32xf32>
    %401 = vector.extract_strided_slice %396 {offsets = [8, 64], sizes = [8, 32], strides = [1, 1]} : vector<16x96xf32> to vector<8x32xf32>
    %402 = arith.mulf %397, %398 : vector<8x32xf32>
    %cst_139 = arith.constant dense<0.000000e+00> : vector<8x4xf32>
    %403 = tpu.matmul %402, %3, %cst_139 {dimension_numbers = #tpu.dot_dimension_numbers<[1], [0], [0], [1], [0, 0, 1, 1], [], []>} : vector<8x32xf32>, vector<32x4xf32>, vector<8x4xf32> -> vector<8x4xf32>
    %cst_140 = arith.constant 0.353553385 : f32
    %404 = vector.broadcast %cst_140 : f32 to vector<8x4xf32>
    %405 = arith.mulf %403, %404 : vector<8x4xf32>
    %406 = arith.mulf %397, %399 : vector<8x32xf32>
    %cst_141 = arith.constant dense<0.000000e+00> : vector<8x4xf32>
    %407 = tpu.matmul %406, %3, %cst_141 {dimension_numbers = #tpu.dot_dimension_numbers<[1], [0], [0], [1], [0, 0, 1, 1], [], []>} : vector<8x32xf32>, vector<32x4xf32>, vector<8x4xf32> -> vector<8x4xf32>
    %cst_142 = arith.constant 0.353553385 : f32
    %408 = vector.broadcast %cst_142 : f32 to vector<8x4xf32>
    %409 = arith.mulf %407, %408 : vector<8x4xf32>
    %410 = arith.maximumf %405, %409 : vector<8x4xf32>
    %411 = arith.subf %405, %410 : vector<8x4xf32>
    %412 = math.exp %411 : vector<8x4xf32>
    %413 = arith.subf %409, %410 : vector<8x4xf32>
    %414 = math.exp %413 : vector<8x4xf32>
    %415 = arith.addf %412, %414 : vector<8x4xf32>
    %416 = tpu.reciprocal %415 {approx = true} : vector<8x4xf32> -> vector<8x4xf32>
    %417 = arith.mulf %412, %416 : vector<8x4xf32>
    %cst_143 = arith.constant dense<0.000000e+00> : vector<8x32xf32>
    %418 = tpu.matmul %417, %4, %cst_143 {dimension_numbers = #tpu.dot_dimension_numbers<[1], [0], [0], [1], [0, 0, 1, 1], [], []>} : vector<8x4xf32>, vector<4x32xf32>, vector<8x32xf32> -> vector<8x32xf32>
    %419 = arith.mulf %414, %416 : vector<8x4xf32>
    %cst_144 = arith.constant dense<0.000000e+00> : vector<8x32xf32>
    %420 = tpu.matmul %419, %4, %cst_144 {dimension_numbers = #tpu.dot_dimension_numbers<[1], [0], [0], [1], [0, 0, 1, 1], [], []>} : vector<8x4xf32>, vector<4x32xf32>, vector<8x32xf32> -> vector<8x32xf32>
    %421 = arith.mulf %418, %400 : vector<8x32xf32>
    %422 = arith.mulf %420, %401 : vector<8x32xf32>
    %423 = arith.addf %421, %422 : vector<8x32xf32>
    %424 = tpu.concatenate %400, %423 in 0 : vector<8x32xf32>, vector<8x32xf32> -> vector<16x32xf32>
    %c264_145 = arith.constant 264 : index
    %c0_146 = arith.constant 0 : index
    %425 = vector.load %arg4[%c264_145, %c0_146] : memref<560x128xf32, #tpu.memory_space<vmem>>, vector<32x32xf32>
    %cst_147 = arith.constant dense<0.000000e+00> : vector<16x32xf32>
    %426 = tpu.matmul %424, %425, %cst_147 {dimension_numbers = #tpu.dot_dimension_numbers<[1], [0], [0], [1], [0, 0, 1, 1], [], []>} : vector<16x32xf32>, vector<32x32xf32>, vector<16x32xf32> -> vector<16x32xf32>
    %427 = arith.addf %370, %426 : vector<16x32xf32>
    %c458_148 = arith.constant 458 : index
    %c0_149 = arith.constant 0 : index
    %428 = vector.load %arg4[%c458_148, %c0_149] : memref<560x128xf32, #tpu.memory_space<vmem>>, vector<1x32xf32>
    %c459_150 = arith.constant 459 : index
    %c0_151 = arith.constant 0 : index
    %429 = vector.load %arg4[%c459_150, %c0_151] : memref<560x128xf32, #tpu.memory_space<vmem>>, vector<1x32xf32>
    %cst_152 = arith.constant dense<0.000000e+00> : vector<16xf32>
    %430 = vector.multi_reduction <add>, %427, %cst_152 [1] : vector<16x32xf32> to vector<16xf32>
    %431 = vector.shape_cast %430 : vector<16xf32> to vector<16x1xf32>
    %cst_153 = arith.constant 3.200000e+01 : f32
    %432 = vector.broadcast %cst_153 : f32 to vector<16x1xf32>
    %433 = arith.divf %431, %432 : vector<16x1xf32>
    %434 = vector.broadcast %433 : vector<16x1xf32> to vector<16x32xf32>
    %435 = arith.subf %427, %434 : vector<16x32xf32>
    %436 = arith.mulf %435, %435 : vector<16x32xf32>
    %cst_154 = arith.constant dense<0.000000e+00> : vector<16xf32>
    %437 = vector.multi_reduction <add>, %436, %cst_154 [1] : vector<16x32xf32> to vector<16xf32>
    %438 = vector.shape_cast %437 : vector<16xf32> to vector<16x1xf32>
    %cst_155 = arith.constant 3.200000e+01 : f32
    %439 = vector.broadcast %cst_155 : f32 to vector<16x1xf32>
    %440 = arith.divf %438, %439 : vector<16x1xf32>
    %441 = vector.broadcast %433 : vector<16x1xf32> to vector<16x32xf32>
    %442 = arith.subf %427, %441 : vector<16x32xf32>
    %cst_156 = arith.constant 9.99999974E-6 : f32
    %443 = vector.broadcast %cst_156 : f32 to vector<16x1xf32>
    %444 = arith.addf %440, %443 : vector<16x1xf32>
    %445 = math.rsqrt %444 : vector<16x1xf32>
    %446 = vector.broadcast %445 : vector<16x1xf32> to vector<16x32xf32>
    %447 = arith.mulf %442, %446 : vector<16x32xf32>
    %448 = vector.broadcast %428 : vector<1x32xf32> to vector<16x32xf32>
    %449 = arith.mulf %447, %448 : vector<16x32xf32>
    %450 = vector.broadcast %429 : vector<1x32xf32> to vector<16x32xf32>
    %451 = arith.addf %449, %450 : vector<16x32xf32>
    %c296_157 = arith.constant 296 : index
    %c0_158 = arith.constant 0 : index
    %452 = vector.load %arg4[%c296_157, %c0_158] : memref<560x128xf32, #tpu.memory_space<vmem>>, vector<32x128xf32>
    %cst_159 = arith.constant dense<0.000000e+00> : vector<16x128xf32>
    %453 = tpu.matmul %451, %452, %cst_159 {dimension_numbers = #tpu.dot_dimension_numbers<[1], [0], [0], [1], [0, 0, 1, 1], [], []>} : vector<16x32xf32>, vector<32x128xf32>, vector<16x128xf32> -> vector<16x128xf32>
    %c460_160 = arith.constant 460 : index
    %c0_161 = arith.constant 0 : index
    %454 = vector.load %arg4[%c460_160, %c0_161] : memref<560x128xf32, #tpu.memory_space<vmem>>, vector<1x128xf32>
    %455 = vector.broadcast %454 : vector<1x128xf32> to vector<16x128xf32>
    %456 = arith.addf %453, %455 : vector<16x128xf32>
    %457 = arith.mulf %456, %456 : vector<16x128xf32>
    %458 = arith.mulf %456, %457 : vector<16x128xf32>
    %cst_162 = arith.constant 4.471500e-02 : f32
    %459 = vector.broadcast %cst_162 : f32 to vector<16x128xf32>
    %460 = arith.mulf %459, %458 : vector<16x128xf32>
    %461 = arith.addf %456, %460 : vector<16x128xf32>
    %cst_163 = arith.constant 0.797884583 : f32
    %462 = vector.broadcast %cst_163 : f32 to vector<16x128xf32>
    %463 = arith.mulf %462, %461 : vector<16x128xf32>
    %464 = math.tanh %463 : vector<16x128xf32>
    %cst_164 = arith.constant 1.000000e+00 : f32
    %465 = vector.broadcast %cst_164 : f32 to vector<16x128xf32>
    %466 = arith.addf %465, %464 : vector<16x128xf32>
    %cst_165 = arith.constant 5.000000e-01 : f32
    %467 = vector.broadcast %cst_165 : f32 to vector<16x128xf32>
    %468 = arith.mulf %467, %466 : vector<16x128xf32>
    %469 = arith.mulf %456, %468 : vector<16x128xf32>
    %c328_166 = arith.constant 328 : index
    %c0_167 = arith.constant 0 : index
    %470 = vector.load %arg4[%c328_166, %c0_167] : memref<560x128xf32, #tpu.memory_space<vmem>>, vector<128x32xf32>
    %cst_168 = arith.constant dense<0.000000e+00> : vector<16x32xf32>
    %471 = tpu.matmul %469, %470, %cst_168 {dimension_numbers = #tpu.dot_dimension_numbers<[1], [0], [0], [1], [0, 0, 1, 1], [], []>} : vector<16x128xf32>, vector<128x32xf32>, vector<16x32xf32> -> vector<16x32xf32>
    %472 = arith.addf %427, %471 : vector<16x32xf32>
    %c461_169 = arith.constant 461 : index
    %c0_170 = arith.constant 0 : index
    %473 = vector.load %arg4[%c461_169, %c0_170] : memref<560x128xf32, #tpu.memory_space<vmem>>, vector<1x32xf32>
    %474 = vector.broadcast %473 : vector<1x32xf32> to vector<16x32xf32>
    %475 = arith.addf %472, %474 : vector<16x32xf32>
    %c536_171 = arith.constant 536 : index
    %c0_172 = arith.constant 0 : index
    %476 = vector.load %arg4[%c536_171, %c0_172] : memref<560x128xf32, #tpu.memory_space<vmem>>, vector<1x32xf32>
    %c537_173 = arith.constant 537 : index
    %c0_174 = arith.constant 0 : index
    %477 = vector.load %arg4[%c537_173, %c0_174] : memref<560x128xf32, #tpu.memory_space<vmem>>, vector<1x32xf32>
    %cst_175 = arith.constant dense<0.000000e+00> : vector<16xf32>
    %478 = vector.multi_reduction <add>, %475, %cst_175 [1] : vector<16x32xf32> to vector<16xf32>
    %479 = vector.shape_cast %478 : vector<16xf32> to vector<16x1xf32>
    %cst_176 = arith.constant 3.200000e+01 : f32
    %480 = vector.broadcast %cst_176 : f32 to vector<16x1xf32>
    %481 = arith.divf %479, %480 : vector<16x1xf32>
    %482 = vector.broadcast %481 : vector<16x1xf32> to vector<16x32xf32>
    %483 = arith.subf %475, %482 : vector<16x32xf32>
    %484 = arith.mulf %483, %483 : vector<16x32xf32>
    %cst_177 = arith.constant dense<0.000000e+00> : vector<16xf32>
    %485 = vector.multi_reduction <add>, %484, %cst_177 [1] : vector<16x32xf32> to vector<16xf32>
    %486 = vector.shape_cast %485 : vector<16xf32> to vector<16x1xf32>
    %cst_178 = arith.constant 3.200000e+01 : f32
    %487 = vector.broadcast %cst_178 : f32 to vector<16x1xf32>
    %488 = arith.divf %486, %487 : vector<16x1xf32>
    %489 = vector.broadcast %481 : vector<16x1xf32> to vector<16x32xf32>
    %490 = arith.subf %475, %489 : vector<16x32xf32>
    %cst_179 = arith.constant 9.99999974E-6 : f32
    %491 = vector.broadcast %cst_179 : f32 to vector<16x1xf32>
    %492 = arith.addf %488, %491 : vector<16x1xf32>
    %493 = math.rsqrt %492 : vector<16x1xf32>
    %494 = vector.broadcast %493 : vector<16x1xf32> to vector<16x32xf32>
    %495 = arith.mulf %490, %494 : vector<16x32xf32>
    %496 = vector.broadcast %476 : vector<1x32xf32> to vector<16x32xf32>
    %497 = arith.mulf %495, %496 : vector<16x32xf32>
    %498 = vector.broadcast %477 : vector<1x32xf32> to vector<16x32xf32>
    %499 = arith.addf %497, %498 : vector<16x32xf32>
    %500 = tpu.concatenate %1, %2 in 0 : vector<8x1xf32>, vector<8x1xf32> -> vector<16x1xf32>
    %c0_180 = arith.constant 0 : index
    %c0_181 = arith.constant 0 : index
    %501 = vector.load %arg2[%c0_180, %c0_181] : memref<16x1xf32, #tpu.memory_space<vmem>>, vector<16x1xf32>
    %c0_182 = arith.constant 0 : index
    %c0_183 = arith.constant 0 : index
    %502 = vector.load %arg3[%c0_182, %c0_183] : memref<16x1xf32, #tpu.memory_space<vmem>>, vector<16x1xf32>
    %503 = arith.mulf %501, %501 : vector<16x1xf32>
    %504 = arith.mulf %501, %502 : vector<16x1xf32>
    %505 = arith.addf %500, %504 : vector<16x1xf32>
    %cst_184 = arith.constant 2.500000e-01 : f32
    %506 = vector.broadcast %cst_184 : f32 to vector<16x1xf32>
    %507 = arith.addf %503, %506 : vector<16x1xf32>
    %508 = math.rsqrt %507 : vector<16x1xf32>
    %cst_185 = arith.constant 2.500000e-01 : f32
    %509 = vector.broadcast %cst_185 : f32 to vector<16x1xf32>
    %510 = arith.addf %503, %509 : vector<16x1xf32>
    %cst_186 = arith.constant 2.500000e-01 : f32
    %511 = vector.broadcast %cst_186 : f32 to vector<16x1xf32>
    %512 = arith.divf %511, %510 : vector<16x1xf32>
    %cst_187 = arith.constant 5.000000e-01 : f32
    %513 = vector.broadcast %cst_187 : f32 to vector<16x1xf32>
    %514 = arith.mulf %501, %513 : vector<16x1xf32>
    %cst_188 = arith.constant 2.500000e-01 : f32
    %515 = vector.broadcast %cst_188 : f32 to vector<16x1xf32>
    %516 = arith.addf %503, %515 : vector<16x1xf32>
    %517 = math.rsqrt %516 : vector<16x1xf32>
    %518 = arith.mulf %514, %517 : vector<16x1xf32>
    %cst_189 = arith.constant 9.99999968E-21 : f32
    %519 = vector.broadcast %cst_189 : f32 to vector<16x1xf32>
    %520 = arith.maximumf %501, %519 : vector<16x1xf32>
    %521 = math.log %520 : vector<16x1xf32>
    %cst_190 = arith.constant 2.500000e-01 : f32
    %522 = vector.broadcast %cst_190 : f32 to vector<16x1xf32>
    %523 = arith.mulf %521, %522 : vector<16x1xf32>
    %c543 = arith.constant 543 : index
    %c0_191 = arith.constant 0 : index
    %524 = vector.load %arg4[%c543, %c0_191] : memref<560x128xf32, #tpu.memory_space<vmem>>, vector<1x16xf32>
    %525 = vector.broadcast %523 : vector<16x1xf32> to vector<16x16xf32>
    %526 = vector.broadcast %524 : vector<1x16xf32> to vector<16x16xf32>
    %527 = arith.mulf %525, %526 : vector<16x16xf32>
    %cst_192 = arith.constant 6.28318548 : f32
    %528 = vector.broadcast %cst_192 : f32 to vector<16x16xf32>
    %529 = arith.mulf %527, %528 : vector<16x16xf32>
    %c544 = arith.constant 544 : index
    %c0_193 = arith.constant 0 : index
    %530 = vector.load %arg4[%c544, %c0_193] : memref<560x128xf32, #tpu.memory_space<vmem>>, vector<1x32xf32>
    %531 = vector.broadcast %523 : vector<16x1xf32> to vector<16x32xf32>
    %532 = vector.broadcast %530 : vector<1x32xf32> to vector<16x32xf32>
    %533 = arith.mulf %531, %532 : vector<16x32xf32>
    %534 = math.sin %529 : vector<16x16xf32>
    %c504 = arith.constant 504 : index
    %c0_194 = arith.constant 0 : index
    %535 = vector.load %arg4[%c504, %c0_194] : memref<560x128xf32, #tpu.memory_space<vmem>>, vector<16x32xf32>
    %cst_195 = arith.constant dense<0.000000e+00> : vector<16x32xf32>
    %536 = tpu.matmul %534, %535, %cst_195 {dimension_numbers = #tpu.dot_dimension_numbers<[1], [0], [0], [1], [0, 0, 1, 1], [], []>} : vector<16x16xf32>, vector<16x32xf32>, vector<16x32xf32> -> vector<16x32xf32>
    %537 = arith.addf %533, %536 : vector<16x32xf32>
    %538 = math.cos %529 : vector<16x16xf32>
    %c520 = arith.constant 520 : index
    %c0_196 = arith.constant 0 : index
    %539 = vector.load %arg4[%c520, %c0_196] : memref<560x128xf32, #tpu.memory_space<vmem>>, vector<16x32xf32>
    %cst_197 = arith.constant dense<0.000000e+00> : vector<16x32xf32>
    %540 = tpu.matmul %538, %539, %cst_197 {dimension_numbers = #tpu.dot_dimension_numbers<[1], [0], [0], [1], [0, 0, 1, 1], [], []>} : vector<16x16xf32>, vector<16x32xf32>, vector<16x32xf32> -> vector<16x32xf32>
    %541 = arith.addf %537, %540 : vector<16x32xf32>
    %c545 = arith.constant 545 : index
    %c0_198 = arith.constant 0 : index
    %542 = vector.load %arg4[%c545, %c0_198] : memref<560x128xf32, #tpu.memory_space<vmem>>, vector<1x32xf32>
    %543 = vector.broadcast %542 : vector<1x32xf32> to vector<16x32xf32>
    %544 = arith.addf %541, %543 : vector<16x32xf32>
    %545 = arith.addf %544, %499 : vector<16x32xf32>
    %546 = arith.negf %545 : vector<16x32xf32>
    %547 = math.exp %546 : vector<16x32xf32>
    %cst_199 = arith.constant 1.000000e+00 : f32
    %548 = vector.broadcast %cst_199 : f32 to vector<16x32xf32>
    %549 = arith.addf %548, %547 : vector<16x32xf32>
    %550 = arith.divf %548, %549 : vector<16x32xf32>
    %551 = arith.mulf %545, %550 : vector<16x32xf32>
    %552 = arith.mulf %508, %505 : vector<16x1xf32>
    %cst_200 = arith.constant dense<0.000000e+00> : vector<16xf32>
    %553 = vector.multi_reduction <add>, %552, %cst_200 [1] : vector<16x1xf32> to vector<16xf32>
    %554 = vector.shape_cast %553 : vector<16xf32> to vector<16x1xf32>
    %cst_201 = arith.constant 1.000000e+00 : f32
    %555 = vector.broadcast %cst_201 : f32 to vector<16x1xf32>
    %556 = arith.divf %554, %555 : vector<16x1xf32>
    %557 = arith.subf %552, %556 : vector<16x1xf32>
    %558 = arith.mulf %557, %557 : vector<16x1xf32>
    %cst_202 = arith.constant dense<0.000000e+00> : vector<16xf32>
    %559 = vector.multi_reduction <add>, %558, %cst_202 [1] : vector<16x1xf32> to vector<16xf32>
    %560 = vector.shape_cast %559 : vector<16xf32> to vector<16x1xf32>
    %cst_203 = arith.constant 1.000000e+00 : f32
    %561 = vector.broadcast %cst_203 : f32 to vector<16x1xf32>
    %562 = arith.divf %560, %561 : vector<16x1xf32>
    %563 = arith.subf %552, %556 : vector<16x1xf32>
    %cst_204 = arith.constant 9.99999974E-6 : f32
    %564 = vector.broadcast %cst_204 : f32 to vector<16x1xf32>
    %565 = arith.addf %562, %564 : vector<16x1xf32>
    %566 = math.rsqrt %565 : vector<16x1xf32>
    %567 = arith.mulf %563, %566 : vector<16x1xf32>
    %c550 = arith.constant 550 : index
    %c0_205 = arith.constant 0 : index
    %568 = vector.load %arg4[%c550, %c0_205] : memref<560x128xf32, #tpu.memory_space<vmem>>, vector<1x32xf32>
    %569 = vector.broadcast %568 : vector<1x32xf32> to vector<16x32xf32>
    %570 = arith.mulf %551, %569 : vector<16x32xf32>
    %cst_206 = arith.constant dense<0.000000e+00> : vector<16xf32>
    %571 = vector.multi_reduction <add>, %570, %cst_206 [1] : vector<16x32xf32> to vector<16xf32>
    %572 = vector.shape_cast %571 : vector<16xf32> to vector<16x1xf32>
    %cst_207 = arith.constant 1.000000e+00 : f32
    %573 = vector.broadcast %cst_207 : f32 to vector<16x1xf32>
    %574 = arith.addf %572, %573 : vector<16x1xf32>
    %575 = arith.mulf %567, %574 : vector<16x1xf32>
    %c548 = arith.constant 548 : index
    %c0_208 = arith.constant 0 : index
    %576 = vector.load %arg4[%c548, %c0_208] : memref<560x128xf32, #tpu.memory_space<vmem>>, vector<1x32xf32>
    %577 = vector.broadcast %575 : vector<16x1xf32> to vector<16x32xf32>
    %578 = vector.broadcast %576 : vector<1x32xf32> to vector<16x32xf32>
    %579 = arith.mulf %577, %578 : vector<16x32xf32>
    %c547 = arith.constant 547 : index
    %c0_209 = arith.constant 0 : index
    %580 = vector.load %arg4[%c547, %c0_209] : memref<560x128xf32, #tpu.memory_space<vmem>>, vector<1x32xf32>
    %581 = vector.broadcast %580 : vector<1x32xf32> to vector<16x32xf32>
    %582 = arith.addf %579, %581 : vector<16x32xf32>
    %583 = arith.negf %582 : vector<16x32xf32>
    %584 = math.exp %583 : vector<16x32xf32>
    %cst_210 = arith.constant 1.000000e+00 : f32
    %585 = vector.broadcast %cst_210 : f32 to vector<16x32xf32>
    %586 = arith.addf %585, %584 : vector<16x32xf32>
    %587 = arith.divf %585, %586 : vector<16x32xf32>
    %588 = arith.mulf %582, %587 : vector<16x32xf32>
    %c546 = arith.constant 546 : index
    %c0_211 = arith.constant 0 : index
    %589 = vector.load %arg4[%c546, %c0_211] : memref<560x128xf32, #tpu.memory_space<vmem>>, vector<1x1xf32>
    %c549 = arith.constant 549 : index
    %c0_212 = arith.constant 0 : index
    %590 = vector.load %arg4[%c549, %c0_212] : memref<560x128xf32, #tpu.memory_space<vmem>>, vector<1x32xf32>
    %591 = vector.broadcast %590 : vector<1x32xf32> to vector<16x32xf32>
    %592 = arith.mulf %588, %591 : vector<16x32xf32>
    %cst_213 = arith.constant dense<0.000000e+00> : vector<16xf32>
    %593 = vector.multi_reduction <add>, %592, %cst_213 [1] : vector<16x32xf32> to vector<16xf32>
    %594 = vector.shape_cast %593 : vector<16xf32> to vector<16x1xf32>
    %595 = vector.broadcast %589 : vector<1x1xf32> to vector<16x1xf32>
    %596 = arith.addf %594, %595 : vector<16x1xf32>
    %c551 = arith.constant 551 : index
    %c0_214 = arith.constant 0 : index
    %597 = vector.load %arg4[%c551, %c0_214] : memref<560x128xf32, #tpu.memory_space<vmem>>, vector<1x32xf32>
    %598 = vector.broadcast %597 : vector<1x32xf32> to vector<16x32xf32>
    %599 = arith.mulf %551, %598 : vector<16x32xf32>
    %cst_215 = arith.constant dense<0.000000e+00> : vector<16xf32>
    %600 = vector.multi_reduction <add>, %599, %cst_215 [1] : vector<16x32xf32> to vector<16xf32>
    %601 = vector.shape_cast %600 : vector<16xf32> to vector<16x1xf32>
    %cst_216 = arith.constant 1.000000e+00 : f32
    %602 = vector.broadcast %cst_216 : f32 to vector<16x1xf32>
    %603 = arith.addf %601, %602 : vector<16x1xf32>
    %604 = arith.mulf %596, %603 : vector<16x1xf32>
    %605 = arith.addf %604, %552 : vector<16x1xf32>
    %cst_217 = arith.constant dense<0.000000e+00> : vector<16xf32>
    %606 = vector.multi_reduction <add>, %605, %cst_217 [1] : vector<16x1xf32> to vector<16xf32>
    %607 = vector.shape_cast %606 : vector<16xf32> to vector<16x1xf32>
    %cst_218 = arith.constant 1.000000e+00 : f32
    %608 = vector.broadcast %cst_218 : f32 to vector<16x1xf32>
    %609 = arith.divf %607, %608 : vector<16x1xf32>
    %610 = arith.subf %605, %609 : vector<16x1xf32>
    %611 = arith.mulf %610, %610 : vector<16x1xf32>
    %cst_219 = arith.constant dense<0.000000e+00> : vector<16xf32>
    %612 = vector.multi_reduction <add>, %611, %cst_219 [1] : vector<16x1xf32> to vector<16xf32>
    %613 = vector.shape_cast %612 : vector<16xf32> to vector<16x1xf32>
    %cst_220 = arith.constant 1.000000e+00 : f32
    %614 = vector.broadcast %cst_220 : f32 to vector<16x1xf32>
    %615 = arith.divf %613, %614 : vector<16x1xf32>
    %616 = arith.subf %605, %609 : vector<16x1xf32>
    %cst_221 = arith.constant 9.99999974E-6 : f32
    %617 = vector.broadcast %cst_221 : f32 to vector<16x1xf32>
    %618 = arith.addf %615, %617 : vector<16x1xf32>
    %619 = math.rsqrt %618 : vector<16x1xf32>
    %620 = arith.mulf %616, %619 : vector<16x1xf32>
    %c555 = arith.constant 555 : index
    %c0_222 = arith.constant 0 : index
    %621 = vector.load %arg4[%c555, %c0_222] : memref<560x128xf32, #tpu.memory_space<vmem>>, vector<1x32xf32>
    %622 = vector.broadcast %621 : vector<1x32xf32> to vector<16x32xf32>
    %623 = arith.mulf %551, %622 : vector<16x32xf32>
    %cst_223 = arith.constant dense<0.000000e+00> : vector<16xf32>
    %624 = vector.multi_reduction <add>, %623, %cst_223 [1] : vector<16x32xf32> to vector<16xf32>
    %625 = vector.shape_cast %624 : vector<16xf32> to vector<16x1xf32>
    %cst_224 = arith.constant 1.000000e+00 : f32
    %626 = vector.broadcast %cst_224 : f32 to vector<16x1xf32>
    %627 = arith.addf %625, %626 : vector<16x1xf32>
    %628 = arith.mulf %620, %627 : vector<16x1xf32>
    %c553 = arith.constant 553 : index
    %c0_225 = arith.constant 0 : index
    %629 = vector.load %arg4[%c553, %c0_225] : memref<560x128xf32, #tpu.memory_space<vmem>>, vector<1x32xf32>
    %630 = vector.broadcast %628 : vector<16x1xf32> to vector<16x32xf32>
    %631 = vector.broadcast %629 : vector<1x32xf32> to vector<16x32xf32>
    %632 = arith.mulf %630, %631 : vector<16x32xf32>
    %c552 = arith.constant 552 : index
    %c0_226 = arith.constant 0 : index
    %633 = vector.load %arg4[%c552, %c0_226] : memref<560x128xf32, #tpu.memory_space<vmem>>, vector<1x32xf32>
    %634 = vector.broadcast %633 : vector<1x32xf32> to vector<16x32xf32>
    %635 = arith.addf %632, %634 : vector<16x32xf32>
    %636 = arith.negf %635 : vector<16x32xf32>
    %637 = math.exp %636 : vector<16x32xf32>
    %cst_227 = arith.constant 1.000000e+00 : f32
    %638 = vector.broadcast %cst_227 : f32 to vector<16x32xf32>
    %639 = arith.addf %638, %637 : vector<16x32xf32>
    %640 = arith.divf %638, %639 : vector<16x32xf32>
    %641 = arith.mulf %635, %640 : vector<16x32xf32>
    %c546_228 = arith.constant 546 : index
    %c1 = arith.constant 1 : index
    %642 = vector.load %arg4[%c546_228, %c1] : memref<560x128xf32, #tpu.memory_space<vmem>>, vector<1x1xf32>
    %c554 = arith.constant 554 : index
    %c0_229 = arith.constant 0 : index
    %643 = vector.load %arg4[%c554, %c0_229] : memref<560x128xf32, #tpu.memory_space<vmem>>, vector<1x32xf32>
    %644 = vector.broadcast %643 : vector<1x32xf32> to vector<16x32xf32>
    %645 = arith.mulf %641, %644 : vector<16x32xf32>
    %cst_230 = arith.constant dense<0.000000e+00> : vector<16xf32>
    %646 = vector.multi_reduction <add>, %645, %cst_230 [1] : vector<16x32xf32> to vector<16xf32>
    %647 = vector.shape_cast %646 : vector<16xf32> to vector<16x1xf32>
    %648 = vector.broadcast %642 : vector<1x1xf32> to vector<16x1xf32>
    %649 = arith.addf %647, %648 : vector<16x1xf32>
    %c556 = arith.constant 556 : index
    %c0_231 = arith.constant 0 : index
    %650 = vector.load %arg4[%c556, %c0_231] : memref<560x128xf32, #tpu.memory_space<vmem>>, vector<1x32xf32>
    %651 = vector.broadcast %650 : vector<1x32xf32> to vector<16x32xf32>
    %652 = arith.mulf %551, %651 : vector<16x32xf32>
    %cst_232 = arith.constant dense<0.000000e+00> : vector<16xf32>
    %653 = vector.multi_reduction <add>, %652, %cst_232 [1] : vector<16x32xf32> to vector<16xf32>
    %654 = vector.shape_cast %653 : vector<16xf32> to vector<16x1xf32>
    %cst_233 = arith.constant 1.000000e+00 : f32
    %655 = vector.broadcast %cst_233 : f32 to vector<16x1xf32>
    %656 = arith.addf %654, %655 : vector<16x1xf32>
    %657 = arith.mulf %649, %656 : vector<16x1xf32>
    %658 = arith.addf %657, %605 : vector<16x1xf32>
    %659 = arith.mulf %512, %505 : vector<16x1xf32>
    %660 = arith.mulf %518, %658 : vector<16x1xf32>
    %661 = arith.addf %659, %660 : vector<16x1xf32>
    %cst_234 = arith.constant -1.000000e+00 : f32
    %cst_235 = arith.constant 1.000000e+00 : f32
    %662 = vector.broadcast %cst_234 : f32 to vector<16x1xf32>
    %663 = arith.maximumf %662, %661 : vector<16x1xf32>
    %664 = vector.broadcast %cst_235 : f32 to vector<16x1xf32>
    %665 = arith.minimumf %664, %663 : vector<16x1xf32>
    %666 = arith.subf %665, %500 : vector<16x1xf32>
    %667 = arith.mulf %666, %666 : vector<16x1xf32>
    %cst_236 = arith.constant dense<0.000000e+00> : vector<16xf32>
    %668 = vector.multi_reduction <add>, %667, %cst_236 [1] : vector<16x1xf32> to vector<16xf32>
    %669 = vector.shape_cast %668 : vector<16xf32> to vector<16x1xf32>
    %cst_237 = arith.constant 1.000000e+00 : f32
    %670 = vector.broadcast %cst_237 : f32 to vector<16x1xf32>
    %671 = arith.divf %669, %670 : vector<16x1xf32>
    %cst_238 = arith.constant 2.500000e-01 : f32
    %672 = vector.broadcast %cst_238 : f32 to vector<16x1xf32>
    %673 = arith.addf %503, %672 : vector<16x1xf32>
    %cst_239 = arith.constant 2.500000e-01 : f32
    %674 = vector.broadcast %cst_239 : f32 to vector<16x1xf32>
    %675 = arith.mulf %503, %674 : vector<16x1xf32>
    %676 = arith.divf %673, %675 : vector<16x1xf32>
    %677 = arith.mulf %671, %676 : vector<16x1xf32>
    %cst_240 = arith.constant dense<0.000000e+00> : vector<1xf32>
    %678 = vector.multi_reduction <add>, %677, %cst_240 [0] : vector<16x1xf32> to vector<1xf32>
    %679 = vector.shape_cast %678 : vector<1xf32> to vector<1x1xf32>
    %cst_241 = arith.constant 1.600000e+01 : f32
    %680 = vector.broadcast %cst_241 : f32 to vector<1x1xf32>
    %681 = arith.divf %679, %680 : vector<1x1xf32>
    %c0_242 = arith.constant 0 : index
    %c0_243 = arith.constant 0 : index
    %682 = vector.load %arg5[%c0_242, %c0_243] : memref<1x1xf32, #tpu.memory_space<vmem>>, vector<1x1xf32>
    tpu.vector_store %arg5[%c0_242, %c0_243], %681 {strides = array<i32>} : memref<1x1xf32, #tpu.memory_space<vmem>>, vector<1x1xf32>,
    %cst_244 = arith.constant dense<0.000000e+00> : vector<1xf32>
    %683 = vector.multi_reduction <add>, %671, %cst_244 [0] : vector<16x1xf32> to vector<1xf32>
    %684 = vector.shape_cast %683 : vector<1xf32> to vector<1x1xf32>
    %cst_245 = arith.constant 1.600000e+01 : f32
    %685 = vector.broadcast %cst_245 : f32 to vector<1x1xf32>
    %686 = arith.divf %684, %685 : vector<1x1xf32>
    %c0_246 = arith.constant 0 : index
    %c0_247 = arith.constant 0 : index
    %687 = vector.load %arg6[%c0_246, %c0_247] : memref<1x1xf32, #tpu.memory_space<vmem>>, vector<1x1xf32>
    tpu.vector_store %arg6[%c0_246, %c0_247], %686 {strides = array<i32>} : memref<1x1xf32, #tpu.memory_space<vmem>>, vector<1x1xf32>,
    return
  }
  func.func @transform_0(%arg0: i32) -> (i32, i32) {
    %c0_i32 = arith.constant 0 : i32
    %c0_i32_0 = arith.constant 0 : i32
    %c0_i32_1 = arith.constant 0 : i32
    return %c0_i32, %c0_i32_0 : i32, i32
  }
  func.func @transform_1(%arg0: i32) -> (i32, i32) {
    %c0_i32 = arith.constant 0 : i32
    %c0_i32_0 = arith.constant 0 : i32
    %c0_i32_1 = arith.constant 0 : i32
    return %c0_i32, %c0_i32_0 : i32, i32
  }
  func.func @transform_2(%arg0: i32) -> (i32, i32) {
    %c0_i32 = arith.constant 0 : i32
    %c0_i32_0 = arith.constant 0 : i32
    %c0_i32_1 = arith.constant 0 : i32
    return %c0_i32, %c0_i32_0 : i32, i32
  }
  func.func @transform_3(%arg0: i32) -> (i32, i32) {
    %c0_i32 = arith.constant 0 : i32
    %c0_i32_0 = arith.constant 0 : i32
    %c0_i32_1 = arith.constant 0 : i32
    return %c0_i32, %c0_i32_0 : i32, i32
  }
  func.func @transform_4(%arg0: i32) -> (i32, i32) {
    %c0_i32 = arith.constant 0 : i32
    %c0_i32_0 = arith.constant 0 : i32
    %c0_i32_1 = arith.constant 0 : i32
    return %c0_i32, %c0_i32_0 : i32, i32
  }
  func.func @transform_5(%arg0: i32) -> (i32, i32) {
    %c0_i32 = arith.constant 0 : i32
    %c0_i32_0 = arith.constant 0 : i32
    %c0_i32_1 = arith.constant 0 : i32
    return %c0_i32, %c0_i32_0 : i32, i32
  }
}

</mosaic_0001>

<llo_original>
// kernel: image_autoregressive_diffusion_forward.3
$region0: #{image_autoregressive_diffusion_forward.3}
  #allocation0 [shape = 'u32[]', space=smem, size = 0x4, offset = 0x4, fixed_abs, tag = 'smem constant byte address 0x4 - core index']
  #allocation1 [shape = 'u32[144,128]{1,0:T(1,128)}', space=vmem, size = 0x12000, scoped, tag = 'internal scratch']
  %s0 = inlined_call_operand.vmem [shape: f32[8,2], index: 0, kind: input, shape index: {}]
  %s1 = inlined_call_operand.vmem [shape: f32[16,1], index: 1, kind: input, shape index: {}]
  %s2 = inlined_call_operand.vmem [shape: f32[16,1], index: 2, kind: input, shape index: {}]
  %s3 = inlined_call_operand.hbm [shape: f32[560,128], index: 3, kind: input, shape index: {}]
  %s4 = inlined_call_operand.hbm [shape: f32[1,1], index: 4, kind: output, shape index: {0}]
  %s5 = inlined_call_operand.hbm [shape: f32[1,1], index: 5, kind: output, shape index: {1}]
  %6 = xla_tuple %s4, %s5
  %s7 = sld [smem:[#allocation0]]
  $region38: #{image_autoregressive_diffusion_forward.3} parent=0
    _
  %s9 = ssub.s32 1, %s7
  %s10 = scalar_select 0, %s9, %s7
  $region1: #{image_autoregressive_diffusion_forward.3} parent=0
    #allocation2 [shape = 'u8[286720]{0}', space=vmem, size = 0x46000, scoped, tag = 'input window, operand 3, single buffered']
    #allocation3 [shape = 's32[1]{0}', space=sflag, size = 0x4, scoped, tag = 'scoped memory for image_autoregressive_diffusion_forward.3']
    #allocation4 [shape = 's32[1]{0}', space=sflag, size = 0x4, scoped, tag = 'scoped memory for image_autoregressive_diffusion_forward.3']
    #allocation5 [shape = 'u8[512]{0}', space=vmem, size = 0x400, scoped, tag = 'output window, operand 0, single buffered']
    #allocation6 [shape = 'u8[512]{0}', space=vmem, size = 0x400, scoped, tag = 'output window, operand 1, single buffered']
    #allocation7 [shape = 's32[1]{0}', space=sflag, size = 0x4, scoped, tag = 'scoped memory for image_autoregressive_diffusion_forward.3']
    %11 = vsyncpa [#allocation3], 0
    %12 = vsyncpa [#allocation4], 0
    %13 = vsyncpa [#allocation7], 0
    // Predicated region
    $region2: #{image_autoregressive_diffusion_forward.3} parent=1 // pred_check
      _
    $region3: #{image_autoregressive_diffusion_forward.3} parent=1 // pred_check_branch
      %15 = sbr.rel (0) target = $region5
    $region4: #{image_autoregressive_diffusion_forward.3} parent=1 // pred_region
      _
    $region5: #{image_autoregressive_diffusion_forward.3} parent=1 // pred_fallthru
      _
    // Predicated region
    $region6: #{image_autoregressive_diffusion_forward.3} parent=1 // pred_check
      _
    $region7: #{image_autoregressive_diffusion_forward.3} parent=1 // pred_check_branch
      %17 = sbr.rel (0) target = $region9
    $region8: #{image_autoregressive_diffusion_forward.3} parent=1 // pred_region
      _
    $region9: #{image_autoregressive_diffusion_forward.3} parent=1 // pred_fallthru
      _
    // Predicated region
    $region10: #{image_autoregressive_diffusion_forward.3} parent=1 // pred_check
      _
    $region11: #{image_autoregressive_diffusion_forward.3} parent=1 // pred_check_branch
      %19 = sbr.rel (0) target = $region13
    $region12: #{image_autoregressive_diffusion_forward.3} parent=1 // pred_region
      _
    $region13: #{image_autoregressive_diffusion_forward.3} parent=1 // pred_fallthru
      _
    // Predicated region
    $region14: #{image_autoregressive_diffusion_forward.3} parent=1 // pred_check
      _
    $region15: #{image_autoregressive_diffusion_forward.3} parent=1 // pred_check_branch
      %21 = sbr.rel (0) target = $region17
    $region16: #{image_autoregressive_diffusion_forward.3} parent=1 // pred_region
      %s23 = ssub.s32 8960, 8960
      %24 = vsyncadd [#allocation3], %s23
      %s25 = sshll.u32 [#allocation2], 4
      %s26 = int_to_ptr.vmem [resolvable:$true] %s25
      %31 = dma.hbm_to_vmem [thread:$0]  %s3, 8960, %s26, [#allocation3], 128, 128, 8
    $region17: #{image_autoregressive_diffusion_forward.3} parent=1 // pred_fallthru
      _
    // Predicated region
    $region18: #{image_autoregressive_diffusion_forward.3} parent=1 // pred_check
      _
    $region19: #{image_autoregressive_diffusion_forward.3} parent=1 // pred_check_branch
      %33 = sbr.rel (0) target = $region21
    $region20: #{image_autoregressive_diffusion_forward.3} parent=1 // pred_region
      %34 = dma.done [#allocation3], 8960
    $region21: #{image_autoregressive_diffusion_forward.3} parent=1 // pred_fallthru
      _
    %v35 = vld [vmem:[%s0] sm:$0xff]
    %v36 = vld [vmem:[#allocation2 + $0x1d0] sm:$0xff]
    %v37 = vld [vmem:[#allocation2 + $0x1d8] sm:$0xff]
    %v38 = vld [vmem:[#allocation2 + $0x1e0] sm:$0xff]
    %v39 = vld [vmem:[#allocation2 + $0x1e8] sm:$0xff]
    %v40 = vld [vmem:[#allocation2 + $0x1f0] sm:$0xf]
    %v41 = vld [vmem:[#allocation2 + $0x21a] sm:$0x1]
    %v42 = vld [vmem:[#allocation2 + $0x21b] sm:$0x1]
    %v43 = vld [vmem:[#allocation2 + $0x21d] sm:$0x1]
    %v44 = vld [vmem:[#allocation2 + $0x21e] sm:$0x1]
    %v45 = vld [vmem:[#allocation2 + $0x21c] sm:$0x1]
    %47 = vset.pattern.permute.xlu0 0
    %48 = vperm.xlu0 %47, %v35
    %v49 = vpop.permute.xlu0 %48
    %v51 = vlaneseq
    %v52 = vshrl.u32 %v51, 7
    %v53 = vsub.s32 0, %v52
    %v54 = vrot.slane %v41, %v53
    %v55 = vmul.f32 %v49, %v54
    %v56 = vlaneseq
    %v57 = vshrl.u32 %v56, 7
    %v58 = vsub.s32 0, %v57
    %v59 = vrot.slane %v42, %v58
    %v60 = vadd.f32 %v55, %v59
    %61 = vset.pattern.permute.xlu0 1
    %62 = vperm.xlu0 %61, %v35
    %v63 = vpop.permute.xlu0 %62
    %v65 = vmul.f32 %v63, %v54
    %v66 = vadd.f32 %v65, %v59
    %v67 = vadd.f32 %v45, %v43
    %v68 = vlaneseq
    %v69 = vshrl.u32 %v68, 7
    %v70 = vsub.s32 0, %v69
    %v71 = vrot.slane %v67, %v70
    %v72 = vlaneseq
    %v73 = vshrl.u32 %v72, 7
    %v74 = vsub.s32 0, %v73
    %v75 = vrot.slane %v44, %v74
    %v76 = vadd.f32 %v60, %v75
    %v77 = vld [vmem:[#allocation2 + $0xe0] sm:$0x1]
    %v78 = vld [vmem:[#allocation2 + $0xe1] sm:$0x1]
    %vm79 = vcmask 261120
    %v80 = vsel %vm79, %v71, 0.0
    %81 = vadd.xlane.f32.xlu0 %v80
    %v82 = vpop.xlane.xlu0 %81
    %v83 = vsel %vm79, %v76, 0.0
    %84 = vadd.xlane.f32.xlu0 %v83
    %v85 = vpop.xlane.xlu0 %84
    %v86 = vrcp.pop 32.0
    %v87 = vmul.f32 %v82, %v86
    %v88 = vmul.f32 %v85, %v86
    %v89 = vsub.f32 %v71, %v87
    %v90 = vsub.f32 %v76, %v88
    %v91 = vmul.f32 %v89, %v89
    %v92 = vmul.f32 %v90, %v90
    %v93 = vsel %vm79, %v91, 0.0
    %94 = vadd.xlane.f32.xlu0 %v93
    %v95 = vpop.xlane.xlu0 %94
    %v96 = vsel %vm79, %v92, 0.0
    %97 = vadd.xlane.f32.xlu0 %v96
    %v98 = vpop.xlane.xlu0 %97
    %v99 = vmul.f32 %v95, %v86
    %v100 = vmul.f32 %v98, %v86
    %v101 = vadd.f32 %v99, 1e-05
    %v102 = vadd.f32 %v100, 1e-05
    %v103 = vrsqrt.pop %v101
    %v104 = vrsqrt.pop %v102
    %v105 = vmul.f32 %v89, %v103
    %v106 = vmul.f32 %v90, %v104
    %v107 = vlaneseq
    %v108 = vshrl.u32 %v107, 7
    %v109 = vsub.s32 0, %v108
    %v110 = vrot.slane %v77, %v109
    %v111 = vmul.f32 %v105, %v110
    %v112 = vmul.f32 %v106, %v110
    %v113 = vlaneseq
    %v114 = vshrl.u32 %v113, 7
    %v115 = vsub.s32 0, %v114
    %v116 = vrot.slane %v78, %v115
    %v117 = vadd.f32 %v111, %v116
    %v118 = vadd.f32 %v112, %v116
    %v119 = vld [vmem:[#allocation2] sm:$0xff]
    %v120 = vld [vmem:[#allocation2 + $0x8] sm:$0xff]
    %v121 = vld [vmem:[#allocation2 + $0x10] sm:$0xff]
    %v122 = vld [vmem:[#allocation2 + $0x18] sm:$0xff]
    %v124 = vsel %vm79, %v117, 0
    %v127 = vsel %vm79, %v118, 0
    %129 = vmatprep.subr.mxu0 0.0
    %130 = vmatpush1.msra.mxu0 %v119
    %131 = vmatprep.subr.mxu0 0.0
    %132 = vmatpush1.msra.mxu0 %v120
    %133 = vmatprep.subr.mxu0 0.0
    %134 = vmatpush1.msra.mxu0 %v121
    %135 = vmatprep.subr.mxu0 0.0
    %136 = vmatpush1.msra.mxu0 %v122
    %137 = vmatprep.subr.mxu0 0.0
    %138 = vmatpush1.msra.mxu0 0.0
    %139 = vmatprep.subr.mxu0 0.0
    %140 = vmatpush1.msra.mxu0 0.0
    %141 = vmatprep.subr.mxu0 0.0
    %142 = vmatpush1.msra.mxu0 0.0
    %143 = vmatprep.subr.mxu0 0.0
    %144 = vmatpush1.msra.mxu0 0.0
    %145 = vmatprep.subr.mxu0 0.0
    %146 = vmatpush1.msra.mxu0 0.0
    %147 = vmatprep.subr.mxu0 0.0
    %148 = vmatpush1.msra.mxu0 0.0
    %149 = vmatprep.subr.mxu0 0.0
    %150 = vmatpush1.msra.mxu0 0.0
    %151 = vmatprep.subr.mxu0 0.0
    %152 = vmatpush1.msra.mxu0 0.0
    %153 = vmatprep.subr.mxu0 0.0
    %154 = vmatpush1.msra.mxu0 0.0
    %155 = vmatprep.subr.mxu0 0.0
    %156 = vmatpush1.msra.mxu0 0.0
    %157 = vmatprep.subr.mxu0 0.0
    %158 = vmatpush1.msra.mxu0 0.0
    %159 = vmatprep.subr.mxu0 0.0
    %160 = vmatpush1.msra.mxu0 0.0
    %161 = vmatprep.subr.mxu0 0.0
    %162 = vmatpush1.msra.mxu0 0.0
    %163 = vmatprep.subr.mxu0 0.0
    %164 = vmatpush1.msra.mxu0 0.0
    %165 = vmatprep.subr.mxu0 0.0
    %166 = vmatpush1.msra.mxu0 0.0
    %167 = vmatprep.subr.mxu0 0.0
    %168 = vmatpush1.msra.mxu0 0.0
    %169 = vmatprep.subr.mxu0 0.0
    %170 = vmatpush1.msra.mxu0 0.0
    %171 = vmatprep.subr.mxu0 0.0
    %172 = vmatpush1.msra.mxu0 0.0
    %173 = vmatprep.subr.mxu0 0.0
    %174 = vmatpush1.msra.mxu0 0.0
    %175 = vmatprep.subr.mxu0 0.0
    %176 = vmatpush1.msra.mxu0 0.0
    %177 = vmatprep.subr.mxu0 0.0
    %178 = vmatpush1.msra.mxu0 0.0
    %179 = vmatprep.subr.mxu0 0.0
    %180 = vmatpush1.msra.mxu0 0.0
    %181 = vmatprep.subr.mxu0 0.0
    %182 = vmatpush1.msra.mxu0 0.0
    %183 = vmatprep.subr.mxu0 0.0
    %184 = vmatpush1.msra.mxu0 0.0
    %185 = vmatprep.subr.mxu0 0.0
    %186 = vmatpush1.msra.mxu0 0.0
    %187 = vmatprep.subr.mxu0 0.0
    %188 = vmatpush1.msra.mxu0 0.0
    %189 = vmatprep.subr.mxu0 0.0
    %190 = vmatpush1.msra.mxu0 0.0
    %191 = vmatprep.subr.mxu0 0.0
    %192 = vmatpush1.msra.mxu0 0.0
    %193 = vmatprep.mubr.f32.mxu0 0.0
    %194 = vmatmul.mubr.f32.gmra.mrb[0].mxu0 %v124
    %v195 = vpop.f32.mrb[0].mxu0
    %v196 = vadd.f32 0.0, %v195
    %v197 = vpop.f32.mrb[0].mxu0
    %198 = vmatprep.mubr.f32.mxu0 0.0
    %199 = vmatmul.mubr.f32.gmra.mrb[0].mxu0 %v127
    %v200 = vpop.f32.mrb[0].mxu0
    %v201 = vadd.f32 0.0, %v200
    %v202 = vpop.f32.mrb[0].mxu0
    %203 = vdwg.mxu0
    %205 = vrot.lane.b32.xlu0 %v196, 96
    %v206 = vpop.permute.xlu0 %205
    %v208 = vmul.f32 %v201, %v206
    %v210 = vsel %vm79, %v208, 0
    %212 = vmatprep.subr.mxu0 0.0
    %213 = vmatpush1.msra.mxu0 %v36
    %214 = vmatprep.subr.mxu0 0.0
    %215 = vmatpush1.msra.mxu0 %v37
    %216 = vmatprep.subr.mxu0 0.0
    %217 = vmatpush1.msra.mxu0 %v38
    %218 = vmatprep.subr.mxu0 0.0
    %219 = vmatpush1.msra.mxu0 %v39
    %220 = vmatprep.subr.mxu0 0.0
    %221 = vmatpush1.msra.mxu0 0.0
    %222 = vmatprep.subr.mxu0 0.0
    %223 = vmatpush1.msra.mxu0 0.0
    %224 = vmatprep.subr.mxu0 0.0
    %225 = vmatpush1.msra.mxu0 0.0
    %226 = vmatprep.subr.mxu0 0.0
    %227 = vmatpush1.msra.mxu0 0.0
    %228 = vmatprep.subr.mxu0 0.0
    %229 = vmatpush1.msra.mxu0 0.0
    %230 = vmatprep.subr.mxu0 0.0
    %231 = vmatpush1.msra.mxu0 0.0
    %232 = vmatprep.subr.mxu0 0.0
    %233 = vmatpush1.msra.mxu0 0.0
    %234 = vmatprep.subr.mxu0 0.0
    %235 = vmatpush1.msra.mxu0 0.0
    %236 = vmatprep.subr.mxu0 0.0
    %237 = vmatpush1.msra.mxu0 0.0
    %238 = vmatprep.subr.mxu0 0.0
    %239 = vmatpush1.msra.mxu0 0.0
    %240 = vmatprep.subr.mxu0 0.0
    %241 = vmatpush1.msra.mxu0 0.0
    %242 = vmatprep.subr.mxu0 0.0
    %243 = vmatpush1.msra.mxu0 0.0
    %244 = vmatprep.subr.mxu0 0.0
    %245 = vmatpush1.msra.mxu0 0.0
    %246 = vmatprep.subr.mxu0 0.0
    %247 = vmatpush1.msra.mxu0 0.0
    %248 = vmatprep.subr.mxu0 0.0
    %249 = vmatpush1.msra.mxu0 0.0
    %250 = vmatprep.subr.mxu0 0.0
    %251 = vmatpush1.msra.mxu0 0.0
    %252 = vmatprep.subr.mxu0 0.0
    %253 = vmatpush1.msra.mxu0 0.0
    %254 = vmatprep.subr.mxu0 0.0
    %255 = vmatpush1.msra.mxu0 0.0
    %256 = vmatprep.subr.mxu0 0.0
    %257 = vmatpush1.msra.mxu0 0.0
    %258 = vmatprep.subr.mxu0 0.0
    %259 = vmatpush1.msra.mxu0 0.0
    %260 = vmatprep.subr.mxu0 0.0
    %261 = vmatpush1.msra.mxu0 0.0
    %262 = vmatprep.subr.mxu0 0.0
    %263 = vmatpush1.msra.mxu0 0.0
    %264 = vmatprep.subr.mxu0 0.0
    %265 = vmatpush1.msra.mxu0 0.0
    %266 = vmatprep.subr.mxu0 0.0
    %267 = vmatpush1.msra.mxu0 0.0
    %268 = vmatprep.subr.mxu0 0.0
    %269 = vmatpush1.msra.mxu0 0.0
    %270 = vmatprep.subr.mxu0 0.0
    %271 = vmatpush1.msra.mxu0 0.0
    %272 = vmatprep.subr.mxu0 0.0
    %273 = vmatpush1.msra.mxu0 0.0
    %274 = vmatprep.subr.mxu0 0.0
    %275 = vmatpush1.msra.mxu0 0.0
    %276 = vmatprep.mubr.f32.mxu0 0.0
    %277 = vmatmul.mubr.f32.gmra.mrb[0].mxu0 %v210
    %v278 = vpop.f32.mrb[0].mxu0
    %v279 = vadd.f32 0.0, %v278
    %v280 = vpop.f32.mrb[0].mxu0
    %281 = vdwg.mxu0
    %v282 = vmul.f32 %v279, 0.35355338
    %284 = vrot.lane.b32.xlu0 %v201, 96
    %v285 = vpop.permute.xlu0 %284
    %v287 = vmul.f32 %v201, %v285
    %v289 = vsel %vm79, %v287, 0
    %291 = vmatprep.subr.mxu0 0.0
    %292 = vmatpush1.msra.mxu0 %v36
    %293 = vmatprep.subr.mxu0 0.0
    %294 = vmatpush1.msra.mxu0 %v37
    %295 = vmatprep.subr.mxu0 0.0
    %296 = vmatpush1.msra.mxu0 %v38
    %297 = vmatprep.subr.mxu0 0.0
    %298 = vmatpush1.msra.mxu0 %v39
    %299 = vmatprep.subr.mxu0 0.0
    %300 = vmatpush1.msra.mxu0 0.0
    %301 = vmatprep.subr.mxu0 0.0
    %302 = vmatpush1.msra.mxu0 0.0
    %303 = vmatprep.subr.mxu0 0.0
    %304 = vmatpush1.msra.mxu0 0.0
    %305 = vmatprep.subr.mxu0 0.0
    %306 = vmatpush1.msra.mxu0 0.0
    %307 = vmatprep.subr.mxu0 0.0
    %308 = vmatpush1.msra.mxu0 0.0
    %309 = vmatprep.subr.mxu0 0.0
    %310 = vmatpush1.msra.mxu0 0.0
    %311 = vmatprep.subr.mxu0 0.0
    %312 = vmatpush1.msra.mxu0 0.0
    %313 = vmatprep.subr.mxu0 0.0
    %314 = vmatpush1.msra.mxu0 0.0
    %315 = vmatprep.subr.mxu0 0.0
    %316 = vmatpush1.msra.mxu0 0.0
    %317 = vmatprep.subr.mxu0 0.0
    %318 = vmatpush1.msra.mxu0 0.0
    %319 = vmatprep.subr.mxu0 0.0
    %320 = vmatpush1.msra.mxu0 0.0
    %321 = vmatprep.subr.mxu0 0.0
    %322 = vmatpush1.msra.mxu0 0.0
    %323 = vmatprep.subr.mxu0 0.0
    %324 = vmatpush1.msra.mxu0 0.0
    %325 = vmatprep.subr.mxu0 0.0
    %326 = vmatpush1.msra.mxu0 0.0
    %327 = vmatprep.subr.mxu0 0.0
    %328 = vmatpush1.msra.mxu0 0.0
    %329 = vmatprep.subr.mxu0 0.0
    %330 = vmatpush1.msra.mxu0 0.0
    %331 = vmatprep.subr.mxu0 0.0
    %332 = vmatpush1.msra.mxu0 0.0
    %333 = vmatprep.subr.mxu0 0.0
    %334 = vmatpush1.msra.mxu0 0.0
    %335 = vmatprep.subr.mxu0 0.0
    %336 = vmatpush1.msra.mxu0 0.0
    %337 = vmatprep.subr.mxu0 0.0
    %338 = vmatpush1.msra.mxu0 0.0
    %339 = vmatprep.subr.mxu0 0.0
    %340 = vmatpush1.msra.mxu0 0.0
    %341 = vmatprep.subr.mxu0 0.0
    %342 = vmatpush1.msra.mxu0 0.0
    %343 = vmatprep.subr.mxu0 0.0
    %344 = vmatpush1.msra.mxu0 0.0
    %345 = vmatprep.subr.mxu0 0.0
    %346 = vmatpush1.msra.mxu0 0.0
    %347 = vmatprep.subr.mxu0 0.0
    %348 = vmatpush1.msra.mxu0 0.0
    %349 = vmatprep.subr.mxu0 0.0
    %350 = vmatpush1.msra.mxu0 0.0
    %351 = vmatprep.subr.mxu0 0.0
    %352 = vmatpush1.msra.mxu0 0.0
    %353 = vmatprep.subr.mxu0 0.0
    %354 = vmatpush1.msra.mxu0 0.0
    %355 = vmatprep.mubr.f32.mxu0 0.0
    %356 = vmatmul.mubr.f32.gmra.mrb[0].mxu0 %v289
    %v357 = vpop.f32.mrb[0].mxu0
    %v358 = vadd.f32 0.0, %v357
    %v359 = vpop.f32.mrb[0].mxu0
    %360 = vdwg.mxu0
    %v361 = vmul.f32 %v358, 0.35355338
    %v362 = vmax.f32 %v282, %v361
    %v363 = vsub.f32 %v282, %v362
    %v364 = vmul.f32 %v363, 1.442695
    %v365 = vpow.pop %v364
    %v366 = vsub.f32 %v361, %v362
    %v367 = vmul.f32 %v366, 1.442695
    %v368 = vpow.pop %v367
    %v369 = vadd.f32 %v365, %v368
    %v370 = vrcp.pop %v369
    %v371 = vmul.f32 %v365, %v370
    %vm372 = vcmask 31744
    %v374 = vsel %vm372, %v371, 0
    %vm376 = vcmask 1043456
    %v378 = vsel %vm376, %v40, 0
    %380 = vmatprep.subr.mxu0 0.0
    %381 = vmatpush1.msra.mxu0 %v378
    %382 = vmatprep.subr.mxu0 0.0
    %383 = vmatpush1.msra.mxu0 0.0
    %384 = vmatprep.subr.mxu0 0.0
    %385 = vmatpush1.msra.mxu0 0.0
    %386 = vmatprep.subr.mxu0 0.0
    %387 = vmatpush1.msra.mxu0 0.0
    %388 = vmatprep.subr.mxu0 0.0
    %389 = vmatpush1.msra.mxu0 0.0
    %390 = vmatprep.subr.mxu0 0.0
    %391 = vmatpush1.msra.mxu0 0.0
    %392 = vmatprep.subr.mxu0 0.0
    %393 = vmatpush1.msra.mxu0 0.0
    %394 = vmatprep.subr.mxu0 0.0
    %395 = vmatpush1.msra.mxu0 0.0
    %396 = vmatprep.subr.mxu0 0.0
    %397 = vmatpush1.msra.mxu0 0.0
    %398 = vmatprep.subr.mxu0 0.0
    %399 = vmatpush1.msra.mxu0 0.0
    %400 = vmatprep.subr.mxu0 0.0
    %401 = vmatpush1.msra.mxu0 0.0
    %402 = vmatprep.subr.mxu0 0.0
    %403 = vmatpush1.msra.mxu0 0.0
    %404 = vmatprep.subr.mxu0 0.0
    %405 = vmatpush1.msra.mxu0 0.0
    %406 = vmatprep.subr.mxu0 0.0
    %407 = vmatpush1.msra.mxu0 0.0
    %408 = vmatprep.subr.mxu0 0.0
    %409 = vmatpush1.msra.mxu0 0.0
    %410 = vmatprep.subr.mxu0 0.0
    %411 = vmatpush1.msra.mxu0 0.0
    %412 = vmatprep.subr.mxu0 0.0
    %413 = vmatpush1.msra.mxu0 0.0
    %414 = vmatprep.subr.mxu0 0.0
    %415 = vmatpush1.msra.mxu0 0.0
    %416 = vmatprep.subr.mxu0 0.0
    %417 = vmatpush1.msra.mxu0 0.0
    %418 = vmatprep.subr.mxu0 0.0
    %419 = vmatpush1.msra.mxu0 0.0
    %420 = vmatprep.subr.mxu0 0.0
    %421 = vmatpush1.msra.mxu0 0.0
    %422 = vmatprep.subr.mxu0 0.0
    %423 = vmatpush1.msra.mxu0 0.0
    %424 = vmatprep.subr.mxu0 0.0
    %425 = vmatpush1.msra.mxu0 0.0
    %426 = vmatprep.subr.mxu0 0.0
    %427 = vmatpush1.msra.mxu0 0.0
    %428 = vmatprep.subr.mxu0 0.0
    %429 = vmatpush1.msra.mxu0 0.0
    %430 = vmatprep.subr.mxu0 0.0
    %431 = vmatpush1.msra.mxu0 0.0
    %432 = vmatprep.subr.mxu0 0.0
    %433 = vmatpush1.msra.mxu0 0.0
    %434 = vmatprep.subr.mxu0 0.0
    %435 = vmatpush1.msra.mxu0 0.0
    %436 = vmatprep.subr.mxu0 0.0
    %437 = vmatpush1.msra.mxu0 0.0
    %438 = vmatprep.subr.mxu0 0.0
    %439 = vmatpush1.msra.mxu0 0.0
    %440 = vmatprep.subr.mxu0 0.0
    %441 = vmatpush1.msra.mxu0 0.0
    %442 = vmatprep.subr.mxu0 0.0
    %443 = vmatpush1.msra.mxu0 0.0
    %444 = vmatprep.mubr.f32.mxu0 0.0
    %445 = vmatmul.mubr.f32.gmra.mrb[0].mxu0 %v374
    %v446 = vpop.f32.mrb[0].mxu0
    %v447 = vadd.f32 0.0, %v446
    %v448 = vpop.f32.mrb[0].mxu0
    %449 = vdwg.mxu0
    %v450 = vmul.f32 %v368, %v370
    %v452 = vsel %vm372, %v450, 0
    %454 = vmatprep.subr.mxu0 0.0
    %455 = vmatpush1.msra.mxu0 %v378
    %456 = vmatprep.subr.mxu0 0.0
    %457 = vmatpush1.msra.mxu0 0.0
    %458 = vmatprep.subr.mxu0 0.0
    %459 = vmatpush1.msra.mxu0 0.0
    %460 = vmatprep.subr.mxu0 0.0
    %461 = vmatpush1.msra.mxu0 0.0
    %462 = vmatprep.subr.mxu0 0.0
    %463 = vmatpush1.msra.mxu0 0.0
    %464 = vmatprep.subr.mxu0 0.0
    %465 = vmatpush1.msra.mxu0 0.0
    %466 = vmatprep.subr.mxu0 0.0
    %467 = vmatpush1.msra.mxu0 0.0
    %468 = vmatprep.subr.mxu0 0.0
    %469 = vmatpush1.msra.mxu0 0.0
    %470 = vmatprep.subr.mxu0 0.0
    %471 = vmatpush1.msra.mxu0 0.0
    %472 = vmatprep.subr.mxu0 0.0
    %473 = vmatpush1.msra.mxu0 0.0
    %474 = vmatprep.subr.mxu0 0.0
    %475 = vmatpush1.msra.mxu0 0.0
    %476 = vmatprep.subr.mxu0 0.0
    %477 = vmatpush1.msra.mxu0 0.0
    %478 = vmatprep.subr.mxu0 0.0
    %479 = vmatpush1.msra.mxu0 0.0
    %480 = vmatprep.subr.mxu0 0.0
    %481 = vmatpush1.msra.mxu0 0.0
    %482 = vmatprep.subr.mxu0 0.0
    %483 = vmatpush1.msra.mxu0 0.0
    %484 = vmatprep.subr.mxu0 0.0
    %485 = vmatpush1.msra.mxu0 0.0
    %486 = vmatprep.subr.mxu0 0.0
    %487 = vmatpush1.msra.mxu0 0.0
    %488 = vmatprep.subr.mxu0 0.0
    %489 = vmatpush1.msra.mxu0 0.0
    %490 = vmatprep.subr.mxu0 0.0
    %491 = vmatpush1.msra.mxu0 0.0
    %492 = vmatprep.subr.mxu0 0.0
    %493 = vmatpush1.msra.mxu0 0.0
    %494 = vmatprep.subr.mxu0 0.0
    %495 = vmatpush1.msra.mxu0 0.0
    %496 = vmatprep.subr.mxu0 0.0
    %497 = vmatpush1.msra.mxu0 0.0
    %498 = vmatprep.subr.mxu0 0.0
    %499 = vmatpush1.msra.mxu0 0.0
    %500 = vmatprep.subr.mxu0 0.0
    %501 = vmatpush1.msra.mxu0 0.0
    %502 = vmatprep.subr.mxu0 0.0
    %503 = vmatpush1.msra.mxu0 0.0
    %504 = vmatprep.subr.mxu0 0.0
    %505 = vmatpush1.msra.mxu0 0.0
    %506 = vmatprep.subr.mxu0 0.0
    %507 = vmatpush1.msra.mxu0 0.0
    %508 = vmatprep.subr.mxu0 0.0
    %509 = vmatpush1.msra.mxu0 0.0
    %510 = vmatprep.subr.mxu0 0.0
    %511 = vmatpush1.msra.mxu0 0.0
    %512 = vmatprep.subr.mxu0 0.0
    %513 = vmatpush1.msra.mxu0 0.0
    %514 = vmatprep.subr.mxu0 0.0
    %515 = vmatpush1.msra.mxu0 0.0
    %516 = vmatprep.subr.mxu0 0.0
    %517 = vmatpush1.msra.mxu0 0.0
    %518 = vmatprep.mubr.f32.mxu0 0.0
    %519 = vmatmul.mubr.f32.gmra.mrb[0].mxu0 %v452
    %v520 = vpop.f32.mrb[0].mxu0
    %v521 = vadd.f32 0.0, %v520
    %v522 = vpop.f32.mrb[0].mxu0
    %523 = vdwg.mxu0
    %524 = vrot.lane.b32.xlu0 %v196, 64
    %v525 = vpop.permute.xlu0 %524
    %v527 = vmul.f32 %v447, %v525
    %528 = vrot.lane.b32.xlu0 %v201, 64
    %v529 = vpop.permute.xlu0 %528
    %v531 = vmul.f32 %v521, %v529
    %v532 = vadd.f32 %v527, %v531
    %534 = vrot.lane.b32.xlu0 %v532, 64
    %v535 = vpop.permute.xlu0 %534
    %v536 = vld [vmem:[#allocation2 + $0x20] sm:$0xff]
    %v537 = vld [vmem:[#allocation2 + $0x28] sm:$0xff]
    %v538 = vld [vmem:[#allocation2 + $0x30] sm:$0xff]
    %v539 = vld [vmem:[#allocation2 + $0x38] sm:$0xff]
    %540 = vrot.lane.b32.xlu0 %v535, 64
    %v541 = vpop.permute.xlu0 %540
    %v542 = vsel %vm79, %v525, 0
    %v544 = vsel %vm79, %v541, 0
    %546 = vmatprep.subr.mxu0 0.0
    %547 = vmatpush1.msra.mxu0 %v536
    %548 = vmatprep.subr.mxu0 0.0
    %549 = vmatpush1.msra.mxu0 %v537
    %550 = vmatprep.subr.mxu0 0.0
    %551 = vmatpush1.msra.mxu0 %v538
    %552 = vmatprep.subr.mxu0 0.0
    %553 = vmatpush1.msra.mxu0 %v539
    %554 = vmatprep.subr.mxu0 0.0
    %555 = vmatpush1.msra.mxu0 0.0
    %556 = vmatprep.subr.mxu0 0.0
    %557 = vmatpush1.msra.mxu0 0.0
    %558 = vmatprep.subr.mxu0 0.0
    %559 = vmatpush1.msra.mxu0 0.0
    %560 = vmatprep.subr.mxu0 0.0
    %561 = vmatpush1.msra.mxu0 0.0
    %562 = vmatprep.subr.mxu0 0.0
    %563 = vmatpush1.msra.mxu0 0.0
    %564 = vmatprep.subr.mxu0 0.0
    %565 = vmatpush1.msra.mxu0 0.0
    %566 = vmatprep.subr.mxu0 0.0
    %567 = vmatpush1.msra.mxu0 0.0
    %568 = vmatprep.subr.mxu0 0.0
    %569 = vmatpush1.msra.mxu0 0.0
    %570 = vmatprep.subr.mxu0 0.0
    %571 = vmatpush1.msra.mxu0 0.0
    %572 = vmatprep.subr.mxu0 0.0
    %573 = vmatpush1.msra.mxu0 0.0
    %574 = vmatprep.subr.mxu0 0.0
    %575 = vmatpush1.msra.mxu0 0.0
    %576 = vmatprep.subr.mxu0 0.0
    %577 = vmatpush1.msra.mxu0 0.0
    %578 = vmatprep.subr.mxu0 0.0
    %579 = vmatpush1.msra.mxu0 0.0
    %580 = vmatprep.subr.mxu0 0.0
    %581 = vmatpush1.msra.mxu0 0.0
    %582 = vmatprep.subr.mxu0 0.0
    %583 = vmatpush1.msra.mxu0 0.0
    %584 = vmatprep.subr.mxu0 0.0
    %585 = vmatpush1.msra.mxu0 0.0
    %586 = vmatprep.subr.mxu0 0.0
    %587 = vmatpush1.msra.mxu0 0.0
    %588 = vmatprep.subr.mxu0 0.0
    %589 = vmatpush1.msra.mxu0 0.0
    %590 = vmatprep.subr.mxu0 0.0
    %591 = vmatpush1.msra.mxu0 0.0
    %592 = vmatprep.subr.mxu0 0.0
    %593 = vmatpush1.msra.mxu0 0.0
    %594 = vmatprep.subr.mxu0 0.0
    %595 = vmatpush1.msra.mxu0 0.0
    %596 = vmatprep.subr.mxu0 0.0
    %597 = vmatpush1.msra.mxu0 0.0
    %598 = vmatprep.subr.mxu0 0.0
    %599 = vmatpush1.msra.mxu0 0.0
    %600 = vmatprep.subr.mxu0 0.0
    %601 = vmatpush1.msra.mxu0 0.0
    %602 = vmatprep.subr.mxu0 0.0
    %603 = vmatpush1.msra.mxu0 0.0
    %604 = vmatprep.subr.mxu0 0.0
    %605 = vmatpush1.msra.mxu0 0.0
    %606 = vmatprep.subr.mxu0 0.0
    %607 = vmatpush1.msra.mxu0 0.0
    %608 = vmatprep.subr.mxu0 0.0
    %609 = vmatpush1.msra.mxu0 0.0
    %610 = vmatprep.mubr.f32.mxu0 0.0
    %611 = vmatmul.mubr.f32.gmra.mrb[0].mxu0 %v542
    %v612 = vpop.f32.mrb[0].mxu0
    %v613 = vadd.f32 0.0, %v612
    %v614 = vpop.f32.mrb[0].mxu0
    %615 = vmatprep.mubr.f32.mxu0 0.0
    %616 = vmatmul.mubr.f32.gmra.mrb[0].mxu0 %v544
    %v617 = vpop.f32.mrb[0].mxu0
    %v618 = vadd.f32 0.0, %v617
    %v619 = vpop.f32.mrb[0].mxu0
    %620 = vdwg.mxu0
    %v621 = vadd.f32 %v71, %v613
    %v622 = vadd.f32 %v76, %v618
    %v623 = vld [vmem:[#allocation2 + $0xe2] sm:$0x1]
    %v624 = vld [vmem:[#allocation2 + $0xe3] sm:$0x1]
    %v625 = vsel %vm79, %v621, 0.0
    %626 = vadd.xlane.f32.xlu0 %v625
    %v627 = vpop.xlane.xlu0 %626
    %v628 = vsel %vm79, %v622, 0.0
    %629 = vadd.xlane.f32.xlu0 %v628
    %v630 = vpop.xlane.xlu0 %629
    %v631 = vmul.f32 %v627, %v86
    %v632 = vmul.f32 %v630, %v86
    %v633 = vsub.f32 %v621, %v631
    %v634 = vsub.f32 %v622, %v632
    %v635 = vmul.f32 %v633, %v633
    %v636 = vmul.f32 %v634, %v634
    %v637 = vsel %vm79, %v635, 0.0
    %638 = vadd.xlane.f32.xlu0 %v637
    %v639 = vpop.xlane.xlu0 %638
    %v640 = vsel %vm79, %v636, 0.0
    %641 = vadd.xlane.f32.xlu0 %v640
    %v642 = vpop.xlane.xlu0 %641
    %v643 = vmul.f32 %v639, %v86
    %v644 = vmul.f32 %v642, %v86
    %v645 = vadd.f32 %v643, 1e-05
    %v646 = vadd.f32 %v644, 1e-05
    %v647 = vrsqrt.pop %v645
    %v648 = vrsqrt.pop %v646
    %v649 = vmul.f32 %v633, %v647
    %v650 = vmul.f32 %v634, %v648
    %v651 = vlaneseq
    %v652 = vshrl.u32 %v651, 7
    %v653 = vsub.s32 0, %v652
    %v654 = vrot.slane %v623, %v653
    %v655 = vmul.f32 %v649, %v654
    %v656 = vmul.f32 %v650, %v654
    %v657 = vlaneseq
    %v658 = vshrl.u32 %v657, 7
    %v659 = vsub.s32 0, %v658
    %v660 = vrot.slane %v624, %v659
    %v661 = vadd.f32 %v655, %v660
    %v662 = vadd.f32 %v656, %v660
    %v663 = vld [vmem:[#allocation2 + $0x40] sm:$0xff]
    %v664 = vld [vmem:[#allocation2 + $0x48] sm:$0xff]
    %v665 = vld [vmem:[#allocation2 + $0x50] sm:$0xff]
    %v666 = vld [vmem:[#allocation2 + $0x58] sm:$0xff]
    %v667 = vld [vmem:[#allocation2 + $0xe4] sm:$0x1]
    %v668 = vlaneseq
    %v669 = vshrl.u32 %v668, 7
    %v670 = vsub.s32 0, %v669
    %v671 = vrot.slane %v667, %v670
    %v673 = vsel %vm79, %v661, 0
    %v676 = vsel %vm79, %v662, 0
    %678 = vmatprep.subr.mxu0 0.0
    %679 = vmatpush1.msra.mxu0 %v663
    %680 = vmatprep.subr.mxu0 0.0
    %681 = vmatpush1.msra.mxu0 %v664
    %682 = vmatprep.subr.mxu0 0.0
    %683 = vmatpush1.msra.mxu0 %v665
    %684 = vmatprep.subr.mxu0 0.0
    %685 = vmatpush1.msra.mxu0 %v666
    %686 = vmatprep.subr.mxu0 0.0
    %687 = vmatpush1.msra.mxu0 0.0
    %688 = vmatprep.subr.mxu0 0.0
    %689 = vmatpush1.msra.mxu0 0.0
    %690 = vmatprep.subr.mxu0 0.0
    %691 = vmatpush1.msra.mxu0 0.0
    %692 = vmatprep.subr.mxu0 0.0
    %693 = vmatpush1.msra.mxu0 0.0
    %694 = vmatprep.subr.mxu0 0.0
    %695 = vmatpush1.msra.mxu0 0.0
    %696 = vmatprep.subr.mxu0 0.0
    %697 = vmatpush1.msra.mxu0 0.0
    %698 = vmatprep.subr.mxu0 0.0
    %699 = vmatpush1.msra.mxu0 0.0
    %700 = vmatprep.subr.mxu0 0.0
    %701 = vmatpush1.msra.mxu0 0.0
    %702 = vmatprep.subr.mxu0 0.0
    %703 = vmatpush1.msra.mxu0 0.0
    %704 = vmatprep.subr.mxu0 0.0
    %705 = vmatpush1.msra.mxu0 0.0
    %706 = vmatprep.subr.mxu0 0.0
    %707 = vmatpush1.msra.mxu0 0.0
    %708 = vmatprep.subr.mxu0 0.0
    %709 = vmatpush1.msra.mxu0 0.0
    %710 = vmatprep.subr.mxu0 0.0
    %711 = vmatpush1.msra.mxu0 0.0
    %712 = vmatprep.subr.mxu0 0.0
    %713 = vmatpush1.msra.mxu0 0.0
    %714 = vmatprep.subr.mxu0 0.0
    %715 = vmatpush1.msra.mxu0 0.0
    %716 = vmatprep.subr.mxu0 0.0
    %717 = vmatpush1.msra.mxu0 0.0
    %718 = vmatprep.subr.mxu0 0.0
    %719 = vmatpush1.msra.mxu0 0.0
    %720 = vmatprep.subr.mxu0 0.0
    %721 = vmatpush1.msra.mxu0 0.0
    %722 = vmatprep.subr.mxu0 0.0
    %723 = vmatpush1.msra.mxu0 0.0
    %724 = vmatprep.subr.mxu0 0.0
    %725 = vmatpush1.msra.mxu0 0.0
    %726 = vmatprep.subr.mxu0 0.0
    %727 = vmatpush1.msra.mxu0 0.0
    %728 = vmatprep.subr.mxu0 0.0
    %729 = vmatpush1.msra.mxu0 0.0
    %730 = vmatprep.subr.mxu0 0.0
    %731 = vmatpush1.msra.mxu0 0.0
    %732 = vmatprep.subr.mxu0 0.0
    %733 = vmatpush1.msra.mxu0 0.0
    %734 = vmatprep.subr.mxu0 0.0
    %735 = vmatpush1.msra.mxu0 0.0
    %736 = vmatprep.subr.mxu0 0.0
    %737 = vmatpush1.msra.mxu0 0.0
    %738 = vmatprep.subr.mxu0 0.0
    %739 = vmatpush1.msra.mxu0 0.0
    %740 = vmatprep.subr.mxu0 0.0
    %741 = vmatpush1.msra.mxu0 0.0
    %742 = vmatprep.mubr.f32.mxu0 0.0
    %743 = vmatmul.mubr.f32.gmra.mrb[0].mxu0 %v673
    %v744 = vpop.f32.mrb[0].mxu0
    %v745 = vadd.f32 %v671, %v744
    %v746 = vpop.f32.mrb[0].mxu0
    %747 = vmatprep.mubr.f32.mxu0 0.0
    %748 = vmatmul.mubr.f32.gmra.mrb[0].mxu0 %v676
    %v749 = vpop.f32.mrb[0].mxu0
    %v750 = vadd.f32 %v671, %v749
    %v751 = vpop.f32.mrb[0].mxu0
    %752 = vdwg.mxu0
    %v753 = vmul.f32 %v745, %v745
    %v754 = vmul.f32 %v750, %v750
    %v755 = vmul.f32 %v745, %v753
    %v756 = vmul.f32 %v750, %v754
    %v757 = vmul.f32 %v755, 0.044715
    %v758 = vmul.f32 %v756, 0.044715
    %v759 = vadd.f32 %v745, %v757
    %v760 = vadd.f32 %v750, %v758
    %v761 = vmul.f32 %v759, 0.7978846
    %v762 = vmul.f32 %v760, 0.7978846
    %v763 = vtanh.pop %v761
    %v764 = vtanh.pop %v762
    %v765 = vadd.f32 %v763, 1.0
    %v766 = vadd.f32 %v764, 1.0
    %v767 = vmul.f32 %v765, 0.5
    %v768 = vmul.f32 %v766, 0.5
    %v769 = vmul.f32 %v745, %v767
    %v770 = vmul.f32 %v750, %v768
    %v771 = vld [vmem:[#allocation2 + $0x60] sm:$0xff]
    %v772 = vld [vmem:[#allocation2 + $0x68] sm:$0xff]
    %v773 = vld [vmem:[#allocation2 + $0x70] sm:$0xff]
    %v774 = vld [vmem:[#allocation2 + $0x78] sm:$0xff]
    %v775 = vld [vmem:[#allocation2 + $0x80] sm:$0xff]
    %v776 = vld [vmem:[#allocation2 + $0x88] sm:$0xff]
    %v777 = vld [vmem:[#allocation2 + $0x90] sm:$0xff]
    %v778 = vld [vmem:[#allocation2 + $0x98] sm:$0xff]
    %v779 = vld [vmem:[#allocation2 + $0xa0] sm:$0xff]
    %v780 = vld [vmem:[#allocation2 + $0xa8] sm:$0xff]
    %v781 = vld [vmem:[#allocation2 + $0xb0] sm:$0xff]
    %v782 = vld [vmem:[#allocation2 + $0xb8] sm:$0xff]
    %v783 = vld [vmem:[#allocation2 + $0xc0] sm:$0xff]
    %v784 = vld [vmem:[#allocation2 + $0xc8] sm:$0xff]
    %v785 = vld [vmem:[#allocation2 + $0xd0] sm:$0xff]
    %v786 = vld [vmem:[#allocation2 + $0xd8] sm:$0xff]
    %787 = vmatprep.subr.mxu0 0.0
    %788 = vmatpush1.msra.mxu0 %v771
    %789 = vmatprep.subr.mxu0 0.0
    %790 = vmatpush1.msra.mxu0 %v772
    %791 = vmatprep.subr.mxu0 0.0
    %792 = vmatpush1.msra.mxu0 %v773
    %793 = vmatprep.subr.mxu0 0.0
    %794 = vmatpush1.msra.mxu0 %v774
    %795 = vmatprep.subr.mxu0 0.0
    %796 = vmatpush1.msra.mxu0 %v775
    %797 = vmatprep.subr.mxu0 0.0
    %798 = vmatpush1.msra.mxu0 %v776
    %799 = vmatprep.subr.mxu0 0.0
    %800 = vmatpush1.msra.mxu0 %v777
    %801 = vmatprep.subr.mxu0 0.0
    %802 = vmatpush1.msra.mxu0 %v778
    %803 = vmatprep.subr.mxu0 0.0
    %804 = vmatpush1.msra.mxu0 %v779
    %805 = vmatprep.subr.mxu0 0.0
    %806 = vmatpush1.msra.mxu0 %v780
    %807 = vmatprep.subr.mxu0 0.0
    %808 = vmatpush1.msra.mxu0 %v781
    %809 = vmatprep.subr.mxu0 0.0
    %810 = vmatpush1.msra.mxu0 %v782
    %811 = vmatprep.subr.mxu0 0.0
    %812 = vmatpush1.msra.mxu0 %v783
    %813 = vmatprep.subr.mxu0 0.0
    %814 = vmatpush1.msra.mxu0 %v784
    %815 = vmatprep.subr.mxu0 0.0
    %816 = vmatpush1.msra.mxu0 %v785
    %817 = vmatprep.subr.mxu0 0.0
    %818 = vmatpush1.msra.mxu0 %v786
    %819 = vmatprep.subr.mxu0 0.0
    %820 = vmatpush1.msra.mxu0 0.0
    %821 = vmatprep.subr.mxu0 0.0
    %822 = vmatpush1.msra.mxu0 0.0
    %823 = vmatprep.subr.mxu0 0.0
    %824 = vmatpush1.msra.mxu0 0.0
    %825 = vmatprep.subr.mxu0 0.0
    %826 = vmatpush1.msra.mxu0 0.0
    %827 = vmatprep.subr.mxu0 0.0
    %828 = vmatpush1.msra.mxu0 0.0
    %829 = vmatprep.subr.mxu0 0.0
    %830 = vmatpush1.msra.mxu0 0.0
    %831 = vmatprep.subr.mxu0 0.0
    %832 = vmatpush1.msra.mxu0 0.0
    %833 = vmatprep.subr.mxu0 0.0
    %834 = vmatpush1.msra.mxu0 0.0
    %835 = vmatprep.subr.mxu0 0.0
    %836 = vmatpush1.msra.mxu0 0.0
    %837 = vmatprep.subr.mxu0 0.0
    %838 = vmatpush1.msra.mxu0 0.0
    %839 = vmatprep.subr.mxu0 0.0
    %840 = vmatpush1.msra.mxu0 0.0
    %841 = vmatprep.subr.mxu0 0.0
    %842 = vmatpush1.msra.mxu0 0.0
    %843 = vmatprep.subr.mxu0 0.0
    %844 = vmatpush1.msra.mxu0 0.0
    %845 = vmatprep.subr.mxu0 0.0
    %846 = vmatpush1.msra.mxu0 0.0
    %847 = vmatprep.subr.mxu0 0.0
    %848 = vmatpush1.msra.mxu0 0.0
    %849 = vmatprep.subr.mxu0 0.0
    %850 = vmatpush1.msra.mxu0 0.0
    %851 = vmatprep.mubr.f32.mxu0 0.0
    %852 = vmatmul.mubr.f32.gmra.mrb[0].mxu0 %v769
    %v853 = vpop.f32.mrb[0].mxu0
    %v854 = vadd.f32 0.0, %v853
    %v855 = vpop.f32.mrb[0].mxu0
    %856 = vmatprep.mubr.f32.mxu0 0.0
    %857 = vmatmul.mubr.f32.gmra.mrb[0].mxu0 %v770
    %v858 = vpop.f32.mrb[0].mxu0
    %v859 = vadd.f32 0.0, %v858
    %v860 = vpop.f32.mrb[0].mxu0
    %861 = vdwg.mxu0
    %v862 = vadd.f32 %v621, %v854
    %v863 = vadd.f32 %v622, %v859
    %v864 = vld [vmem:[#allocation2 + $0xe5] sm:$0x1]
    %v865 = vlaneseq
    %v866 = vshrl.u32 %v865, 7
    %v867 = vsub.s32 0, %v866
    %v868 = vrot.slane %v864, %v867
    %v869 = vadd.f32 %v862, %v868
    %v870 = vadd.f32 %v863, %v868
    %v871 = vld [vmem:[#allocation2 + $0x1c8] sm:$0x1]
    %v872 = vld [vmem:[#allocation2 + $0x1c9] sm:$0x1]
    %v873 = vsel %vm79, %v869, 0.0
    %874 = vadd.xlane.f32.xlu0 %v873
    %v875 = vpop.xlane.xlu0 %874
    %v876 = vsel %vm79, %v870, 0.0
    %877 = vadd.xlane.f32.xlu0 %v876
    %v878 = vpop.xlane.xlu0 %877
    %v879 = vmul.f32 %v875, %v86
    %v880 = vmul.f32 %v878, %v86
    %v881 = vsub.f32 %v869, %v879
    %v882 = vsub.f32 %v870, %v880
    %v883 = vmul.f32 %v881, %v881
    %v884 = vmul.f32 %v882, %v882
    %v885 = vsel %vm79, %v883, 0.0
    %886 = vadd.xlane.f32.xlu0 %v885
    %v887 = vpop.xlane.xlu0 %886
    %v888 = vsel %vm79, %v884, 0.0
    %889 = vadd.xlane.f32.xlu0 %v888
    %v890 = vpop.xlane.xlu0 %889
    %v891 = vmul.f32 %v887, %v86
    %v892 = vmul.f32 %v890, %v86
    %v893 = vadd.f32 %v891, 1e-05
    %v894 = vadd.f32 %v892, 1e-05
    %v895 = vrsqrt.pop %v893
    %v896 = vrsqrt.pop %v894
    %v897 = vmul.f32 %v881, %v895
    %v898 = vmul.f32 %v882, %v896
    %v899 = vlaneseq
    %v900 = vshrl.u32 %v899, 7
    %v901 = vsub.s32 0, %v900
    %v902 = vrot.slane %v871, %v901
    %v903 = vmul.f32 %v897, %v902
    %v904 = vmul.f32 %v898, %v902
    %v905 = vlaneseq
    %v906 = vshrl.u32 %v905, 7
    %v907 = vsub.s32 0, %v906
    %v908 = vrot.slane %v872, %v907
    %v909 = vadd.f32 %v903, %v908
    %v910 = vadd.f32 %v904, %v908
    %v911 = vld [vmem:[#allocation2 + $0xe8] sm:$0xff]
    %v912 = vld [vmem:[#allocation2 + $0xf0] sm:$0xff]
    %v913 = vld [vmem:[#allocation2 + $0xf8] sm:$0xff]
    %v914 = vld [vmem:[#allocation2 + $0x100] sm:$0xff]
    %v916 = vsel %vm79, %v909, 0
    %v919 = vsel %vm79, %v910, 0
    %921 = vmatprep.subr.mxu0 0.0
    %922 = vmatpush1.msra.mxu0 %v911
    %923 = vmatprep.subr.mxu0 0.0
    %924 = vmatpush1.msra.mxu0 %v912
    %925 = vmatprep.subr.mxu0 0.0
    %926 = vmatpush1.msra.mxu0 %v913
    %927 = vmatprep.subr.mxu0 0.0
    %928 = vmatpush1.msra.mxu0 %v914
    %929 = vmatprep.subr.mxu0 0.0
    %930 = vmatpush1.msra.mxu0 0.0
    %931 = vmatprep.subr.mxu0 0.0
    %932 = vmatpush1.msra.mxu0 0.0
    %933 = vmatprep.subr.mxu0 0.0
    %934 = vmatpush1.msra.mxu0 0.0
    %935 = vmatprep.subr.mxu0 0.0
    %936 = vmatpush1.msra.mxu0 0.0
    %937 = vmatprep.subr.mxu0 0.0
    %938 = vmatpush1.msra.mxu0 0.0
    %939 = vmatprep.subr.mxu0 0.0
    %940 = vmatpush1.msra.mxu0 0.0
    %941 = vmatprep.subr.mxu0 0.0
    %942 = vmatpush1.msra.mxu0 0.0
    %943 = vmatprep.subr.mxu0 0.0
    %944 = vmatpush1.msra.mxu0 0.0
    %945 = vmatprep.subr.mxu0 0.0
    %946 = vmatpush1.msra.mxu0 0.0
    %947 = vmatprep.subr.mxu0 0.0
    %948 = vmatpush1.msra.mxu0 0.0
    %949 = vmatprep.subr.mxu0 0.0
    %950 = vmatpush1.msra.mxu0 0.0
    %951 = vmatprep.subr.mxu0 0.0
    %952 = vmatpush1.msra.mxu0 0.0
    %953 = vmatprep.subr.mxu0 0.0
    %954 = vmatpush1.msra.mxu0 0.0
    %955 = vmatprep.subr.mxu0 0.0
    %956 = vmatpush1.msra.mxu0 0.0
    %957 = vmatprep.subr.mxu0 0.0
    %958 = vmatpush1.msra.mxu0 0.0
    %959 = vmatprep.subr.mxu0 0.0
    %960 = vmatpush1.msra.mxu0 0.0
    %961 = vmatprep.subr.mxu0 0.0
    %962 = vmatpush1.msra.mxu0 0.0
    %963 = vmatprep.subr.mxu0 0.0
    %964 = vmatpush1.msra.mxu0 0.0
    %965 = vmatprep.subr.mxu0 0.0
    %966 = vmatpush1.msra.mxu0 0.0
    %967 = vmatprep.subr.mxu0 0.0
    %968 = vmatpush1.msra.mxu0 0.0
    %969 = vmatprep.subr.mxu0 0.0
    %970 = vmatpush1.msra.mxu0 0.0
    %971 = vmatprep.subr.mxu0 0.0
    %972 = vmatpush1.msra.mxu0 0.0
    %973 = vmatprep.subr.mxu0 0.0
    %974 = vmatpush1.msra.mxu0 0.0
    %975 = vmatprep.subr.mxu0 0.0
    %976 = vmatpush1.msra.mxu0 0.0
    %977 = vmatprep.subr.mxu0 0.0
    %978 = vmatpush1.msra.mxu0 0.0
    %979 = vmatprep.subr.mxu0 0.0
    %980 = vmatpush1.msra.mxu0 0.0
    %981 = vmatprep.subr.mxu0 0.0
    %982 = vmatpush1.msra.mxu0 0.0
    %983 = vmatprep.subr.mxu0 0.0
    %984 = vmatpush1.msra.mxu0 0.0
    %985 = vmatprep.mubr.f32.mxu0 0.0
    %986 = vmatmul.mubr.f32.gmra.mrb[0].mxu0 %v916
    %v987 = vpop.f32.mrb[0].mxu0
    %v988 = vadd.f32 0.0, %v987
    %v989 = vpop.f32.mrb[0].mxu0
    %990 = vmatprep.mubr.f32.mxu0 0.0
    %991 = vmatmul.mubr.f32.gmra.mrb[0].mxu0 %v919
    %v992 = vpop.f32.mrb[0].mxu0
    %v993 = vadd.f32 0.0, %v992
    %v994 = vpop.f32.mrb[0].mxu0
    %995 = vdwg.mxu0
    %997 = vrot.lane.b32.xlu0 %v988, 96
    %v998 = vpop.permute.xlu0 %997
    %v1000 = vmul.f32 %v993, %v998
    %v1002 = vsel %vm79, %v1000, 0
    %1004 = vmatprep.subr.mxu0 0.0
    %1005 = vmatpush1.msra.mxu0 %v36
    %1006 = vmatprep.subr.mxu0 0.0
    %1007 = vmatpush1.msra.mxu0 %v37
    %1008 = vmatprep.subr.mxu0 0.0
    %1009 = vmatpush1.msra.mxu0 %v38
    %1010 = vmatprep.subr.mxu0 0.0
    %1011 = vmatpush1.msra.mxu0 %v39
    %1012 = vmatprep.subr.mxu0 0.0
    %1013 = vmatpush1.msra.mxu0 0.0
    %1014 = vmatprep.subr.mxu0 0.0
    %1015 = vmatpush1.msra.mxu0 0.0
    %1016 = vmatprep.subr.mxu0 0.0
    %1017 = vmatpush1.msra.mxu0 0.0
    %1018 = vmatprep.subr.mxu0 0.0
    %1019 = vmatpush1.msra.mxu0 0.0
    %1020 = vmatprep.subr.mxu0 0.0
    %1021 = vmatpush1.msra.mxu0 0.0
    %1022 = vmatprep.subr.mxu0 0.0
    %1023 = vmatpush1.msra.mxu0 0.0
    %1024 = vmatprep.subr.mxu0 0.0
    %1025 = vmatpush1.msra.mxu0 0.0
    %1026 = vmatprep.subr.mxu0 0.0
    %1027 = vmatpush1.msra.mxu0 0.0
    %1028 = vmatprep.subr.mxu0 0.0
    %1029 = vmatpush1.msra.mxu0 0.0
    %1030 = vmatprep.subr.mxu0 0.0
    %1031 = vmatpush1.msra.mxu0 0.0
    %1032 = vmatprep.subr.mxu0 0.0
    %1033 = vmatpush1.msra.mxu0 0.0
    %1034 = vmatprep.subr.mxu0 0.0
    %1035 = vmatpush1.msra.mxu0 0.0
    %1036 = vmatprep.subr.mxu0 0.0
    %1037 = vmatpush1.msra.mxu0 0.0
    %1038 = vmatprep.subr.mxu0 0.0
    %1039 = vmatpush1.msra.mxu0 0.0
    %1040 = vmatprep.subr.mxu0 0.0
    %1041 = vmatpush1.msra.mxu0 0.0
    %1042 = vmatprep.subr.mxu0 0.0
    %1043 = vmatpush1.msra.mxu0 0.0
    %1044 = vmatprep.subr.mxu0 0.0
    %1045 = vmatpush1.msra.mxu0 0.0
    %1046 = vmatprep.subr.mxu0 0.0
    %1047 = vmatpush1.msra.mxu0 0.0
    %1048 = vmatprep.subr.mxu0 0.0
    %1049 = vmatpush1.msra.mxu0 0.0
    %1050 = vmatprep.subr.mxu0 0.0
    %1051 = vmatpush1.msra.mxu0 0.0
    %1052 = vmatprep.subr.mxu0 0.0
    %1053 = vmatpush1.msra.mxu0 0.0
    %1054 = vmatprep.subr.mxu0 0.0
    %1055 = vmatpush1.msra.mxu0 0.0
    %1056 = vmatprep.subr.mxu0 0.0
    %1057 = vmatpush1.msra.mxu0 0.0
    %1058 = vmatprep.subr.mxu0 0.0
    %1059 = vmatpush1.msra.mxu0 0.0
    %1060 = vmatprep.subr.mxu0 0.0
    %1061 = vmatpush1.msra.mxu0 0.0
    %1062 = vmatprep.subr.mxu0 0.0
    %1063 = vmatpush1.msra.mxu0 0.0
    %1064 = vmatprep.subr.mxu0 0.0
    %1065 = vmatpush1.msra.mxu0 0.0
    %1066 = vmatprep.subr.mxu0 0.0
    %1067 = vmatpush1.msra.mxu0 0.0
    %1068 = vmatprep.mubr.f32.mxu0 0.0
    %1069 = vmatmul.mubr.f32.gmra.mrb[0].mxu0 %v1002
    %v1070 = vpop.f32.mrb[0].mxu0
    %v1071 = vadd.f32 0.0, %v1070
    %v1072 = vpop.f32.mrb[0].mxu0
    %1073 = vdwg.mxu0
    %v1074 = vmul.f32 %v1071, 0.35355338
    %1076 = vrot.lane.b32.xlu0 %v993, 96
    %v1077 = vpop.permute.xlu0 %1076
    %v1079 = vmul.f32 %v993, %v1077
    %v1081 = vsel %vm79, %v1079, 0
    %1083 = vmatprep.subr.mxu0 0.0
    %1084 = vmatpush1.msra.mxu0 %v36
    %1085 = vmatprep.subr.mxu0 0.0
    %1086 = vmatpush1.msra.mxu0 %v37
    %1087 = vmatprep.subr.mxu0 0.0
    %1088 = vmatpush1.msra.mxu0 %v38
    %1089 = vmatprep.subr.mxu0 0.0
    %1090 = vmatpush1.msra.mxu0 %v39
    %1091 = vmatprep.subr.mxu0 0.0
    %1092 = vmatpush1.msra.mxu0 0.0
    %1093 = vmatprep.subr.mxu0 0.0
    %1094 = vmatpush1.msra.mxu0 0.0
    %1095 = vmatprep.subr.mxu0 0.0
    %1096 = vmatpush1.msra.mxu0 0.0
    %1097 = vmatprep.subr.mxu0 0.0
    %1098 = vmatpush1.msra.mxu0 0.0
    %1099 = vmatprep.subr.mxu0 0.0
    %1100 = vmatpush1.msra.mxu0 0.0
    %1101 = vmatprep.subr.mxu0 0.0
    %1102 = vmatpush1.msra.mxu0 0.0
    %1103 = vmatprep.subr.mxu0 0.0
    %1104 = vmatpush1.msra.mxu0 0.0
    %1105 = vmatprep.subr.mxu0 0.0
    %1106 = vmatpush1.msra.mxu0 0.0
    %1107 = vmatprep.subr.mxu0 0.0
    %1108 = vmatpush1.msra.mxu0 0.0
    %1109 = vmatprep.subr.mxu0 0.0
    %1110 = vmatpush1.msra.mxu0 0.0
    %1111 = vmatprep.subr.mxu0 0.0
    %1112 = vmatpush1.msra.mxu0 0.0
    %1113 = vmatprep.subr.mxu0 0.0
    %1114 = vmatpush1.msra.mxu0 0.0
    %1115 = vmatprep.subr.mxu0 0.0
    %1116 = vmatpush1.msra.mxu0 0.0
    %1117 = vmatprep.subr.mxu0 0.0
    %1118 = vmatpush1.msra.mxu0 0.0
    %1119 = vmatprep.subr.mxu0 0.0
    %1120 = vmatpush1.msra.mxu0 0.0
    %1121 = vmatprep.subr.mxu0 0.0
    %1122 = vmatpush1.msra.mxu0 0.0
    %1123 = vmatprep.subr.mxu0 0.0
    %1124 = vmatpush1.msra.mxu0 0.0
    %1125 = vmatprep.subr.mxu0 0.0
    %1126 = vmatpush1.msra.mxu0 0.0
    %1127 = vmatprep.subr.mxu0 0.0
    %1128 = vmatpush1.msra.mxu0 0.0
    %1129 = vmatprep.subr.mxu0 0.0
    %1130 = vmatpush1.msra.mxu0 0.0
    %1131 = vmatprep.subr.mxu0 0.0
    %1132 = vmatpush1.msra.mxu0 0.0
    %1133 = vmatprep.subr.mxu0 0.0
    %1134 = vmatpush1.msra.mxu0 0.0
    %1135 = vmatprep.subr.mxu0 0.0
    %1136 = vmatpush1.msra.mxu0 0.0
    %1137 = vmatprep.subr.mxu0 0.0
    %1138 = vmatpush1.msra.mxu0 0.0
    %1139 = vmatprep.subr.mxu0 0.0
    %1140 = vmatpush1.msra.mxu0 0.0
    %1141 = vmatprep.subr.mxu0 0.0
    %1142 = vmatpush1.msra.mxu0 0.0
    %1143 = vmatprep.subr.mxu0 0.0
    %1144 = vmatpush1.msra.mxu0 0.0
    %1145 = vmatprep.subr.mxu0 0.0
    %1146 = vmatpush1.msra.mxu0 0.0
    %1147 = vmatprep.mubr.f32.mxu0 0.0
    %1148 = vmatmul.mubr.f32.gmra.mrb[0].mxu0 %v1081
    %v1149 = vpop.f32.mrb[0].mxu0
    %v1150 = vadd.f32 0.0, %v1149
    %v1151 = vpop.f32.mrb[0].mxu0
    %1152 = vdwg.mxu0
    %v1153 = vmul.f32 %v1150, 0.35355338
    %v1154 = vmax.f32 %v1074, %v1153
    %v1155 = vsub.f32 %v1074, %v1154
    %v1156 = vmul.f32 %v1155, 1.442695
    %v1157 = vpow.pop %v1156
    %v1158 = vsub.f32 %v1153, %v1154
    %v1159 = vmul.f32 %v1158, 1.442695
    %v1160 = vpow.pop %v1159
    %v1161 = vadd.f32 %v1157, %v1160
    %v1162 = vrcp.pop %v1161
    %v1163 = vmul.f32 %v1157, %v1162
    %v1165 = vsel %vm372, %v1163, 0
    %1167 = vmatprep.subr.mxu0 0.0
    %1168 = vmatpush1.msra.mxu0 %v378
    %1169 = vmatprep.subr.mxu0 0.0
    %1170 = vmatpush1.msra.mxu0 0.0
    %1171 = vmatprep.subr.mxu0 0.0
    %1172 = vmatpush1.msra.mxu0 0.0
    %1173 = vmatprep.subr.mxu0 0.0
    %1174 = vmatpush1.msra.mxu0 0.0
    %1175 = vmatprep.subr.mxu0 0.0
    %1176 = vmatpush1.msra.mxu0 0.0
    %1177 = vmatprep.subr.mxu0 0.0
    %1178 = vmatpush1.msra.mxu0 0.0
    %1179 = vmatprep.subr.mxu0 0.0
    %1180 = vmatpush1.msra.mxu0 0.0
    %1181 = vmatprep.subr.mxu0 0.0
    %1182 = vmatpush1.msra.mxu0 0.0
    %1183 = vmatprep.subr.mxu0 0.0
    %1184 = vmatpush1.msra.mxu0 0.0
    %1185 = vmatprep.subr.mxu0 0.0
    %1186 = vmatpush1.msra.mxu0 0.0
    %1187 = vmatprep.subr.mxu0 0.0
    %1188 = vmatpush1.msra.mxu0 0.0
    %1189 = vmatprep.subr.mxu0 0.0
    %1190 = vmatpush1.msra.mxu0 0.0
    %1191 = vmatprep.subr.mxu0 0.0
    %1192 = vmatpush1.msra.mxu0 0.0
    %1193 = vmatprep.subr.mxu0 0.0
    %1194 = vmatpush1.msra.mxu0 0.0
    %1195 = vmatprep.subr.mxu0 0.0
    %1196 = vmatpush1.msra.mxu0 0.0
    %1197 = vmatprep.subr.mxu0 0.0
    %1198 = vmatpush1.msra.mxu0 0.0
    %1199 = vmatprep.subr.mxu0 0.0
    %1200 = vmatpush1.msra.mxu0 0.0
    %1201 = vmatprep.subr.mxu0 0.0
    %1202 = vmatpush1.msra.mxu0 0.0
    %1203 = vmatprep.subr.mxu0 0.0
    %1204 = vmatpush1.msra.mxu0 0.0
    %1205 = vmatprep.subr.mxu0 0.0
    %1206 = vmatpush1.msra.mxu0 0.0
    %1207 = vmatprep.subr.mxu0 0.0
    %1208 = vmatpush1.msra.mxu0 0.0
    %1209 = vmatprep.subr.mxu0 0.0
    %1210 = vmatpush1.msra.mxu0 0.0
    %1211 = vmatprep.subr.mxu0 0.0
    %1212 = vmatpush1.msra.mxu0 0.0
    %1213 = vmatprep.subr.mxu0 0.0
    %1214 = vmatpush1.msra.mxu0 0.0
    %1215 = vmatprep.subr.mxu0 0.0
    %1216 = vmatpush1.msra.mxu0 0.0
    %1217 = vmatprep.subr.mxu0 0.0
    %1218 = vmatpush1.msra.mxu0 0.0
    %1219 = vmatprep.subr.mxu0 0.0
    %1220 = vmatpush1.msra.mxu0 0.0
    %1221 = vmatprep.subr.mxu0 0.0
    %1222 = vmatpush1.msra.mxu0 0.0
    %1223 = vmatprep.subr.mxu0 0.0
    %1224 = vmatpush1.msra.mxu0 0.0
    %1225 = vmatprep.subr.mxu0 0.0
    %1226 = vmatpush1.msra.mxu0 0.0
    %1227 = vmatprep.subr.mxu0 0.0
    %1228 = vmatpush1.msra.mxu0 0.0
    %1229 = vmatprep.subr.mxu0 0.0
    %1230 = vmatpush1.msra.mxu0 0.0
    %1231 = vmatprep.mubr.f32.mxu0 0.0
    %1232 = vmatmul.mubr.f32.gmra.mrb[0].mxu0 %v1165
    %v1233 = vpop.f32.mrb[0].mxu0
    %v1234 = vadd.f32 0.0, %v1233
    %v1235 = vpop.f32.mrb[0].mxu0
    %1236 = vdwg.mxu0
    %v1237 = vmul.f32 %v1160, %v1162
    %v1239 = vsel %vm372, %v1237, 0
    %1241 = vmatprep.subr.mxu0 0.0
    %1242 = vmatpush1.msra.mxu0 %v378
    %1243 = vmatprep.subr.mxu0 0.0
    %1244 = vmatpush1.msra.mxu0 0.0
    %1245 = vmatprep.subr.mxu0 0.0
    %1246 = vmatpush1.msra.mxu0 0.0
    %1247 = vmatprep.subr.mxu0 0.0
    %1248 = vmatpush1.msra.mxu0 0.0
    %1249 = vmatprep.subr.mxu0 0.0
    %1250 = vmatpush1.msra.mxu0 0.0
    %1251 = vmatprep.subr.mxu0 0.0
    %1252 = vmatpush1.msra.mxu0 0.0
    %1253 = vmatprep.subr.mxu0 0.0
    %1254 = vmatpush1.msra.mxu0 0.0
    %1255 = vmatprep.subr.mxu0 0.0
    %1256 = vmatpush1.msra.mxu0 0.0
    %1257 = vmatprep.subr.mxu0 0.0
    %1258 = vmatpush1.msra.mxu0 0.0
    %1259 = vmatprep.subr.mxu0 0.0
    %1260 = vmatpush1.msra.mxu0 0.0
    %1261 = vmatprep.subr.mxu0 0.0
    %1262 = vmatpush1.msra.mxu0 0.0
    %1263 = vmatprep.subr.mxu0 0.0
    %1264 = vmatpush1.msra.mxu0 0.0
    %1265 = vmatprep.subr.mxu0 0.0
    %1266 = vmatpush1.msra.mxu0 0.0
    %1267 = vmatprep.subr.mxu0 0.0
    %1268 = vmatpush1.msra.mxu0 0.0
    %1269 = vmatprep.subr.mxu0 0.0
    %1270 = vmatpush1.msra.mxu0 0.0
    %1271 = vmatprep.subr.mxu0 0.0
    %1272 = vmatpush1.msra.mxu0 0.0
    %1273 = vmatprep.subr.mxu0 0.0
    %1274 = vmatpush1.msra.mxu0 0.0
    %1275 = vmatprep.subr.mxu0 0.0
    %1276 = vmatpush1.msra.mxu0 0.0
    %1277 = vmatprep.subr.mxu0 0.0
    %1278 = vmatpush1.msra.mxu0 0.0
    %1279 = vmatprep.subr.mxu0 0.0
    %1280 = vmatpush1.msra.mxu0 0.0
    %1281 = vmatprep.subr.mxu0 0.0
    %1282 = vmatpush1.msra.mxu0 0.0
    %1283 = vmatprep.subr.mxu0 0.0
    %1284 = vmatpush1.msra.mxu0 0.0
    %1285 = vmatprep.subr.mxu0 0.0
    %1286 = vmatpush1.msra.mxu0 0.0
    %1287 = vmatprep.subr.mxu0 0.0
    %1288 = vmatpush1.msra.mxu0 0.0
    %1289 = vmatprep.subr.mxu0 0.0
    %1290 = vmatpush1.msra.mxu0 0.0
    %1291 = vmatprep.subr.mxu0 0.0
    %1292 = vmatpush1.msra.mxu0 0.0
    %1293 = vmatprep.subr.mxu0 0.0
    %1294 = vmatpush1.msra.mxu0 0.0
    %1295 = vmatprep.subr.mxu0 0.0
    %1296 = vmatpush1.msra.mxu0 0.0
    %1297 = vmatprep.subr.mxu0 0.0
    %1298 = vmatpush1.msra.mxu0 0.0
    %1299 = vmatprep.subr.mxu0 0.0
    %1300 = vmatpush1.msra.mxu0 0.0
    %1301 = vmatprep.subr.mxu0 0.0
    %1302 = vmatpush1.msra.mxu0 0.0
    %1303 = vmatprep.subr.mxu0 0.0
    %1304 = vmatpush1.msra.mxu0 0.0
    %1305 = vmatprep.mubr.f32.mxu0 0.0
    %1306 = vmatmul.mubr.f32.gmra.mrb[0].mxu0 %v1239
    %v1307 = vpop.f32.mrb[0].mxu0
    %v1308 = vadd.f32 0.0, %v1307
    %v1309 = vpop.f32.mrb[0].mxu0
    %1310 = vdwg.mxu0
    %1311 = vrot.lane.b32.xlu0 %v988, 64
    %v1312 = vpop.permute.xlu0 %1311
    %v1314 = vmul.f32 %v1234, %v1312
    %1315 = vrot.lane.b32.xlu0 %v993, 64
    %v1316 = vpop.permute.xlu0 %1315
    %v1318 = vmul.f32 %v1308, %v1316
    %v1319 = vadd.f32 %v1314, %v1318
    %1321 = vrot.lane.b32.xlu0 %v1319, 64
    %v1322 = vpop.permute.xlu0 %1321
    %v1323 = vld [vmem:[#allocation2 + $0x108] sm:$0xff]
    %v1324 = vld [vmem:[#allocation2 + $0x110] sm:$0xff]
    %v1325 = vld [vmem:[#allocation2 + $0x118] sm:$0xff]
    %v1326 = vld [vmem:[#allocation2 + $0x120] sm:$0xff]
    %1327 = vrot.lane.b32.xlu0 %v1322, 64
    %v1328 = vpop.permute.xlu0 %1327
    %v1329 = vsel %vm79, %v1312, 0
    %v1331 = vsel %vm79, %v1328, 0
    %1333 = vmatprep.subr.mxu0 0.0
    %1334 = vmatpush1.msra.mxu0 %v1323
    %1335 = vmatprep.subr.mxu0 0.0
    %1336 = vmatpush1.msra.mxu0 %v1324
    %1337 = vmatprep.subr.mxu0 0.0
    %1338 = vmatpush1.msra.mxu0 %v1325
    %1339 = vmatprep.subr.mxu0 0.0
    %1340 = vmatpush1.msra.mxu0 %v1326
    %1341 = vmatprep.subr.mxu0 0.0
    %1342 = vmatpush1.msra.mxu0 0.0
    %1343 = vmatprep.subr.mxu0 0.0
    %1344 = vmatpush1.msra.mxu0 0.0
    %1345 = vmatprep.subr.mxu0 0.0
    %1346 = vmatpush1.msra.mxu0 0.0
    %1347 = vmatprep.subr.mxu0 0.0
    %1348 = vmatpush1.msra.mxu0 0.0
    %1349 = vmatprep.subr.mxu0 0.0
    %1350 = vmatpush1.msra.mxu0 0.0
    %1351 = vmatprep.subr.mxu0 0.0
    %1352 = vmatpush1.msra.mxu0 0.0
    %1353 = vmatprep.subr.mxu0 0.0
    %1354 = vmatpush1.msra.mxu0 0.0
    %1355 = vmatprep.subr.mxu0 0.0
    %1356 = vmatpush1.msra.mxu0 0.0
    %1357 = vmatprep.subr.mxu0 0.0
    %1358 = vmatpush1.msra.mxu0 0.0
    %1359 = vmatprep.subr.mxu0 0.0
    %1360 = vmatpush1.msra.mxu0 0.0
    %1361 = vmatprep.subr.mxu0 0.0
    %1362 = vmatpush1.msra.mxu0 0.0
    %1363 = vmatprep.subr.mxu0 0.0
    %1364 = vmatpush1.msra.mxu0 0.0
    %1365 = vmatprep.subr.mxu0 0.0
    %1366 = vmatpush1.msra.mxu0 0.0
    %1367 = vmatprep.subr.mxu0 0.0
    %1368 = vmatpush1.msra.mxu0 0.0
    %1369 = vmatprep.subr.mxu0 0.0
    %1370 = vmatpush1.msra.mxu0 0.0
    %1371 = vmatprep.subr.mxu0 0.0
    %1372 = vmatpush1.msra.mxu0 0.0
    %1373 = vmatprep.subr.mxu0 0.0
    %1374 = vmatpush1.msra.mxu0 0.0
    %1375 = vmatprep.subr.mxu0 0.0
    %1376 = vmatpush1.msra.mxu0 0.0
    %1377 = vmatprep.subr.mxu0 0.0
    %1378 = vmatpush1.msra.mxu0 0.0
    %1379 = vmatprep.subr.mxu0 0.0
    %1380 = vmatpush1.msra.mxu0 0.0
    %1381 = vmatprep.subr.mxu0 0.0
    %1382 = vmatpush1.msra.mxu0 0.0
    %1383 = vmatprep.subr.mxu0 0.0
    %1384 = vmatpush1.msra.mxu0 0.0
    %1385 = vmatprep.subr.mxu0 0.0
    %1386 = vmatpush1.msra.mxu0 0.0
    %1387 = vmatprep.subr.mxu0 0.0
    %1388 = vmatpush1.msra.mxu0 0.0
    %1389 = vmatprep.subr.mxu0 0.0
    %1390 = vmatpush1.msra.mxu0 0.0
    %1391 = vmatprep.subr.mxu0 0.0
    %1392 = vmatpush1.msra.mxu0 0.0
    %1393 = vmatprep.subr.mxu0 0.0
    %1394 = vmatpush1.msra.mxu0 0.0
    %1395 = vmatprep.subr.mxu0 0.0
    %1396 = vmatpush1.msra.mxu0 0.0
    %1397 = vmatprep.mubr.f32.mxu0 0.0
    %1398 = vmatmul.mubr.f32.gmra.mrb[0].mxu0 %v1329
    %v1399 = vpop.f32.mrb[0].mxu0
    %v1400 = vadd.f32 0.0, %v1399
    %v1401 = vpop.f32.mrb[0].mxu0
    %1402 = vmatprep.mubr.f32.mxu0 0.0
    %1403 = vmatmul.mubr.f32.gmra.mrb[0].mxu0 %v1331
    %v1404 = vpop.f32.mrb[0].mxu0
    %v1405 = vadd.f32 0.0, %v1404
    %v1406 = vpop.f32.mrb[0].mxu0
    %1407 = vdwg.mxu0
    %v1408 = vadd.f32 %v869, %v1400
    %v1409 = vadd.f32 %v870, %v1405
    %v1410 = vld [vmem:[#allocation2 + $0x1ca] sm:$0x1]
    %v1411 = vld [vmem:[#allocation2 + $0x1cb] sm:$0x1]
    %v1412 = vsel %vm79, %v1408, 0.0
    %1413 = vadd.xlane.f32.xlu0 %v1412
    %v1414 = vpop.xlane.xlu0 %1413
    %v1415 = vsel %vm79, %v1409, 0.0
    %1416 = vadd.xlane.f32.xlu0 %v1415
    %v1417 = vpop.xlane.xlu0 %1416
    %v1418 = vmul.f32 %v1414, %v86
    %v1419 = vmul.f32 %v1417, %v86
    %v1420 = vsub.f32 %v1408, %v1418
    %v1421 = vsub.f32 %v1409, %v1419
    %v1422 = vmul.f32 %v1420, %v1420
    %v1423 = vmul.f32 %v1421, %v1421
    %v1424 = vsel %vm79, %v1422, 0.0
    %1425 = vadd.xlane.f32.xlu0 %v1424
    %v1426 = vpop.xlane.xlu0 %1425
    %v1427 = vsel %vm79, %v1423, 0.0
    %1428 = vadd.xlane.f32.xlu0 %v1427
    %v1429 = vpop.xlane.xlu0 %1428
    %v1430 = vmul.f32 %v1426, %v86
    %v1431 = vmul.f32 %v1429, %v86
    %v1432 = vadd.f32 %v1430, 1e-05
    %v1433 = vadd.f32 %v1431, 1e-05
    %v1434 = vrsqrt.pop %v1432
    %v1435 = vrsqrt.pop %v1433
    %v1436 = vmul.f32 %v1420, %v1434
    %v1437 = vmul.f32 %v1421, %v1435
    %v1438 = vlaneseq
    %v1439 = vshrl.u32 %v1438, 7
    %v1440 = vsub.s32 0, %v1439
    %v1441 = vrot.slane %v1410, %v1440
    %v1442 = vmul.f32 %v1436, %v1441
    %v1443 = vmul.f32 %v1437, %v1441
    %v1444 = vlaneseq
    %v1445 = vshrl.u32 %v1444, 7
    %v1446 = vsub.s32 0, %v1445
    %v1447 = vrot.slane %v1411, %v1446
    %v1448 = vadd.f32 %v1442, %v1447
    %v1449 = vadd.f32 %v1443, %v1447
    %v1450 = vld [vmem:[#allocation2 + $0x128] sm:$0xff]
    %v1451 = vld [vmem:[#allocation2 + $0x130] sm:$0xff]
    %v1452 = vld [vmem:[#allocation2 + $0x138] sm:$0xff]
    %v1453 = vld [vmem:[#allocation2 + $0x140] sm:$0xff]
    %v1454 = vld [vmem:[#allocation2 + $0x1cc] sm:$0x1]
    %v1455 = vlaneseq
    %v1456 = vshrl.u32 %v1455, 7
    %v1457 = vsub.s32 0, %v1456
    %v1458 = vrot.slane %v1454, %v1457
    %v1460 = vsel %vm79, %v1448, 0
    %v1463 = vsel %vm79, %v1449, 0
    %1465 = vmatprep.subr.mxu0 0.0
    %1466 = vmatpush1.msra.mxu0 %v1450
    %1467 = vmatprep.subr.mxu0 0.0
    %1468 = vmatpush1.msra.mxu0 %v1451
    %1469 = vmatprep.subr.mxu0 0.0
    %1470 = vmatpush1.msra.mxu0 %v1452
    %1471 = vmatprep.subr.mxu0 0.0
    %1472 = vmatpush1.msra.mxu0 %v1453
    %1473 = vmatprep.subr.mxu0 0.0
    %1474 = vmatpush1.msra.mxu0 0.0
    %1475 = vmatprep.subr.mxu0 0.0
    %1476 = vmatpush1.msra.mxu0 0.0
    %1477 = vmatprep.subr.mxu0 0.0
    %1478 = vmatpush1.msra.mxu0 0.0
    %1479 = vmatprep.subr.mxu0 0.0
    %1480 = vmatpush1.msra.mxu0 0.0
    %1481 = vmatprep.subr.mxu0 0.0
    %1482 = vmatpush1.msra.mxu0 0.0
    %1483 = vmatprep.subr.mxu0 0.0
    %1484 = vmatpush1.msra.mxu0 0.0
    %1485 = vmatprep.subr.mxu0 0.0
    %1486 = vmatpush1.msra.mxu0 0.0
    %1487 = vmatprep.subr.mxu0 0.0
    %1488 = vmatpush1.msra.mxu0 0.0
    %1489 = vmatprep.subr.mxu0 0.0
    %1490 = vmatpush1.msra.mxu0 0.0
    %1491 = vmatprep.subr.mxu0 0.0
    %1492 = vmatpush1.msra.mxu0 0.0
    %1493 = vmatprep.subr.mxu0 0.0
    %1494 = vmatpush1.msra.mxu0 0.0
    %1495 = vmatprep.subr.mxu0 0.0
    %1496 = vmatpush1.msra.mxu0 0.0
    %1497 = vmatprep.subr.mxu0 0.0
    %1498 = vmatpush1.msra.mxu0 0.0
    %1499 = vmatprep.subr.mxu0 0.0
    %1500 = vmatpush1.msra.mxu0 0.0
    %1501 = vmatprep.subr.mxu0 0.0
    %1502 = vmatpush1.msra.mxu0 0.0
    %1503 = vmatprep.subr.mxu0 0.0
    %1504 = vmatpush1.msra.mxu0 0.0
    %1505 = vmatprep.subr.mxu0 0.0
    %1506 = vmatpush1.msra.mxu0 0.0
    %1507 = vmatprep.subr.mxu0 0.0
    %1508 = vmatpush1.msra.mxu0 0.0
    %1509 = vmatprep.subr.mxu0 0.0
    %1510 = vmatpush1.msra.mxu0 0.0
    %1511 = vmatprep.subr.mxu0 0.0
    %1512 = vmatpush1.msra.mxu0 0.0
    %1513 = vmatprep.subr.mxu0 0.0
    %1514 = vmatpush1.msra.mxu0 0.0
    %1515 = vmatprep.subr.mxu0 0.0
    %1516 = vmatpush1.msra.mxu0 0.0
    %1517 = vmatprep.subr.mxu0 0.0
    %1518 = vmatpush1.msra.mxu0 0.0
    %1519 = vmatprep.subr.mxu0 0.0
    %1520 = vmatpush1.msra.mxu0 0.0
    %1521 = vmatprep.subr.mxu0 0.0
    %1522 = vmatpush1.msra.mxu0 0.0
    %1523 = vmatprep.subr.mxu0 0.0
    %1524 = vmatpush1.msra.mxu0 0.0
    %1525 = vmatprep.subr.mxu0 0.0
    %1526 = vmatpush1.msra.mxu0 0.0
    %1527 = vmatprep.subr.mxu0 0.0
    %1528 = vmatpush1.msra.mxu0 0.0
    %1529 = vmatprep.mubr.f32.mxu0 0.0
    %1530 = vmatmul.mubr.f32.gmra.mrb[0].mxu0 %v1460
    %v1531 = vpop.f32.mrb[0].mxu0
    %v1532 = vadd.f32 %v1458, %v1531
    %v1533 = vpop.f32.mrb[0].mxu0
    %1534 = vmatprep.mubr.f32.mxu0 0.0
    %1535 = vmatmul.mubr.f32.gmra.mrb[0].mxu0 %v1463
    %v1536 = vpop.f32.mrb[0].mxu0
    %v1537 = vadd.f32 %v1458, %v1536
    %v1538 = vpop.f32.mrb[0].mxu0
    %1539 = vdwg.mxu0
    %v1540 = vmul.f32 %v1532, %v1532
    %v1541 = vmul.f32 %v1537, %v1537
    %v1542 = vmul.f32 %v1532, %v1540
    %v1543 = vmul.f32 %v1537, %v1541
    %v1544 = vmul.f32 %v1542, 0.044715
    %v1545 = vmul.f32 %v1543, 0.044715
    %v1546 = vadd.f32 %v1532, %v1544
    %v1547 = vadd.f32 %v1537, %v1545
    %v1548 = vmul.f32 %v1546, 0.7978846
    %v1549 = vmul.f32 %v1547, 0.7978846
    %v1550 = vtanh.pop %v1548
    %v1551 = vtanh.pop %v1549
    %v1552 = vadd.f32 %v1550, 1.0
    %v1553 = vadd.f32 %v1551, 1.0
    %v1554 = vmul.f32 %v1552, 0.5
    %v1555 = vmul.f32 %v1553, 0.5
    %v1556 = vmul.f32 %v1532, %v1554
    %v1557 = vmul.f32 %v1537, %v1555
    %v1558 = vld [vmem:[#allocation2 + $0x148] sm:$0xff]
    %v1559 = vld [vmem:[#allocation2 + $0x150] sm:$0xff]
    %v1560 = vld [vmem:[#allocation2 + $0x158] sm:$0xff]
    %v1561 = vld [vmem:[#allocation2 + $0x160] sm:$0xff]
    %v1562 = vld [vmem:[#allocation2 + $0x168] sm:$0xff]
    %v1563 = vld [vmem:[#allocation2 + $0x170] sm:$0xff]
    %v1564 = vld [vmem:[#allocation2 + $0x178] sm:$0xff]
    %v1565 = vld [vmem:[#allocation2 + $0x180] sm:$0xff]
    %v1566 = vld [vmem:[#allocation2 + $0x188] sm:$0xff]
    %v1567 = vld [vmem:[#allocation2 + $0x190] sm:$0xff]
    %v1568 = vld [vmem:[#allocation2 + $0x198] sm:$0xff]
    %v1569 = vld [vmem:[#allocation2 + $0x1a0] sm:$0xff]
    %v1570 = vld [vmem:[#allocation2 + $0x1a8] sm:$0xff]
    %v1571 = vld [vmem:[#allocation2 + $0x1b0] sm:$0xff]
    %v1572 = vld [vmem:[#allocation2 + $0x1b8] sm:$0xff]
    %v1573 = vld [vmem:[#allocation2 + $0x1c0] sm:$0xff]
    %1574 = vmatprep.subr.mxu0 0.0
    %1575 = vmatpush1.msra.mxu0 %v1558
    %1576 = vmatprep.subr.mxu0 0.0
    %1577 = vmatpush1.msra.mxu0 %v1559
    %1578 = vmatprep.subr.mxu0 0.0
    %1579 = vmatpush1.msra.mxu0 %v1560
    %1580 = vmatprep.subr.mxu0 0.0
    %1581 = vmatpush1.msra.mxu0 %v1561
    %1582 = vmatprep.subr.mxu0 0.0
    %1583 = vmatpush1.msra.mxu0 %v1562
    %1584 = vmatprep.subr.mxu0 0.0
    %1585 = vmatpush1.msra.mxu0 %v1563
    %1586 = vmatprep.subr.mxu0 0.0
    %1587 = vmatpush1.msra.mxu0 %v1564
    %1588 = vmatprep.subr.mxu0 0.0
    %1589 = vmatpush1.msra.mxu0 %v1565
    %1590 = vmatprep.subr.mxu0 0.0
    %1591 = vmatpush1.msra.mxu0 %v1566
    %1592 = vmatprep.subr.mxu0 0.0
    %1593 = vmatpush1.msra.mxu0 %v1567
    %1594 = vmatprep.subr.mxu0 0.0
    %1595 = vmatpush1.msra.mxu0 %v1568
    %1596 = vmatprep.subr.mxu0 0.0
    %1597 = vmatpush1.msra.mxu0 %v1569
    %1598 = vmatprep.subr.mxu0 0.0
    %1599 = vmatpush1.msra.mxu0 %v1570
    %1600 = vmatprep.subr.mxu0 0.0
    %1601 = vmatpush1.msra.mxu0 %v1571
    %1602 = vmatprep.subr.mxu0 0.0
    %1603 = vmatpush1.msra.mxu0 %v1572
    %1604 = vmatprep.subr.mxu0 0.0
    %1605 = vmatpush1.msra.mxu0 %v1573
    %1606 = vmatprep.subr.mxu0 0.0
    %1607 = vmatpush1.msra.mxu0 0.0
    %1608 = vmatprep.subr.mxu0 0.0
    %1609 = vmatpush1.msra.mxu0 0.0
    %1610 = vmatprep.subr.mxu0 0.0
    %1611 = vmatpush1.msra.mxu0 0.0
    %1612 = vmatprep.subr.mxu0 0.0
    %1613 = vmatpush1.msra.mxu0 0.0
    %1614 = vmatprep.subr.mxu0 0.0
    %1615 = vmatpush1.msra.mxu0 0.0
    %1616 = vmatprep.subr.mxu0 0.0
    %1617 = vmatpush1.msra.mxu0 0.0
    %1618 = vmatprep.subr.mxu0 0.0
    %1619 = vmatpush1.msra.mxu0 0.0
    %1620 = vmatprep.subr.mxu0 0.0
    %1621 = vmatpush1.msra.mxu0 0.0
    %1622 = vmatprep.subr.mxu0 0.0
    %1623 = vmatpush1.msra.mxu0 0.0
    %1624 = vmatprep.subr.mxu0 0.0
    %1625 = vmatpush1.msra.mxu0 0.0
    %1626 = vmatprep.subr.mxu0 0.0
    %1627 = vmatpush1.msra.mxu0 0.0
    %1628 = vmatprep.subr.mxu0 0.0
    %1629 = vmatpush1.msra.mxu0 0.0
    %1630 = vmatprep.subr.mxu0 0.0
    %1631 = vmatpush1.msra.mxu0 0.0
    %1632 = vmatprep.subr.mxu0 0.0
    %1633 = vmatpush1.msra.mxu0 0.0
    %1634 = vmatprep.subr.mxu0 0.0
    %1635 = vmatpush1.msra.mxu0 0.0
    %1636 = vmatprep.subr.mxu0 0.0
    %1637 = vmatpush1.msra.mxu0 0.0
    %1638 = vmatprep.mubr.f32.mxu0 0.0
    %1639 = vmatmul.mubr.f32.gmra.mrb[0].mxu0 %v1556
    %v1640 = vpop.f32.mrb[0].mxu0
    %v1641 = vpop.f32.mrb[0].mxu0
    %1642 = vmatprep.mubr.f32.mxu0 0.0
    %1643 = vmatmul.mubr.f32.gmra.mrb[0].mxu0 %v1557
    %v1644 = vpop.f32.mrb[0].mxu0
    %v1645 = vadd.f32 0.0, %v1644
    %v1646 = vpop.f32.mrb[0].mxu0
    %1647 = vdwg.mxu0
    %v1648 = vadd.f32 %v1409, %v1645
    %v1649 = vld [vmem:[#allocation2 + $0x1cd] sm:$0x1]
    %v1650 = vlaneseq
    %v1651 = vshrl.u32 %v1650, 7
    %v1652 = vsub.s32 0, %v1651
    %v1653 = vrot.slane %v1649, %v1652
    %v1654 = vadd.f32 %v1648, %v1653
    %v1655 = vld [vmem:[#allocation2 + $0x218] sm:$0x1]
    %v1656 = vld [vmem:[#allocation2 + $0x219] sm:$0x1]
    %v1657 = vsel %vm79, %v1654, 0.0
    %1658 = vadd.xlane.f32.xlu0 %v1657
    %v1659 = vpop.xlane.xlu0 %1658
    %v1660 = vmul.f32 %v1659, %v86
    %v1661 = vsub.f32 %v1654, %v1660
    %v1662 = vmul.f32 %v1661, %v1661
    %v1663 = vsel %vm79, %v1662, 0.0
    %1664 = vadd.xlane.f32.xlu0 %v1663
    %v1665 = vpop.xlane.xlu0 %1664
    %v1666 = vmul.f32 %v1665, %v86
    %v1667 = vadd.f32 %v1666, 1e-05
    %v1668 = vrsqrt.pop %v1667
    %v1669 = vmul.f32 %v1661, %v1668
    %v1670 = vlaneseq
    %v1671 = vshrl.u32 %v1670, 7
    %v1672 = vsub.s32 0, %v1671
    %v1673 = vrot.slane %v1655, %v1672
    %v1674 = vmul.f32 %v1669, %v1673
    %v1675 = vlaneseq
    %v1676 = vshrl.u32 %v1675, 7
    %v1677 = vsub.s32 0, %v1676
    %v1678 = vrot.slane %v1656, %v1677
    %v1679 = vadd.f32 %v1674, %v1678
    %v1680 = vlaneseq
    %v1681 = vshrl.u32 %v1680, 7
    %v1682 = vsub.s32 0, %v1681
    %v1683 = vrot.slane %v43, %v1682
    %v1684 = vadd.f32 %v1679, %v1683
    %v1685 = vadd.f32 %v66, %v75
    %v1686 = vsel %vm79, %v1684, 0.0
    %1687 = vadd.xlane.f32.xlu0 %v1686
    %v1688 = vpop.xlane.xlu0 %1687
    %v1689 = vsel %vm79, %v1685, 0.0
    %1690 = vadd.xlane.f32.xlu0 %v1689
    %v1691 = vpop.xlane.xlu0 %1690
    %v1692 = vmul.f32 %v1688, %v86
    %v1693 = vmul.f32 %v1691, %v86
    %v1694 = vsub.f32 %v1684, %v1692
    %v1695 = vsub.f32 %v1685, %v1693
    %v1696 = vmul.f32 %v1694, %v1694
    %v1697 = vmul.f32 %v1695, %v1695
    %v1698 = vsel %vm79, %v1696, 0.0
    %1699 = vadd.xlane.f32.xlu0 %v1698
    %v1700 = vpop.xlane.xlu0 %1699
    %v1701 = vsel %vm79, %v1697, 0.0
    %1702 = vadd.xlane.f32.xlu0 %v1701
    %v1703 = vpop.xlane.xlu0 %1702
    %v1704 = vmul.f32 %v1700, %v86
    %v1705 = vmul.f32 %v1703, %v86
    %v1706 = vadd.f32 %v1704, 1e-05
    %v1707 = vadd.f32 %v1705, 1e-05
    %v1708 = vrsqrt.pop %v1706
    %v1709 = vrsqrt.pop %v1707
    %v1710 = vmul.f32 %v1694, %v1708
    %v1711 = vmul.f32 %v1695, %v1709
    %v1712 = vmul.f32 %v1710, %v110
    %v1713 = vmul.f32 %v1711, %v110
    %v1714 = vadd.f32 %v1712, %v116
    %v1715 = vadd.f32 %v1713, %v116
    %v1717 = vsel %vm79, %v1714, 0
    %v1720 = vsel %vm79, %v1715, 0
    %1722 = vmatprep.subr.mxu0 0.0
    %1723 = vmatpush1.msra.mxu0 %v119
    %1724 = vmatprep.subr.mxu0 0.0
    %1725 = vmatpush1.msra.mxu0 %v120
    %1726 = vmatprep.subr.mxu0 0.0
    %1727 = vmatpush1.msra.mxu0 %v121
    %1728 = vmatprep.subr.mxu0 0.0
    %1729 = vmatpush1.msra.mxu0 %v122
    %1730 = vmatprep.subr.mxu0 0.0
    %1731 = vmatpush1.msra.mxu0 0.0
    %1732 = vmatprep.subr.mxu0 0.0
    %1733 = vmatpush1.msra.mxu0 0.0
    %1734 = vmatprep.subr.mxu0 0.0
    %1735 = vmatpush1.msra.mxu0 0.0
    %1736 = vmatprep.subr.mxu0 0.0
    %1737 = vmatpush1.msra.mxu0 0.0
    %1738 = vmatprep.subr.mxu0 0.0
    %1739 = vmatpush1.msra.mxu0 0.0
    %1740 = vmatprep.subr.mxu0 0.0
    %1741 = vmatpush1.msra.mxu0 0.0
    %1742 = vmatprep.subr.mxu0 0.0
    %1743 = vmatpush1.msra.mxu0 0.0
    %1744 = vmatprep.subr.mxu0 0.0
    %1745 = vmatpush1.msra.mxu0 0.0
    %1746 = vmatprep.subr.mxu0 0.0
    %1747 = vmatpush1.msra.mxu0 0.0
    %1748 = vmatprep.subr.mxu0 0.0
    %1749 = vmatpush1.msra.mxu0 0.0
    %1750 = vmatprep.subr.mxu0 0.0
    %1751 = vmatpush1.msra.mxu0 0.0
    %1752 = vmatprep.subr.mxu0 0.0
    %1753 = vmatpush1.msra.mxu0 0.0
    %1754 = vmatprep.subr.mxu0 0.0
    %1755 = vmatpush1.msra.mxu0 0.0
    %1756 = vmatprep.subr.mxu0 0.0
    %1757 = vmatpush1.msra.mxu0 0.0
    %1758 = vmatprep.subr.mxu0 0.0
    %1759 = vmatpush1.msra.mxu0 0.0
    %1760 = vmatprep.subr.mxu0 0.0
    %1761 = vmatpush1.msra.mxu0 0.0
    %1762 = vmatprep.subr.mxu0 0.0
    %1763 = vmatpush1.msra.mxu0 0.0
    %1764 = vmatprep.subr.mxu0 0.0
    %1765 = vmatpush1.msra.mxu0 0.0
    %1766 = vmatprep.subr.mxu0 0.0
    %1767 = vmatpush1.msra.mxu0 0.0
    %1768 = vmatprep.subr.mxu0 0.0
    %1769 = vmatpush1.msra.mxu0 0.0
    %1770 = vmatprep.subr.mxu0 0.0
    %1771 = vmatpush1.msra.mxu0 0.0
    %1772 = vmatprep.subr.mxu0 0.0
    %1773 = vmatpush1.msra.mxu0 0.0
    %1774 = vmatprep.subr.mxu0 0.0
    %1775 = vmatpush1.msra.mxu0 0.0
    %1776 = vmatprep.subr.mxu0 0.0
    %1777 = vmatpush1.msra.mxu0 0.0
    %1778 = vmatprep.subr.mxu0 0.0
    %1779 = vmatpush1.msra.mxu0 0.0
    %1780 = vmatprep.subr.mxu0 0.0
    %1781 = vmatpush1.msra.mxu0 0.0
    %1782 = vmatprep.subr.mxu0 0.0
    %1783 = vmatpush1.msra.mxu0 0.0
    %1784 = vmatprep.subr.mxu0 0.0
    %1785 = vmatpush1.msra.mxu0 0.0
    %1786 = vmatprep.mubr.f32.mxu0 0.0
    %1787 = vmatmul.mubr.f32.gmra.mrb[0].mxu0 %v1717
    %v1788 = vpop.f32.mrb[0].mxu0
    %v1789 = vadd.f32 0.0, %v1788
    %v1790 = vpop.f32.mrb[0].mxu0
    %1791 = vmatprep.mubr.f32.mxu0 0.0
    %1792 = vmatmul.mubr.f32.gmra.mrb[0].mxu0 %v1720
    %v1793 = vpop.f32.mrb[0].mxu0
    %v1794 = vadd.f32 0.0, %v1793
    %v1795 = vpop.f32.mrb[0].mxu0
    %1796 = vdwg.mxu0
    %1798 = vrot.lane.b32.xlu0 %v1789, 96
    %v1799 = vpop.permute.xlu0 %1798
    %v1801 = vmul.f32 %v1794, %v1799
    %v1803 = vsel %vm79, %v1801, 0
    %1805 = vmatprep.subr.mxu0 0.0
    %1806 = vmatpush1.msra.mxu0 %v36
    %1807 = vmatprep.subr.mxu0 0.0
    %1808 = vmatpush1.msra.mxu0 %v37
    %1809 = vmatprep.subr.mxu0 0.0
    %1810 = vmatpush1.msra.mxu0 %v38
    %1811 = vmatprep.subr.mxu0 0.0
    %1812 = vmatpush1.msra.mxu0 %v39
    %1813 = vmatprep.subr.mxu0 0.0
    %1814 = vmatpush1.msra.mxu0 0.0
    %1815 = vmatprep.subr.mxu0 0.0
    %1816 = vmatpush1.msra.mxu0 0.0
    %1817 = vmatprep.subr.mxu0 0.0
    %1818 = vmatpush1.msra.mxu0 0.0
    %1819 = vmatprep.subr.mxu0 0.0
    %1820 = vmatpush1.msra.mxu0 0.0
    %1821 = vmatprep.subr.mxu0 0.0
    %1822 = vmatpush1.msra.mxu0 0.0
    %1823 = vmatprep.subr.mxu0 0.0
    %1824 = vmatpush1.msra.mxu0 0.0
    %1825 = vmatprep.subr.mxu0 0.0
    %1826 = vmatpush1.msra.mxu0 0.0
    %1827 = vmatprep.subr.mxu0 0.0
    %1828 = vmatpush1.msra.mxu0 0.0
    %1829 = vmatprep.subr.mxu0 0.0
    %1830 = vmatpush1.msra.mxu0 0.0
    %1831 = vmatprep.subr.mxu0 0.0
    %1832 = vmatpush1.msra.mxu0 0.0
    %1833 = vmatprep.subr.mxu0 0.0
    %1834 = vmatpush1.msra.mxu0 0.0
    %1835 = vmatprep.subr.mxu0 0.0
    %1836 = vmatpush1.msra.mxu0 0.0
    %1837 = vmatprep.subr.mxu0 0.0
    %1838 = vmatpush1.msra.mxu0 0.0
    %1839 = vmatprep.subr.mxu0 0.0
    %1840 = vmatpush1.msra.mxu0 0.0
    %1841 = vmatprep.subr.mxu0 0.0
    %1842 = vmatpush1.msra.mxu0 0.0
    %1843 = vmatprep.subr.mxu0 0.0
    %1844 = vmatpush1.msra.mxu0 0.0
    %1845 = vmatprep.subr.mxu0 0.0
    %1846 = vmatpush1.msra.mxu0 0.0
    %1847 = vmatprep.subr.mxu0 0.0
    %1848 = vmatpush1.msra.mxu0 0.0
    %1849 = vmatprep.subr.mxu0 0.0
    %1850 = vmatpush1.msra.mxu0 0.0
    %1851 = vmatprep.subr.mxu0 0.0
    %1852 = vmatpush1.msra.mxu0 0.0
    %1853 = vmatprep.subr.mxu0 0.0
    %1854 = vmatpush1.msra.mxu0 0.0
    %1855 = vmatprep.subr.mxu0 0.0
    %1856 = vmatpush1.msra.mxu0 0.0
    %1857 = vmatprep.subr.mxu0 0.0
    %1858 = vmatpush1.msra.mxu0 0.0
    %1859 = vmatprep.subr.mxu0 0.0
    %1860 = vmatpush1.msra.mxu0 0.0
    %1861 = vmatprep.subr.mxu0 0.0
    %1862 = vmatpush1.msra.mxu0 0.0
    %1863 = vmatprep.subr.mxu0 0.0
    %1864 = vmatpush1.msra.mxu0 0.0
    %1865 = vmatprep.subr.mxu0 0.0
    %1866 = vmatpush1.msra.mxu0 0.0
    %1867 = vmatprep.subr.mxu0 0.0
    %1868 = vmatpush1.msra.mxu0 0.0
    %1869 = vmatprep.mubr.f32.mxu0 0.0
    %1870 = vmatmul.mubr.f32.gmra.mrb[0].mxu0 %v1803
    %v1871 = vpop.f32.mrb[0].mxu0
    %v1872 = vadd.f32 0.0, %v1871
    %v1873 = vpop.f32.mrb[0].mxu0
    %1874 = vdwg.mxu0
    %v1875 = vmul.f32 %v1872, 0.35355338
    %1877 = vrot.lane.b32.xlu0 %v1794, 96
    %v1878 = vpop.permute.xlu0 %1877
    %v1880 = vmul.f32 %v1794, %v1878
    %v1882 = vsel %vm79, %v1880, 0
    %1884 = vmatprep.subr.mxu0 0.0
    %1885 = vmatpush1.msra.mxu0 %v36
    %1886 = vmatprep.subr.mxu0 0.0
    %1887 = vmatpush1.msra.mxu0 %v37
    %1888 = vmatprep.subr.mxu0 0.0
    %1889 = vmatpush1.msra.mxu0 %v38
    %1890 = vmatprep.subr.mxu0 0.0
    %1891 = vmatpush1.msra.mxu0 %v39
    %1892 = vmatprep.subr.mxu0 0.0
    %1893 = vmatpush1.msra.mxu0 0.0
    %1894 = vmatprep.subr.mxu0 0.0
    %1895 = vmatpush1.msra.mxu0 0.0
    %1896 = vmatprep.subr.mxu0 0.0
    %1897 = vmatpush1.msra.mxu0 0.0
    %1898 = vmatprep.subr.mxu0 0.0
    %1899 = vmatpush1.msra.mxu0 0.0
    %1900 = vmatprep.subr.mxu0 0.0
    %1901 = vmatpush1.msra.mxu0 0.0
    %1902 = vmatprep.subr.mxu0 0.0
    %1903 = vmatpush1.msra.mxu0 0.0
    %1904 = vmatprep.subr.mxu0 0.0
    %1905 = vmatpush1.msra.mxu0 0.0
    %1906 = vmatprep.subr.mxu0 0.0
    %1907 = vmatpush1.msra.mxu0 0.0
    %1908 = vmatprep.subr.mxu0 0.0
    %1909 = vmatpush1.msra.mxu0 0.0
    %1910 = vmatprep.subr.mxu0 0.0
    %1911 = vmatpush1.msra.mxu0 0.0
    %1912 = vmatprep.subr.mxu0 0.0
    %1913 = vmatpush1.msra.mxu0 0.0
    %1914 = vmatprep.subr.mxu0 0.0
    %1915 = vmatpush1.msra.mxu0 0.0
    %1916 = vmatprep.subr.mxu0 0.0
    %1917 = vmatpush1.msra.mxu0 0.0
    %1918 = vmatprep.subr.mxu0 0.0
    %1919 = vmatpush1.msra.mxu0 0.0
    %1920 = vmatprep.subr.mxu0 0.0
    %1921 = vmatpush1.msra.mxu0 0.0
    %1922 = vmatprep.subr.mxu0 0.0
    %1923 = vmatpush1.msra.mxu0 0.0
    %1924 = vmatprep.subr.mxu0 0.0
    %1925 = vmatpush1.msra.mxu0 0.0
    %1926 = vmatprep.subr.mxu0 0.0
    %1927 = vmatpush1.msra.mxu0 0.0
    %1928 = vmatprep.subr.mxu0 0.0
    %1929 = vmatpush1.msra.mxu0 0.0
    %1930 = vmatprep.subr.mxu0 0.0
    %1931 = vmatpush1.msra.mxu0 0.0
    %1932 = vmatprep.subr.mxu0 0.0
    %1933 = vmatpush1.msra.mxu0 0.0
    %1934 = vmatprep.subr.mxu0 0.0
    %1935 = vmatpush1.msra.mxu0 0.0
    %1936 = vmatprep.subr.mxu0 0.0
    %1937 = vmatpush1.msra.mxu0 0.0
    %1938 = vmatprep.subr.mxu0 0.0
    %1939 = vmatpush1.msra.mxu0 0.0
    %1940 = vmatprep.subr.mxu0 0.0
    %1941 = vmatpush1.msra.mxu0 0.0
    %1942 = vmatprep.subr.mxu0 0.0
    %1943 = vmatpush1.msra.mxu0 0.0
    %1944 = vmatprep.subr.mxu0 0.0
    %1945 = vmatpush1.msra.mxu0 0.0
    %1946 = vmatprep.subr.mxu0 0.0
    %1947 = vmatpush1.msra.mxu0 0.0
    %1948 = vmatprep.mubr.f32.mxu0 0.0
    %1949 = vmatmul.mubr.f32.gmra.mrb[0].mxu0 %v1882
    %v1950 = vpop.f32.mrb[0].mxu0
    %v1951 = vadd.f32 0.0, %v1950
    %v1952 = vpop.f32.mrb[0].mxu0
    %1953 = vdwg.mxu0
    %v1954 = vmul.f32 %v1951, 0.35355338
    %v1955 = vmax.f32 %v1875, %v1954
    %v1956 = vsub.f32 %v1875, %v1955
    %v1957 = vmul.f32 %v1956, 1.442695
    %v1958 = vpow.pop %v1957
    %v1959 = vsub.f32 %v1954, %v1955
    %v1960 = vmul.f32 %v1959, 1.442695
    %v1961 = vpow.pop %v1960
    %v1962 = vadd.f32 %v1958, %v1961
    %v1963 = vrcp.pop %v1962
    %v1964 = vmul.f32 %v1958, %v1963
    %v1966 = vsel %vm372, %v1964, 0
    %1968 = vmatprep.subr.mxu0 0.0
    %1969 = vmatpush1.msra.mxu0 %v378
    %1970 = vmatprep.subr.mxu0 0.0
    %1971 = vmatpush1.msra.mxu0 0.0
    %1972 = vmatprep.subr.mxu0 0.0
    %1973 = vmatpush1.msra.mxu0 0.0
    %1974 = vmatprep.subr.mxu0 0.0
    %1975 = vmatpush1.msra.mxu0 0.0
    %1976 = vmatprep.subr.mxu0 0.0
    %1977 = vmatpush1.msra.mxu0 0.0
    %1978 = vmatprep.subr.mxu0 0.0
    %1979 = vmatpush1.msra.mxu0 0.0
    %1980 = vmatprep.subr.mxu0 0.0
    %1981 = vmatpush1.msra.mxu0 0.0
    %1982 = vmatprep.subr.mxu0 0.0
    %1983 = vmatpush1.msra.mxu0 0.0
    %1984 = vmatprep.subr.mxu0 0.0
    %1985 = vmatpush1.msra.mxu0 0.0
    %1986 = vmatprep.subr.mxu0 0.0
    %1987 = vmatpush1.msra.mxu0 0.0
    %1988 = vmatprep.subr.mxu0 0.0
    %1989 = vmatpush1.msra.mxu0 0.0
    %1990 = vmatprep.subr.mxu0 0.0
    %1991 = vmatpush1.msra.mxu0 0.0
    %1992 = vmatprep.subr.mxu0 0.0
    %1993 = vmatpush1.msra.mxu0 0.0
    %1994 = vmatprep.subr.mxu0 0.0
    %1995 = vmatpush1.msra.mxu0 0.0
    %1996 = vmatprep.subr.mxu0 0.0
    %1997 = vmatpush1.msra.mxu0 0.0
    %1998 = vmatprep.subr.mxu0 0.0
    %1999 = vmatpush1.msra.mxu0 0.0
    %2000 = vmatprep.subr.mxu0 0.0
    %2001 = vmatpush1.msra.mxu0 0.0
    %2002 = vmatprep.subr.mxu0 0.0
    %2003 = vmatpush1.msra.mxu0 0.0
    %2004 = vmatprep.subr.mxu0 0.0
    %2005 = vmatpush1.msra.mxu0 0.0
    %2006 = vmatprep.subr.mxu0 0.0
    %2007 = vmatpush1.msra.mxu0 0.0
    %2008 = vmatprep.subr.mxu0 0.0
    %2009 = vmatpush1.msra.mxu0 0.0
    %2010 = vmatprep.subr.mxu0 0.0
    %2011 = vmatpush1.msra.mxu0 0.0
    %2012 = vmatprep.subr.mxu0 0.0
    %2013 = vmatpush1.msra.mxu0 0.0
    %2014 = vmatprep.subr.mxu0 0.0
    %2015 = vmatpush1.msra.mxu0 0.0
    %2016 = vmatprep.subr.mxu0 0.0
    %2017 = vmatpush1.msra.mxu0 0.0
    %2018 = vmatprep.subr.mxu0 0.0
    %2019 = vmatpush1.msra.mxu0 0.0
    %2020 = vmatprep.subr.mxu0 0.0
    %2021 = vmatpush1.msra.mxu0 0.0
    %2022 = vmatprep.subr.mxu0 0.0
    %2023 = vmatpush1.msra.mxu0 0.0
    %2024 = vmatprep.subr.mxu0 0.0
    %2025 = vmatpush1.msra.mxu0 0.0
    %2026 = vmatprep.subr.mxu0 0.0
    %2027 = vmatpush1.msra.mxu0 0.0
    %2028 = vmatprep.subr.mxu0 0.0
    %2029 = vmatpush1.msra.mxu0 0.0
    %2030 = vmatprep.subr.mxu0 0.0
    %2031 = vmatpush1.msra.mxu0 0.0
    %2032 = vmatprep.mubr.f32.mxu0 0.0
    %2033 = vmatmul.mubr.f32.gmra.mrb[0].mxu0 %v1966
    %v2034 = vpop.f32.mrb[0].mxu0
    %v2035 = vadd.f32 0.0, %v2034
    %v2036 = vpop.f32.mrb[0].mxu0
    %2037 = vdwg.mxu0
    %v2038 = vmul.f32 %v1961, %v1963
    %v2040 = vsel %vm372, %v2038, 0
    %2042 = vmatprep.subr.mxu0 0.0
    %2043 = vmatpush1.msra.mxu0 %v378
    %2044 = vmatprep.subr.mxu0 0.0
    %2045 = vmatpush1.msra.mxu0 0.0
    %2046 = vmatprep.subr.mxu0 0.0
    %2047 = vmatpush1.msra.mxu0 0.0
    %2048 = vmatprep.subr.mxu0 0.0
    %2049 = vmatpush1.msra.mxu0 0.0
    %2050 = vmatprep.subr.mxu0 0.0
    %2051 = vmatpush1.msra.mxu0 0.0
    %2052 = vmatprep.subr.mxu0 0.0
    %2053 = vmatpush1.msra.mxu0 0.0
    %2054 = vmatprep.subr.mxu0 0.0
    %2055 = vmatpush1.msra.mxu0 0.0
    %2056 = vmatprep.subr.mxu0 0.0
    %2057 = vmatpush1.msra.mxu0 0.0
    %2058 = vmatprep.subr.mxu0 0.0
    %2059 = vmatpush1.msra.mxu0 0.0
    %2060 = vmatprep.subr.mxu0 0.0
    %2061 = vmatpush1.msra.mxu0 0.0
    %2062 = vmatprep.subr.mxu0 0.0
    %2063 = vmatpush1.msra.mxu0 0.0
    %2064 = vmatprep.subr.mxu0 0.0
    %2065 = vmatpush1.msra.mxu0 0.0
    %2066 = vmatprep.subr.mxu0 0.0
    %2067 = vmatpush1.msra.mxu0 0.0
    %2068 = vmatprep.subr.mxu0 0.0
    %2069 = vmatpush1.msra.mxu0 0.0
    %2070 = vmatprep.subr.mxu0 0.0
    %2071 = vmatpush1.msra.mxu0 0.0
    %2072 = vmatprep.subr.mxu0 0.0
    %2073 = vmatpush1.msra.mxu0 0.0
    %2074 = vmatprep.subr.mxu0 0.0
    %2075 = vmatpush1.msra.mxu0 0.0
    %2076 = vmatprep.subr.mxu0 0.0
    %2077 = vmatpush1.msra.mxu0 0.0
    %2078 = vmatprep.subr.mxu0 0.0
    %2079 = vmatpush1.msra.mxu0 0.0
    %2080 = vmatprep.subr.mxu0 0.0
    %2081 = vmatpush1.msra.mxu0 0.0
    %2082 = vmatprep.subr.mxu0 0.0
    %2083 = vmatpush1.msra.mxu0 0.0
    %2084 = vmatprep.subr.mxu0 0.0
    %2085 = vmatpush1.msra.mxu0 0.0
    %2086 = vmatprep.subr.mxu0 0.0
    %2087 = vmatpush1.msra.mxu0 0.0
    %2088 = vmatprep.subr.mxu0 0.0
    %2089 = vmatpush1.msra.mxu0 0.0
    %2090 = vmatprep.subr.mxu0 0.0
    %2091 = vmatpush1.msra.mxu0 0.0
    %2092 = vmatprep.subr.mxu0 0.0
    %2093 = vmatpush1.msra.mxu0 0.0
    %2094 = vmatprep.subr.mxu0 0.0
    %2095 = vmatpush1.msra.mxu0 0.0
    %2096 = vmatprep.subr.mxu0 0.0
    %2097 = vmatpush1.msra.mxu0 0.0
    %2098 = vmatprep.subr.mxu0 0.0
    %2099 = vmatpush1.msra.mxu0 0.0
    %2100 = vmatprep.subr.mxu0 0.0
    %2101 = vmatpush1.msra.mxu0 0.0
    %2102 = vmatprep.subr.mxu0 0.0
    %2103 = vmatpush1.msra.mxu0 0.0
    %2104 = vmatprep.subr.mxu0 0.0
    %2105 = vmatpush1.msra.mxu0 0.0
    %2106 = vmatprep.mubr.f32.mxu0 0.0
    %2107 = vmatmul.mubr.f32.gmra.mrb[0].mxu0 %v2040
    %v2108 = vpop.f32.mrb[0].mxu0
    %v2109 = vadd.f32 0.0, %v2108
    %v2110 = vpop.f32.mrb[0].mxu0
    %2111 = vdwg.mxu0
    %2112 = vrot.lane.b32.xlu0 %v1789, 64
    %v2113 = vpop.permute.xlu0 %2112
    %v2115 = vmul.f32 %v2035, %v2113
    %2116 = vrot.lane.b32.xlu0 %v1794, 64
    %v2117 = vpop.permute.xlu0 %2116
    %v2119 = vmul.f32 %v2109, %v2117
    %v2120 = vadd.f32 %v2115, %v2119
    %2122 = vrot.lane.b32.xlu0 %v2120, 64
    %v2123 = vpop.permute.xlu0 %2122
    %2124 = vrot.lane.b32.xlu0 %v2123, 64
    %v2125 = vpop.permute.xlu0 %2124
    %v2126 = vsel %vm79, %v2113, 0
    %v2128 = vsel %vm79, %v2125, 0
    %2130 = vmatprep.subr.mxu0 0.0
    %2131 = vmatpush1.msra.mxu0 %v536
    %2132 = vmatprep.subr.mxu0 0.0
    %2133 = vmatpush1.msra.mxu0 %v537
    %2134 = vmatprep.subr.mxu0 0.0
    %2135 = vmatpush1.msra.mxu0 %v538
    %2136 = vmatprep.subr.mxu0 0.0
    %2137 = vmatpush1.msra.mxu0 %v539
    %2138 = vmatprep.subr.mxu0 0.0
    %2139 = vmatpush1.msra.mxu0 0.0
    %2140 = vmatprep.subr.mxu0 0.0
    %2141 = vmatpush1.msra.mxu0 0.0
    %2142 = vmatprep.subr.mxu0 0.0
    %2143 = vmatpush1.msra.mxu0 0.0
    %2144 = vmatprep.subr.mxu0 0.0
    %2145 = vmatpush1.msra.mxu0 0.0
    %2146 = vmatprep.subr.mxu0 0.0
    %2147 = vmatpush1.msra.mxu0 0.0
    %2148 = vmatprep.subr.mxu0 0.0
    %2149 = vmatpush1.msra.mxu0 0.0
    %2150 = vmatprep.subr.mxu0 0.0
    %2151 = vmatpush1.msra.mxu0 0.0
    %2152 = vmatprep.subr.mxu0 0.0
    %2153 = vmatpush1.msra.mxu0 0.0
    %2154 = vmatprep.subr.mxu0 0.0
    %2155 = vmatpush1.msra.mxu0 0.0
    %2156 = vmatprep.subr.mxu0 0.0
    %2157 = vmatpush1.msra.mxu0 0.0
    %2158 = vmatprep.subr.mxu0 0.0
    %2159 = vmatpush1.msra.mxu0 0.0
    %2160 = vmatprep.subr.mxu0 0.0
    %2161 = vmatpush1.msra.mxu0 0.0
    %2162 = vmatprep.subr.mxu0 0.0
    %2163 = vmatpush1.msra.mxu0 0.0
    %2164 = vmatprep.subr.mxu0 0.0
    %2165 = vmatpush1.msra.mxu0 0.0
    %2166 = vmatprep.subr.mxu0 0.0
    %2167 = vmatpush1.msra.mxu0 0.0
    %2168 = vmatprep.subr.mxu0 0.0
    %2169 = vmatpush1.msra.mxu0 0.0
    %2170 = vmatprep.subr.mxu0 0.0
    %2171 = vmatpush1.msra.mxu0 0.0
    %2172 = vmatprep.subr.mxu0 0.0
    %2173 = vmatpush1.msra.mxu0 0.0
    %2174 = vmatprep.subr.mxu0 0.0
    %2175 = vmatpush1.msra.mxu0 0.0
    %2176 = vmatprep.subr.mxu0 0.0
    %2177 = vmatpush1.msra.mxu0 0.0
    %2178 = vmatprep.subr.mxu0 0.0
    %2179 = vmatpush1.msra.mxu0 0.0
    %2180 = vmatprep.subr.mxu0 0.0
    %2181 = vmatpush1.msra.mxu0 0.0
    %2182 = vmatprep.subr.mxu0 0.0
    %2183 = vmatpush1.msra.mxu0 0.0
    %2184 = vmatprep.subr.mxu0 0.0
    %2185 = vmatpush1.msra.mxu0 0.0
    %2186 = vmatprep.subr.mxu0 0.0
    %2187 = vmatpush1.msra.mxu0 0.0
    %2188 = vmatprep.subr.mxu0 0.0
    %2189 = vmatpush1.msra.mxu0 0.0
    %2190 = vmatprep.subr.mxu0 0.0
    %2191 = vmatpush1.msra.mxu0 0.0
    %2192 = vmatprep.subr.mxu0 0.0
    %2193 = vmatpush1.msra.mxu0 0.0
    %2194 = vmatprep.mubr.f32.mxu0 0.0
    %2195 = vmatmul.mubr.f32.gmra.mrb[0].mxu0 %v2126
    %v2196 = vpop.f32.mrb[0].mxu0
    %v2197 = vadd.f32 0.0, %v2196
    %v2198 = vpop.f32.mrb[0].mxu0
    %2199 = vmatprep.mubr.f32.mxu0 0.0
    %2200 = vmatmul.mubr.f32.gmra.mrb[0].mxu0 %v2128
    %v2201 = vpop.f32.mrb[0].mxu0
    %v2202 = vadd.f32 0.0, %v2201
    %v2203 = vpop.f32.mrb[0].mxu0
    %2204 = vdwg.mxu0
    %v2205 = vadd.f32 %v1684, %v2197
    %v2206 = vadd.f32 %v1685, %v2202
    %v2207 = vsel %vm79, %v2205, 0.0
    %2208 = vadd.xlane.f32.xlu0 %v2207
    %v2209 = vpop.xlane.xlu0 %2208
    %v2210 = vsel %vm79, %v2206, 0.0
    %2211 = vadd.xlane.f32.xlu0 %v2210
    %v2212 = vpop.xlane.xlu0 %2211
    %v2213 = vmul.f32 %v2209, %v86
    %v2214 = vmul.f32 %v2212, %v86
    %v2215 = vsub.f32 %v2205, %v2213
    %v2216 = vsub.f32 %v2206, %v2214
    %v2217 = vmul.f32 %v2215, %v2215
    %v2218 = vmul.f32 %v2216, %v2216
    %v2219 = vsel %vm79, %v2217, 0.0
    %2220 = vadd.xlane.f32.xlu0 %v2219
    %v2221 = vpop.xlane.xlu0 %2220
    %v2222 = vsel %vm79, %v2218, 0.0
    %2223 = vadd.xlane.f32.xlu0 %v2222
    %v2224 = vpop.xlane.xlu0 %2223
    %v2225 = vmul.f32 %v2221, %v86
    %v2226 = vmul.f32 %v2224, %v86
    %v2227 = vadd.f32 %v2225, 1e-05
    %v2228 = vadd.f32 %v2226, 1e-05
    %v2229 = vrsqrt.pop %v2227
    %v2230 = vrsqrt.pop %v2228
    %v2231 = vmul.f32 %v2215, %v2229
    %v2232 = vmul.f32 %v2216, %v2230
    %v2233 = vmul.f32 %v2231, %v654
    %v2234 = vmul.f32 %v2232, %v654
    %v2235 = vadd.f32 %v2233, %v660
    %v2236 = vadd.f32 %v2234, %v660
    %v2238 = vsel %vm79, %v2235, 0
    %v2241 = vsel %vm79, %v2236, 0
    %2243 = vmatprep.subr.mxu0 0.0
    %2244 = vmatpush1.msra.mxu0 %v663
    %2245 = vmatprep.subr.mxu0 0.0
    %2246 = vmatpush1.msra.mxu0 %v664
    %2247 = vmatprep.subr.mxu0 0.0
    %2248 = vmatpush1.msra.mxu0 %v665
    %2249 = vmatprep.subr.mxu0 0.0
    %2250 = vmatpush1.msra.mxu0 %v666
    %2251 = vmatprep.subr.mxu0 0.0
    %2252 = vmatpush1.msra.mxu0 0.0
    %2253 = vmatprep.subr.mxu0 0.0
    %2254 = vmatpush1.msra.mxu0 0.0
    %2255 = vmatprep.subr.mxu0 0.0
    %2256 = vmatpush1.msra.mxu0 0.0
    %2257 = vmatprep.subr.mxu0 0.0
    %2258 = vmatpush1.msra.mxu0 0.0
    %2259 = vmatprep.subr.mxu0 0.0
    %2260 = vmatpush1.msra.mxu0 0.0
    %2261 = vmatprep.subr.mxu0 0.0
    %2262 = vmatpush1.msra.mxu0 0.0
    %2263 = vmatprep.subr.mxu0 0.0
    %2264 = vmatpush1.msra.mxu0 0.0
    %2265 = vmatprep.subr.mxu0 0.0
    %2266 = vmatpush1.msra.mxu0 0.0
    %2267 = vmatprep.subr.mxu0 0.0
    %2268 = vmatpush1.msra.mxu0 0.0
    %2269 = vmatprep.subr.mxu0 0.0
    %2270 = vmatpush1.msra.mxu0 0.0
    %2271 = vmatprep.subr.mxu0 0.0
    %2272 = vmatpush1.msra.mxu0 0.0
    %2273 = vmatprep.subr.mxu0 0.0
    %2274 = vmatpush1.msra.mxu0 0.0
    %2275 = vmatprep.subr.mxu0 0.0
    %2276 = vmatpush1.msra.mxu0 0.0
    %2277 = vmatprep.subr.mxu0 0.0
    %2278 = vmatpush1.msra.mxu0 0.0
    %2279 = vmatprep.subr.mxu0 0.0
    %2280 = vmatpush1.msra.mxu0 0.0
    %2281 = vmatprep.subr.mxu0 0.0
    %2282 = vmatpush1.msra.mxu0 0.0
    %2283 = vmatprep.subr.mxu0 0.0
    %2284 = vmatpush1.msra.mxu0 0.0
    %2285 = vmatprep.subr.mxu0 0.0
    %2286 = vmatpush1.msra.mxu0 0.0
    %2287 = vmatprep.subr.mxu0 0.0
    %2288 = vmatpush1.msra.mxu0 0.0
    %2289 = vmatprep.subr.mxu0 0.0
    %2290 = vmatpush1.msra.mxu0 0.0
    %2291 = vmatprep.subr.mxu0 0.0
    %2292 = vmatpush1.msra.mxu0 0.0
    %2293 = vmatprep.subr.mxu0 0.0
    %2294 = vmatpush1.msra.mxu0 0.0
    %2295 = vmatprep.subr.mxu0 0.0
    %2296 = vmatpush1.msra.mxu0 0.0
    %2297 = vmatprep.subr.mxu0 0.0
    %2298 = vmatpush1.msra.mxu0 0.0
    %2299 = vmatprep.subr.mxu0 0.0
    %2300 = vmatpush1.msra.mxu0 0.0
    %2301 = vmatprep.subr.mxu0 0.0
    %2302 = vmatpush1.msra.mxu0 0.0
    %2303 = vmatprep.subr.mxu0 0.0
    %2304 = vmatpush1.msra.mxu0 0.0
    %2305 = vmatprep.subr.mxu0 0.0
    %2306 = vmatpush1.msra.mxu0 0.0
    %2307 = vmatprep.mubr.f32.mxu0 0.0
    %2308 = vmatmul.mubr.f32.gmra.mrb[0].mxu0 %v2238
    %v2309 = vpop.f32.mrb[0].mxu0
    %v2310 = vadd.f32 %v671, %v2309
    %v2311 = vpop.f32.mrb[0].mxu0
    %2312 = vmatprep.mubr.f32.mxu0 0.0
    %2313 = vmatmul.mubr.f32.gmra.mrb[0].mxu0 %v2241
    %v2314 = vpop.f32.mrb[0].mxu0
    %v2315 = vadd.f32 %v671, %v2314
    %v2316 = vpop.f32.mrb[0].mxu0
    %2317 = vdwg.mxu0
    %v2318 = vmul.f32 %v2310, %v2310
    %v2319 = vmul.f32 %v2315, %v2315
    %v2320 = vmul.f32 %v2310, %v2318
    %v2321 = vmul.f32 %v2315, %v2319
    %v2322 = vmul.f32 %v2320, 0.044715
    %v2323 = vmul.f32 %v2321, 0.044715
    %v2324 = vadd.f32 %v2310, %v2322
    %v2325 = vadd.f32 %v2315, %v2323
    %v2326 = vmul.f32 %v2324, 0.7978846
    %v2327 = vmul.f32 %v2325, 0.7978846
    %v2328 = vtanh.pop %v2326
    %v2329 = vtanh.pop %v2327
    %v2330 = vadd.f32 %v2328, 1.0
    %v2331 = vadd.f32 %v2329, 1.0
    %v2332 = vmul.f32 %v2330, 0.5
    %v2333 = vmul.f32 %v2331, 0.5
    %v2334 = vmul.f32 %v2310, %v2332
    %v2335 = vmul.f32 %v2315, %v2333
    %2336 = vmatprep.subr.mxu0 0.0
    %2337 = vmatpush1.msra.mxu0 %v771
    %2338 = vmatprep.subr.mxu0 0.0
    %2339 = vmatpush1.msra.mxu0 %v772
    %2340 = vmatprep.subr.mxu0 0.0
    %2341 = vmatpush1.msra.mxu0 %v773
    %2342 = vmatprep.subr.mxu0 0.0
    %2343 = vmatpush1.msra.mxu0 %v774
    %2344 = vmatprep.subr.mxu0 0.0
    %2345 = vmatpush1.msra.mxu0 %v775
    %2346 = vmatprep.subr.mxu0 0.0
    %2347 = vmatpush1.msra.mxu0 %v776
    %2348 = vmatprep.subr.mxu0 0.0
    %2349 = vmatpush1.msra.mxu0 %v777
    %2350 = vmatprep.subr.mxu0 0.0
    %2351 = vmatpush1.msra.mxu0 %v778
    %2352 = vmatprep.subr.mxu0 0.0
    %2353 = vmatpush1.msra.mxu0 %v779
    %2354 = vmatprep.subr.mxu0 0.0
    %2355 = vmatpush1.msra.mxu0 %v780
    %2356 = vmatprep.subr.mxu0 0.0
    %2357 = vmatpush1.msra.mxu0 %v781
    %2358 = vmatprep.subr.mxu0 0.0
    %2359 = vmatpush1.msra.mxu0 %v782
    %2360 = vmatprep.subr.mxu0 0.0
    %2361 = vmatpush1.msra.mxu0 %v783
    %2362 = vmatprep.subr.mxu0 0.0
    %2363 = vmatpush1.msra.mxu0 %v784
    %2364 = vmatprep.subr.mxu0 0.0
    %2365 = vmatpush1.msra.mxu0 %v785
    %2366 = vmatprep.subr.mxu0 0.0
    %2367 = vmatpush1.msra.mxu0 %v786
    %2368 = vmatprep.subr.mxu0 0.0
    %2369 = vmatpush1.msra.mxu0 0.0
    %2370 = vmatprep.subr.mxu0 0.0
    %2371 = vmatpush1.msra.mxu0 0.0
    %2372 = vmatprep.subr.mxu0 0.0
    %2373 = vmatpush1.msra.mxu0 0.0
    %2374 = vmatprep.subr.mxu0 0.0
    %2375 = vmatpush1.msra.mxu0 0.0
    %2376 = vmatprep.subr.mxu0 0.0
    %2377 = vmatpush1.msra.mxu0 0.0
    %2378 = vmatprep.subr.mxu0 0.0
    %2379 = vmatpush1.msra.mxu0 0.0
    %2380 = vmatprep.subr.mxu0 0.0
    %2381 = vmatpush1.msra.mxu0 0.0
    %2382 = vmatprep.subr.mxu0 0.0
    %2383 = vmatpush1.msra.mxu0 0.0
    %2384 = vmatprep.subr.mxu0 0.0
    %2385 = vmatpush1.msra.mxu0 0.0
    %2386 = vmatprep.subr.mxu0 0.0
    %2387 = vmatpush1.msra.mxu0 0.0
    %2388 = vmatprep.subr.mxu0 0.0
    %2389 = vmatpush1.msra.mxu0 0.0
    %2390 = vmatprep.subr.mxu0 0.0
    %2391 = vmatpush1.msra.mxu0 0.0
    %2392 = vmatprep.subr.mxu0 0.0
    %2393 = vmatpush1.msra.mxu0 0.0
    %2394 = vmatprep.subr.mxu0 0.0
    %2395 = vmatpush1.msra.mxu0 0.0
    %2396 = vmatprep.subr.mxu0 0.0
    %2397 = vmatpush1.msra.mxu0 0.0
    %2398 = vmatprep.subr.mxu0 0.0
    %2399 = vmatpush1.msra.mxu0 0.0
    %2400 = vmatprep.mubr.f32.mxu0 0.0
    %2401 = vmatmul.mubr.f32.gmra.mrb[0].mxu0 %v2334
    %v2402 = vpop.f32.mrb[0].mxu0
    %v2403 = vadd.f32 0.0, %v2402
    %v2404 = vpop.f32.mrb[0].mxu0
    %2405 = vmatprep.mubr.f32.mxu0 0.0
    %2406 = vmatmul.mubr.f32.gmra.mrb[0].mxu0 %v2335
    %v2407 = vpop.f32.mrb[0].mxu0
    %v2408 = vadd.f32 0.0, %v2407
    %v2409 = vpop.f32.mrb[0].mxu0
    %2410 = vdwg.mxu0
    %v2411 = vadd.f32 %v2205, %v2403
    %v2412 = vadd.f32 %v2206, %v2408
    %v2413 = vadd.f32 %v2411, %v868
    %v2414 = vadd.f32 %v2412, %v868
    %v2415 = vsel %vm79, %v2413, 0.0
    %2416 = vadd.xlane.f32.xlu0 %v2415
    %v2417 = vpop.xlane.xlu0 %2416
    %v2418 = vsel %vm79, %v2414, 0.0
    %2419 = vadd.xlane.f32.xlu0 %v2418
    %v2420 = vpop.xlane.xlu0 %2419
    %v2421 = vmul.f32 %v2417, %v86
    %v2422 = vmul.f32 %v2420, %v86
    %v2423 = vsub.f32 %v2413, %v2421
    %v2424 = vsub.f32 %v2414, %v2422
    %v2425 = vmul.f32 %v2423, %v2423
    %v2426 = vmul.f32 %v2424, %v2424
    %v2427 = vsel %vm79, %v2425, 0.0
    %2428 = vadd.xlane.f32.xlu0 %v2427
    %v2429 = vpop.xlane.xlu0 %2428
    %v2430 = vsel %vm79, %v2426, 0.0
    %2431 = vadd.xlane.f32.xlu0 %v2430
    %v2432 = vpop.xlane.xlu0 %2431
    %v2433 = vmul.f32 %v2429, %v86
    %v2434 = vmul.f32 %v2432, %v86
    %v2435 = vadd.f32 %v2433, 1e-05
    %v2436 = vadd.f32 %v2434, 1e-05
    %v2437 = vrsqrt.pop %v2435
    %v2438 = vrsqrt.pop %v2436
    %v2439 = vmul.f32 %v2423, %v2437
    %v2440 = vmul.f32 %v2424, %v2438
    %v2441 = vmul.f32 %v2439, %v902
    %v2442 = vmul.f32 %v2440, %v902
    %v2443 = vadd.f32 %v2441, %v908
    %v2444 = vadd.f32 %v2442, %v908
    %v2446 = vsel %vm79, %v2443, 0
    %v2449 = vsel %vm79, %v2444, 0
    %2451 = vmatprep.subr.mxu0 0.0
    %2452 = vmatpush1.msra.mxu0 %v911
    %2453 = vmatprep.subr.mxu0 0.0
    %2454 = vmatpush1.msra.mxu0 %v912
    %2455 = vmatprep.subr.mxu0 0.0
    %2456 = vmatpush1.msra.mxu0 %v913
    %2457 = vmatprep.subr.mxu0 0.0
    %2458 = vmatpush1.msra.mxu0 %v914
    %2459 = vmatprep.subr.mxu0 0.0
    %2460 = vmatpush1.msra.mxu0 0.0
    %2461 = vmatprep.subr.mxu0 0.0
    %2462 = vmatpush1.msra.mxu0 0.0
    %2463 = vmatprep.subr.mxu0 0.0
    %2464 = vmatpush1.msra.mxu0 0.0
    %2465 = vmatprep.subr.mxu0 0.0
    %2466 = vmatpush1.msra.mxu0 0.0
    %2467 = vmatprep.subr.mxu0 0.0
    %2468 = vmatpush1.msra.mxu0 0.0
    %2469 = vmatprep.subr.mxu0 0.0
    %2470 = vmatpush1.msra.mxu0 0.0
    %2471 = vmatprep.subr.mxu0 0.0
    %2472 = vmatpush1.msra.mxu0 0.0
    %2473 = vmatprep.subr.mxu0 0.0
    %2474 = vmatpush1.msra.mxu0 0.0
    %2475 = vmatprep.subr.mxu0 0.0
    %2476 = vmatpush1.msra.mxu0 0.0
    %2477 = vmatprep.subr.mxu0 0.0
    %2478 = vmatpush1.msra.mxu0 0.0
    %2479 = vmatprep.subr.mxu0 0.0
    %2480 = vmatpush1.msra.mxu0 0.0
    %2481 = vmatprep.subr.mxu0 0.0
    %2482 = vmatpush1.msra.mxu0 0.0
    %2483 = vmatprep.subr.mxu0 0.0
    %2484 = vmatpush1.msra.mxu0 0.0
    %2485 = vmatprep.subr.mxu0 0.0
    %2486 = vmatpush1.msra.mxu0 0.0
    %2487 = vmatprep.subr.mxu0 0.0
    %2488 = vmatpush1.msra.mxu0 0.0
    %2489 = vmatprep.subr.mxu0 0.0
    %2490 = vmatpush1.msra.mxu0 0.0
    %2491 = vmatprep.subr.mxu0 0.0
    %2492 = vmatpush1.msra.mxu0 0.0
    %2493 = vmatprep.subr.mxu0 0.0
    %2494 = vmatpush1.msra.mxu0 0.0
    %2495 = vmatprep.subr.mxu0 0.0
    %2496 = vmatpush1.msra.mxu0 0.0
    %2497 = vmatprep.subr.mxu0 0.0
    %2498 = vmatpush1.msra.mxu0 0.0
    %2499 = vmatprep.subr.mxu0 0.0
    %2500 = vmatpush1.msra.mxu0 0.0
    %2501 = vmatprep.subr.mxu0 0.0
    %2502 = vmatpush1.msra.mxu0 0.0
    %2503 = vmatprep.subr.mxu0 0.0
    %2504 = vmatpush1.msra.mxu0 0.0
    %2505 = vmatprep.subr.mxu0 0.0
    %2506 = vmatpush1.msra.mxu0 0.0
    %2507 = vmatprep.subr.mxu0 0.0
    %2508 = vmatpush1.msra.mxu0 0.0
    %2509 = vmatprep.subr.mxu0 0.0
    %2510 = vmatpush1.msra.mxu0 0.0
    %2511 = vmatprep.subr.mxu0 0.0
    %2512 = vmatpush1.msra.mxu0 0.0
    %2513 = vmatprep.subr.mxu0 0.0
    %2514 = vmatpush1.msra.mxu0 0.0
    %2515 = vmatprep.mubr.f32.mxu0 0.0
    %2516 = vmatmul.mubr.f32.gmra.mrb[0].mxu0 %v2446
    %v2517 = vpop.f32.mrb[0].mxu0
    %v2518 = vadd.f32 0.0, %v2517
    %v2519 = vpop.f32.mrb[0].mxu0
    %2520 = vmatprep.mubr.f32.mxu0 0.0
    %2521 = vmatmul.mubr.f32.gmra.mrb[0].mxu0 %v2449
    %v2522 = vpop.f32.mrb[0].mxu0
    %v2523 = vadd.f32 0.0, %v2522
    %v2524 = vpop.f32.mrb[0].mxu0
    %2525 = vdwg.mxu0
    %2527 = vrot.lane.b32.xlu0 %v2518, 96
    %v2528 = vpop.permute.xlu0 %2527
    %v2530 = vmul.f32 %v2523, %v2528
    %v2532 = vsel %vm79, %v2530, 0
    %2534 = vmatprep.subr.mxu0 0.0
    %2535 = vmatpush1.msra.mxu0 %v36
    %2536 = vmatprep.subr.mxu0 0.0
    %2537 = vmatpush1.msra.mxu0 %v37
    %2538 = vmatprep.subr.mxu0 0.0
    %2539 = vmatpush1.msra.mxu0 %v38
    %2540 = vmatprep.subr.mxu0 0.0
    %2541 = vmatpush1.msra.mxu0 %v39
    %2542 = vmatprep.subr.mxu0 0.0
    %2543 = vmatpush1.msra.mxu0 0.0
    %2544 = vmatprep.subr.mxu0 0.0
    %2545 = vmatpush1.msra.mxu0 0.0
    %2546 = vmatprep.subr.mxu0 0.0
    %2547 = vmatpush1.msra.mxu0 0.0
    %2548 = vmatprep.subr.mxu0 0.0
    %2549 = vmatpush1.msra.mxu0 0.0
    %2550 = vmatprep.subr.mxu0 0.0
    %2551 = vmatpush1.msra.mxu0 0.0
    %2552 = vmatprep.subr.mxu0 0.0
    %2553 = vmatpush1.msra.mxu0 0.0
    %2554 = vmatprep.subr.mxu0 0.0
    %2555 = vmatpush1.msra.mxu0 0.0
    %2556 = vmatprep.subr.mxu0 0.0
    %2557 = vmatpush1.msra.mxu0 0.0
    %2558 = vmatprep.subr.mxu0 0.0
    %2559 = vmatpush1.msra.mxu0 0.0
    %2560 = vmatprep.subr.mxu0 0.0
    %2561 = vmatpush1.msra.mxu0 0.0
    %2562 = vmatprep.subr.mxu0 0.0
    %2563 = vmatpush1.msra.mxu0 0.0
    %2564 = vmatprep.subr.mxu0 0.0
    %2565 = vmatpush1.msra.mxu0 0.0
    %2566 = vmatprep.subr.mxu0 0.0
    %2567 = vmatpush1.msra.mxu0 0.0
    %2568 = vmatprep.subr.mxu0 0.0
    %2569 = vmatpush1.msra.mxu0 0.0
    %2570 = vmatprep.subr.mxu0 0.0
    %2571 = vmatpush1.msra.mxu0 0.0
    %2572 = vmatprep.subr.mxu0 0.0
    %2573 = vmatpush1.msra.mxu0 0.0
    %2574 = vmatprep.subr.mxu0 0.0
    %2575 = vmatpush1.msra.mxu0 0.0
    %2576 = vmatprep.subr.mxu0 0.0
    %2577 = vmatpush1.msra.mxu0 0.0
    %2578 = vmatprep.subr.mxu0 0.0
    %2579 = vmatpush1.msra.mxu0 0.0
    %2580 = vmatprep.subr.mxu0 0.0
    %2581 = vmatpush1.msra.mxu0 0.0
    %2582 = vmatprep.subr.mxu0 0.0
    %2583 = vmatpush1.msra.mxu0 0.0
    %2584 = vmatprep.subr.mxu0 0.0
    %2585 = vmatpush1.msra.mxu0 0.0
    %2586 = vmatprep.subr.mxu0 0.0
    %2587 = vmatpush1.msra.mxu0 0.0
    %2588 = vmatprep.subr.mxu0 0.0
    %2589 = vmatpush1.msra.mxu0 0.0
    %2590 = vmatprep.subr.mxu0 0.0
    %2591 = vmatpush1.msra.mxu0 0.0
    %2592 = vmatprep.subr.mxu0 0.0
    %2593 = vmatpush1.msra.mxu0 0.0
    %2594 = vmatprep.subr.mxu0 0.0
    %2595 = vmatpush1.msra.mxu0 0.0
    %2596 = vmatprep.subr.mxu0 0.0
    %2597 = vmatpush1.msra.mxu0 0.0
    %2598 = vmatprep.mubr.f32.mxu0 0.0
    %2599 = vmatmul.mubr.f32.gmra.mrb[0].mxu0 %v2532
    %v2600 = vpop.f32.mrb[0].mxu0
    %v2601 = vadd.f32 0.0, %v2600
    %v2602 = vpop.f32.mrb[0].mxu0
    %2603 = vdwg.mxu0
    %v2604 = vmul.f32 %v2601, 0.35355338
    %2606 = vrot.lane.b32.xlu0 %v2523, 96
    %v2607 = vpop.permute.xlu0 %2606
    %v2609 = vmul.f32 %v2523, %v2607
    %v2611 = vsel %vm79, %v2609, 0
    %2613 = vmatprep.subr.mxu0 0.0
    %2614 = vmatpush1.msra.mxu0 %v36
    %2615 = vmatprep.subr.mxu0 0.0
    %2616 = vmatpush1.msra.mxu0 %v37
    %2617 = vmatprep.subr.mxu0 0.0
    %2618 = vmatpush1.msra.mxu0 %v38
    %2619 = vmatprep.subr.mxu0 0.0
    %2620 = vmatpush1.msra.mxu0 %v39
    %2621 = vmatprep.subr.mxu0 0.0
    %2622 = vmatpush1.msra.mxu0 0.0
    %2623 = vmatprep.subr.mxu0 0.0
    %2624 = vmatpush1.msra.mxu0 0.0
    %2625 = vmatprep.subr.mxu0 0.0
    %2626 = vmatpush1.msra.mxu0 0.0
    %2627 = vmatprep.subr.mxu0 0.0
    %2628 = vmatpush1.msra.mxu0 0.0
    %2629 = vmatprep.subr.mxu0 0.0
    %2630 = vmatpush1.msra.mxu0 0.0
    %2631 = vmatprep.subr.mxu0 0.0
    %2632 = vmatpush1.msra.mxu0 0.0
    %2633 = vmatprep.subr.mxu0 0.0
    %2634 = vmatpush1.msra.mxu0 0.0
    %2635 = vmatprep.subr.mxu0 0.0
    %2636 = vmatpush1.msra.mxu0 0.0
    %2637 = vmatprep.subr.mxu0 0.0
    %2638 = vmatpush1.msra.mxu0 0.0
    %2639 = vmatprep.subr.mxu0 0.0
    %2640 = vmatpush1.msra.mxu0 0.0
    %2641 = vmatprep.subr.mxu0 0.0
    %2642 = vmatpush1.msra.mxu0 0.0
    %2643 = vmatprep.subr.mxu0 0.0
    %2644 = vmatpush1.msra.mxu0 0.0
    %2645 = vmatprep.subr.mxu0 0.0
    %2646 = vmatpush1.msra.mxu0 0.0
    %2647 = vmatprep.subr.mxu0 0.0
    %2648 = vmatpush1.msra.mxu0 0.0
    %2649 = vmatprep.subr.mxu0 0.0
    %2650 = vmatpush1.msra.mxu0 0.0
    %2651 = vmatprep.subr.mxu0 0.0
    %2652 = vmatpush1.msra.mxu0 0.0
    %2653 = vmatprep.subr.mxu0 0.0
    %2654 = vmatpush1.msra.mxu0 0.0
    %2655 = vmatprep.subr.mxu0 0.0
    %2656 = vmatpush1.msra.mxu0 0.0
    %2657 = vmatprep.subr.mxu0 0.0
    %2658 = vmatpush1.msra.mxu0 0.0
    %2659 = vmatprep.subr.mxu0 0.0
    %2660 = vmatpush1.msra.mxu0 0.0
    %2661 = vmatprep.subr.mxu0 0.0
    %2662 = vmatpush1.msra.mxu0 0.0
    %2663 = vmatprep.subr.mxu0 0.0
    %2664 = vmatpush1.msra.mxu0 0.0
    %2665 = vmatprep.subr.mxu0 0.0
    %2666 = vmatpush1.msra.mxu0 0.0
    %2667 = vmatprep.subr.mxu0 0.0
    %2668 = vmatpush1.msra.mxu0 0.0
    %2669 = vmatprep.subr.mxu0 0.0
    %2670 = vmatpush1.msra.mxu0 0.0
    %2671 = vmatprep.subr.mxu0 0.0
    %2672 = vmatpush1.msra.mxu0 0.0
    %2673 = vmatprep.subr.mxu0 0.0
    %2674 = vmatpush1.msra.mxu0 0.0
    %2675 = vmatprep.subr.mxu0 0.0
    %2676 = vmatpush1.msra.mxu0 0.0
    %2677 = vmatprep.mubr.f32.mxu0 0.0
    %2678 = vmatmul.mubr.f32.gmra.mrb[0].mxu0 %v2611
    %v2679 = vpop.f32.mrb[0].mxu0
    %v2680 = vadd.f32 0.0, %v2679
    %v2681 = vpop.f32.mrb[0].mxu0
    %2682 = vdwg.mxu0
    %v2683 = vmul.f32 %v2680, 0.35355338
    %v2684 = vmax.f32 %v2604, %v2683
    %v2685 = vsub.f32 %v2604, %v2684
    %v2686 = vmul.f32 %v2685, 1.442695
    %v2687 = vpow.pop %v2686
    %v2688 = vsub.f32 %v2683, %v2684
    %v2689 = vmul.f32 %v2688, 1.442695
    %v2690 = vpow.pop %v2689
    %v2691 = vadd.f32 %v2687, %v2690
    %v2692 = vrcp.pop %v2691
    %v2693 = vmul.f32 %v2687, %v2692
    %v2695 = vsel %vm372, %v2693, 0
    %2697 = vmatprep.subr.mxu0 0.0
    %2698 = vmatpush1.msra.mxu0 %v378
    %2699 = vmatprep.subr.mxu0 0.0
    %2700 = vmatpush1.msra.mxu0 0.0
    %2701 = vmatprep.subr.mxu0 0.0
    %2702 = vmatpush1.msra.mxu0 0.0
    %2703 = vmatprep.subr.mxu0 0.0
    %2704 = vmatpush1.msra.mxu0 0.0
    %2705 = vmatprep.subr.mxu0 0.0
    %2706 = vmatpush1.msra.mxu0 0.0
    %2707 = vmatprep.subr.mxu0 0.0
    %2708 = vmatpush1.msra.mxu0 0.0
    %2709 = vmatprep.subr.mxu0 0.0
    %2710 = vmatpush1.msra.mxu0 0.0
    %2711 = vmatprep.subr.mxu0 0.0
    %2712 = vmatpush1.msra.mxu0 0.0
    %2713 = vmatprep.subr.mxu0 0.0
    %2714 = vmatpush1.msra.mxu0 0.0
    %2715 = vmatprep.subr.mxu0 0.0
    %2716 = vmatpush1.msra.mxu0 0.0
    %2717 = vmatprep.subr.mxu0 0.0
    %2718 = vmatpush1.msra.mxu0 0.0
    %2719 = vmatprep.subr.mxu0 0.0
    %2720 = vmatpush1.msra.mxu0 0.0
    %2721 = vmatprep.subr.mxu0 0.0
    %2722 = vmatpush1.msra.mxu0 0.0
    %2723 = vmatprep.subr.mxu0 0.0
    %2724 = vmatpush1.msra.mxu0 0.0
    %2725 = vmatprep.subr.mxu0 0.0
    %2726 = vmatpush1.msra.mxu0 0.0
    %2727 = vmatprep.subr.mxu0 0.0
    %2728 = vmatpush1.msra.mxu0 0.0
    %2729 = vmatprep.subr.mxu0 0.0
    %2730 = vmatpush1.msra.mxu0 0.0
    %2731 = vmatprep.subr.mxu0 0.0
    %2732 = vmatpush1.msra.mxu0 0.0
    %2733 = vmatprep.subr.mxu0 0.0
    %2734 = vmatpush1.msra.mxu0 0.0
    %2735 = vmatprep.subr.mxu0 0.0
    %2736 = vmatpush1.msra.mxu0 0.0
    %2737 = vmatprep.subr.mxu0 0.0
    %2738 = vmatpush1.msra.mxu0 0.0
    %2739 = vmatprep.subr.mxu0 0.0
    %2740 = vmatpush1.msra.mxu0 0.0
    %2741 = vmatprep.subr.mxu0 0.0
    %2742 = vmatpush1.msra.mxu0 0.0
    %2743 = vmatprep.subr.mxu0 0.0
    %2744 = vmatpush1.msra.mxu0 0.0
    %2745 = vmatprep.subr.mxu0 0.0
    %2746 = vmatpush1.msra.mxu0 0.0
    %2747 = vmatprep.subr.mxu0 0.0
    %2748 = vmatpush1.msra.mxu0 0.0
    %2749 = vmatprep.subr.mxu0 0.0
    %2750 = vmatpush1.msra.mxu0 0.0
    %2751 = vmatprep.subr.mxu0 0.0
    %2752 = vmatpush1.msra.mxu0 0.0
    %2753 = vmatprep.subr.mxu0 0.0
    %2754 = vmatpush1.msra.mxu0 0.0
    %2755 = vmatprep.subr.mxu0 0.0
    %2756 = vmatpush1.msra.mxu0 0.0
    %2757 = vmatprep.subr.mxu0 0.0
    %2758 = vmatpush1.msra.mxu0 0.0
    %2759 = vmatprep.subr.mxu0 0.0
    %2760 = vmatpush1.msra.mxu0 0.0
    %2761 = vmatprep.mubr.f32.mxu0 0.0
    %2762 = vmatmul.mubr.f32.gmra.mrb[0].mxu0 %v2695
    %v2763 = vpop.f32.mrb[0].mxu0
    %v2764 = vadd.f32 0.0, %v2763
    %v2765 = vpop.f32.mrb[0].mxu0
    %2766 = vdwg.mxu0
    %v2767 = vmul.f32 %v2690, %v2692
    %v2769 = vsel %vm372, %v2767, 0
    %2771 = vmatprep.subr.mxu0 0.0
    %2772 = vmatpush1.msra.mxu0 %v378
    %2773 = vmatprep.subr.mxu0 0.0
    %2774 = vmatpush1.msra.mxu0 0.0
    %2775 = vmatprep.subr.mxu0 0.0
    %2776 = vmatpush1.msra.mxu0 0.0
    %2777 = vmatprep.subr.mxu0 0.0
    %2778 = vmatpush1.msra.mxu0 0.0
    %2779 = vmatprep.subr.mxu0 0.0
    %2780 = vmatpush1.msra.mxu0 0.0
    %2781 = vmatprep.subr.mxu0 0.0
    %2782 = vmatpush1.msra.mxu0 0.0
    %2783 = vmatprep.subr.mxu0 0.0
    %2784 = vmatpush1.msra.mxu0 0.0
    %2785 = vmatprep.subr.mxu0 0.0
    %2786 = vmatpush1.msra.mxu0 0.0
    %2787 = vmatprep.subr.mxu0 0.0
    %2788 = vmatpush1.msra.mxu0 0.0
    %2789 = vmatprep.subr.mxu0 0.0
    %2790 = vmatpush1.msra.mxu0 0.0
    %2791 = vmatprep.subr.mxu0 0.0
    %2792 = vmatpush1.msra.mxu0 0.0
    %2793 = vmatprep.subr.mxu0 0.0
    %2794 = vmatpush1.msra.mxu0 0.0
    %2795 = vmatprep.subr.mxu0 0.0
    %2796 = vmatpush1.msra.mxu0 0.0
    %2797 = vmatprep.subr.mxu0 0.0
    %2798 = vmatpush1.msra.mxu0 0.0
    %2799 = vmatprep.subr.mxu0 0.0
    %2800 = vmatpush1.msra.mxu0 0.0
    %2801 = vmatprep.subr.mxu0 0.0
    %2802 = vmatpush1.msra.mxu0 0.0
    %2803 = vmatprep.subr.mxu0 0.0
    %2804 = vmatpush1.msra.mxu0 0.0
    %2805 = vmatprep.subr.mxu0 0.0
    %2806 = vmatpush1.msra.mxu0 0.0
    %2807 = vmatprep.subr.mxu0 0.0
    %2808 = vmatpush1.msra.mxu0 0.0
    %2809 = vmatprep.subr.mxu0 0.0
    %2810 = vmatpush1.msra.mxu0 0.0
    %2811 = vmatprep.subr.mxu0 0.0
    %2812 = vmatpush1.msra.mxu0 0.0
    %2813 = vmatprep.subr.mxu0 0.0
    %2814 = vmatpush1.msra.mxu0 0.0
    %2815 = vmatprep.subr.mxu0 0.0
    %2816 = vmatpush1.msra.mxu0 0.0
    %2817 = vmatprep.subr.mxu0 0.0
    %2818 = vmatpush1.msra.mxu0 0.0
    %2819 = vmatprep.subr.mxu0 0.0
    %2820 = vmatpush1.msra.mxu0 0.0
    %2821 = vmatprep.subr.mxu0 0.0
    %2822 = vmatpush1.msra.mxu0 0.0
    %2823 = vmatprep.subr.mxu0 0.0
    %2824 = vmatpush1.msra.mxu0 0.0
    %2825 = vmatprep.subr.mxu0 0.0
    %2826 = vmatpush1.msra.mxu0 0.0
    %2827 = vmatprep.subr.mxu0 0.0
    %2828 = vmatpush1.msra.mxu0 0.0
    %2829 = vmatprep.subr.mxu0 0.0
    %2830 = vmatpush1.msra.mxu0 0.0
    %2831 = vmatprep.subr.mxu0 0.0
    %2832 = vmatpush1.msra.mxu0 0.0
    %2833 = vmatprep.subr.mxu0 0.0
    %2834 = vmatpush1.msra.mxu0 0.0
    %2835 = vmatprep.mubr.f32.mxu0 0.0
    %2836 = vmatmul.mubr.f32.gmra.mrb[0].mxu0 %v2769
    %v2837 = vpop.f32.mrb[0].mxu0
    %v2838 = vadd.f32 0.0, %v2837
    %v2839 = vpop.f32.mrb[0].mxu0
    %2840 = vdwg.mxu0
    %2841 = vrot.lane.b32.xlu0 %v2518, 64
    %v2842 = vpop.permute.xlu0 %2841
    %v2844 = vmul.f32 %v2764, %v2842
    %2845 = vrot.lane.b32.xlu0 %v2523, 64
    %v2846 = vpop.permute.xlu0 %2845
    %v2848 = vmul.f32 %v2838, %v2846
    %v2849 = vadd.f32 %v2844, %v2848
    %2851 = vrot.lane.b32.xlu0 %v2849, 64
    %v2852 = vpop.permute.xlu0 %2851
    %2853 = vrot.lane.b32.xlu0 %v2852, 64
    %v2854 = vpop.permute.xlu0 %2853
    %v2855 = vsel %vm79, %v2842, 0
    %v2857 = vsel %vm79, %v2854, 0
    %2859 = vmatprep.subr.mxu0 0.0
    %2860 = vmatpush1.msra.mxu0 %v1323
    %2861 = vmatprep.subr.mxu0 0.0
    %2862 = vmatpush1.msra.mxu0 %v1324
    %2863 = vmatprep.subr.mxu0 0.0
    %2864 = vmatpush1.msra.mxu0 %v1325
    %2865 = vmatprep.subr.mxu0 0.0
    %2866 = vmatpush1.msra.mxu0 %v1326
    %2867 = vmatprep.subr.mxu0 0.0
    %2868 = vmatpush1.msra.mxu0 0.0
    %2869 = vmatprep.subr.mxu0 0.0
    %2870 = vmatpush1.msra.mxu0 0.0
    %2871 = vmatprep.subr.mxu0 0.0
    %2872 = vmatpush1.msra.mxu0 0.0
    %2873 = vmatprep.subr.mxu0 0.0
    %2874 = vmatpush1.msra.mxu0 0.0
    %2875 = vmatprep.subr.mxu0 0.0
    %2876 = vmatpush1.msra.mxu0 0.0
    %2877 = vmatprep.subr.mxu0 0.0
    %2878 = vmatpush1.msra.mxu0 0.0
    %2879 = vmatprep.subr.mxu0 0.0
    %2880 = vmatpush1.msra.mxu0 0.0
    %2881 = vmatprep.subr.mxu0 0.0
    %2882 = vmatpush1.msra.mxu0 0.0
    %2883 = vmatprep.subr.mxu0 0.0
    %2884 = vmatpush1.msra.mxu0 0.0
    %2885 = vmatprep.subr.mxu0 0.0
    %2886 = vmatpush1.msra.mxu0 0.0
    %2887 = vmatprep.subr.mxu0 0.0
    %2888 = vmatpush1.msra.mxu0 0.0
    %2889 = vmatprep.subr.mxu0 0.0
    %2890 = vmatpush1.msra.mxu0 0.0
    %2891 = vmatprep.subr.mxu0 0.0
    %2892 = vmatpush1.msra.mxu0 0.0
    %2893 = vmatprep.subr.mxu0 0.0
    %2894 = vmatpush1.msra.mxu0 0.0
    %2895 = vmatprep.subr.mxu0 0.0
    %2896 = vmatpush1.msra.mxu0 0.0
    %2897 = vmatprep.subr.mxu0 0.0
    %2898 = vmatpush1.msra.mxu0 0.0
    %2899 = vmatprep.subr.mxu0 0.0
    %2900 = vmatpush1.msra.mxu0 0.0
    %2901 = vmatprep.subr.mxu0 0.0
    %2902 = vmatpush1.msra.mxu0 0.0
    %2903 = vmatprep.subr.mxu0 0.0
    %2904 = vmatpush1.msra.mxu0 0.0
    %2905 = vmatprep.subr.mxu0 0.0
    %2906 = vmatpush1.msra.mxu0 0.0
    %2907 = vmatprep.subr.mxu0 0.0
    %2908 = vmatpush1.msra.mxu0 0.0
    %2909 = vmatprep.subr.mxu0 0.0
    %2910 = vmatpush1.msra.mxu0 0.0
    %2911 = vmatprep.subr.mxu0 0.0
    %2912 = vmatpush1.msra.mxu0 0.0
    %2913 = vmatprep.subr.mxu0 0.0
    %2914 = vmatpush1.msra.mxu0 0.0
    %2915 = vmatprep.subr.mxu0 0.0
    %2916 = vmatpush1.msra.mxu0 0.0
    %2917 = vmatprep.subr.mxu0 0.0
    %2918 = vmatpush1.msra.mxu0 0.0
    %2919 = vmatprep.subr.mxu0 0.0
    %2920 = vmatpush1.msra.mxu0 0.0
    %2921 = vmatprep.subr.mxu0 0.0
    %2922 = vmatpush1.msra.mxu0 0.0
    %2923 = vmatprep.mubr.f32.mxu0 0.0
    %2924 = vmatmul.mubr.f32.gmra.mrb[0].mxu0 %v2855
    %v2925 = vpop.f32.mrb[0].mxu0
    %v2926 = vadd.f32 0.0, %v2925
    %v2927 = vpop.f32.mrb[0].mxu0
    %2928 = vmatprep.mubr.f32.mxu0 0.0
    %2929 = vmatmul.mubr.f32.gmra.mrb[0].mxu0 %v2857
    %v2930 = vpop.f32.mrb[0].mxu0
    %v2931 = vadd.f32 0.0, %v2930
    %v2932 = vpop.f32.mrb[0].mxu0
    %2933 = vdwg.mxu0
    %v2934 = vadd.f32 %v2413, %v2926
    %v2935 = vadd.f32 %v2414, %v2931
    %v2936 = vsel %vm79, %v2934, 0.0
    %2937 = vadd.xlane.f32.xlu0 %v2936
    %v2938 = vpop.xlane.xlu0 %2937
    %v2939 = vsel %vm79, %v2935, 0.0
    %2940 = vadd.xlane.f32.xlu0 %v2939
    %v2941 = vpop.xlane.xlu0 %2940
    %v2942 = vmul.f32 %v2938, %v86
    %v2943 = vmul.f32 %v2941, %v86
    %v2944 = vsub.f32 %v2934, %v2942
    %v2945 = vsub.f32 %v2935, %v2943
    %v2946 = vmul.f32 %v2944, %v2944
    %v2947 = vmul.f32 %v2945, %v2945
    %v2948 = vsel %vm79, %v2946, 0.0
    %2949 = vadd.xlane.f32.xlu0 %v2948
    %v2950 = vpop.xlane.xlu0 %2949
    %v2951 = vsel %vm79, %v2947, 0.0
    %2952 = vadd.xlane.f32.xlu0 %v2951
    %v2953 = vpop.xlane.xlu0 %2952
    %v2954 = vmul.f32 %v2950, %v86
    %v2955 = vmul.f32 %v2953, %v86
    %v2956 = vadd.f32 %v2954, 1e-05
    %v2957 = vadd.f32 %v2955, 1e-05
    %v2958 = vrsqrt.pop %v2956
    %v2959 = vrsqrt.pop %v2957
    %v2960 = vmul.f32 %v2944, %v2958
    %v2961 = vmul.f32 %v2945, %v2959
    %v2962 = vmul.f32 %v2960, %v1441
    %v2963 = vmul.f32 %v2961, %v1441
    %v2964 = vadd.f32 %v2962, %v1447
    %v2965 = vadd.f32 %v2963, %v1447
    %v2967 = vsel %vm79, %v2964, 0
    %v2970 = vsel %vm79, %v2965, 0
    %2972 = vmatprep.subr.mxu0 0.0
    %2973 = vmatpush1.msra.mxu0 %v1450
    %2974 = vmatprep.subr.mxu0 0.0
    %2975 = vmatpush1.msra.mxu0 %v1451
    %2976 = vmatprep.subr.mxu0 0.0
    %2977 = vmatpush1.msra.mxu0 %v1452
    %2978 = vmatprep.subr.mxu0 0.0
    %2979 = vmatpush1.msra.mxu0 %v1453
    %2980 = vmatprep.subr.mxu0 0.0
    %2981 = vmatpush1.msra.mxu0 0.0
    %2982 = vmatprep.subr.mxu0 0.0
    %2983 = vmatpush1.msra.mxu0 0.0
    %2984 = vmatprep.subr.mxu0 0.0
    %2985 = vmatpush1.msra.mxu0 0.0
    %2986 = vmatprep.subr.mxu0 0.0
    %2987 = vmatpush1.msra.mxu0 0.0
    %2988 = vmatprep.subr.mxu0 0.0
    %2989 = vmatpush1.msra.mxu0 0.0
    %2990 = vmatprep.subr.mxu0 0.0
    %2991 = vmatpush1.msra.mxu0 0.0
    %2992 = vmatprep.subr.mxu0 0.0
    %2993 = vmatpush1.msra.mxu0 0.0
    %2994 = vmatprep.subr.mxu0 0.0
    %2995 = vmatpush1.msra.mxu0 0.0
    %2996 = vmatprep.subr.mxu0 0.0
    %2997 = vmatpush1.msra.mxu0 0.0
    %2998 = vmatprep.subr.mxu0 0.0
    %2999 = vmatpush1.msra.mxu0 0.0
    %3000 = vmatprep.subr.mxu0 0.0
    %3001 = vmatpush1.msra.mxu0 0.0
    %3002 = vmatprep.subr.mxu0 0.0
    %3003 = vmatpush1.msra.mxu0 0.0
    %3004 = vmatprep.subr.mxu0 0.0
    %3005 = vmatpush1.msra.mxu0 0.0
    %3006 = vmatprep.subr.mxu0 0.0
    %3007 = vmatpush1.msra.mxu0 0.0
    %3008 = vmatprep.subr.mxu0 0.0
    %3009 = vmatpush1.msra.mxu0 0.0
    %3010 = vmatprep.subr.mxu0 0.0
    %3011 = vmatpush1.msra.mxu0 0.0
    %3012 = vmatprep.subr.mxu0 0.0
    %3013 = vmatpush1.msra.mxu0 0.0
    %3014 = vmatprep.subr.mxu0 0.0
    %3015 = vmatpush1.msra.mxu0 0.0
    %3016 = vmatprep.subr.mxu0 0.0
    %3017 = vmatpush1.msra.mxu0 0.0
    %3018 = vmatprep.subr.mxu0 0.0
    %3019 = vmatpush1.msra.mxu0 0.0
    %3020 = vmatprep.subr.mxu0 0.0
    %3021 = vmatpush1.msra.mxu0 0.0
    %3022 = vmatprep.subr.mxu0 0.0
    %3023 = vmatpush1.msra.mxu0 0.0
    %3024 = vmatprep.subr.mxu0 0.0
    %3025 = vmatpush1.msra.mxu0 0.0
    %3026 = vmatprep.subr.mxu0 0.0
    %3027 = vmatpush1.msra.mxu0 0.0
    %3028 = vmatprep.subr.mxu0 0.0
    %3029 = vmatpush1.msra.mxu0 0.0
    %3030 = vmatprep.subr.mxu0 0.0
    %3031 = vmatpush1.msra.mxu0 0.0
    %3032 = vmatprep.subr.mxu0 0.0
    %3033 = vmatpush1.msra.mxu0 0.0
    %3034 = vmatprep.subr.mxu0 0.0
    %3035 = vmatpush1.msra.mxu0 0.0
    %3036 = vmatprep.mubr.f32.mxu0 0.0
    %3037 = vmatmul.mubr.f32.gmra.mrb[0].mxu0 %v2967
    %v3038 = vpop.f32.mrb[0].mxu0
    %v3039 = vadd.f32 %v1458, %v3038
    %v3040 = vpop.f32.mrb[0].mxu0
    %3041 = vmatprep.mubr.f32.mxu0 0.0
    %3042 = vmatmul.mubr.f32.gmra.mrb[0].mxu0 %v2970
    %v3043 = vpop.f32.mrb[0].mxu0
    %v3044 = vadd.f32 %v1458, %v3043
    %v3045 = vpop.f32.mrb[0].mxu0
    %3046 = vdwg.mxu0
    %v3047 = vmul.f32 %v3039, %v3039
    %v3048 = vmul.f32 %v3044, %v3044
    %v3049 = vmul.f32 %v3039, %v3047
    %v3050 = vmul.f32 %v3044, %v3048
    %v3051 = vmul.f32 %v3049, 0.044715
    %v3052 = vmul.f32 %v3050, 0.044715
    %v3053 = vadd.f32 %v3039, %v3051
    %v3054 = vadd.f32 %v3044, %v3052
    %v3055 = vmul.f32 %v3053, 0.7978846
    %v3056 = vmul.f32 %v3054, 0.7978846
    %v3057 = vtanh.pop %v3055
    %v3058 = vtanh.pop %v3056
    %v3059 = vadd.f32 %v3057, 1.0
    %v3060 = vadd.f32 %v3058, 1.0
    %v3061 = vmul.f32 %v3059, 0.5
    %v3062 = vmul.f32 %v3060, 0.5
    %v3063 = vmul.f32 %v3039, %v3061
    %v3064 = vmul.f32 %v3044, %v3062
    %3065 = vmatprep.subr.mxu0 0.0
    %3066 = vmatpush1.msra.mxu0 %v1558
    %3067 = vmatprep.subr.mxu0 0.0
    %3068 = vmatpush1.msra.mxu0 %v1559
    %3069 = vmatprep.subr.mxu0 0.0
    %3070 = vmatpush1.msra.mxu0 %v1560
    %3071 = vmatprep.subr.mxu0 0.0
    %3072 = vmatpush1.msra.mxu0 %v1561
    %3073 = vmatprep.subr.mxu0 0.0
    %3074 = vmatpush1.msra.mxu0 %v1562
    %3075 = vmatprep.subr.mxu0 0.0
    %3076 = vmatpush1.msra.mxu0 %v1563
    %3077 = vmatprep.subr.mxu0 0.0
    %3078 = vmatpush1.msra.mxu0 %v1564
    %3079 = vmatprep.subr.mxu0 0.0
    %3080 = vmatpush1.msra.mxu0 %v1565
    %3081 = vmatprep.subr.mxu0 0.0
    %3082 = vmatpush1.msra.mxu0 %v1566
    %3083 = vmatprep.subr.mxu0 0.0
    %3084 = vmatpush1.msra.mxu0 %v1567
    %3085 = vmatprep.subr.mxu0 0.0
    %3086 = vmatpush1.msra.mxu0 %v1568
    %3087 = vmatprep.subr.mxu0 0.0
    %3088 = vmatpush1.msra.mxu0 %v1569
    %3089 = vmatprep.subr.mxu0 0.0
    %3090 = vmatpush1.msra.mxu0 %v1570
    %3091 = vmatprep.subr.mxu0 0.0
    %3092 = vmatpush1.msra.mxu0 %v1571
    %3093 = vmatprep.subr.mxu0 0.0
    %3094 = vmatpush1.msra.mxu0 %v1572
    %3095 = vmatprep.subr.mxu0 0.0
    %3096 = vmatpush1.msra.mxu0 %v1573
    %3097 = vmatprep.subr.mxu0 0.0
    %3098 = vmatpush1.msra.mxu0 0.0
    %3099 = vmatprep.subr.mxu0 0.0
    %3100 = vmatpush1.msra.mxu0 0.0
    %3101 = vmatprep.subr.mxu0 0.0
    %3102 = vmatpush1.msra.mxu0 0.0
    %3103 = vmatprep.subr.mxu0 0.0
    %3104 = vmatpush1.msra.mxu0 0.0
    %3105 = vmatprep.subr.mxu0 0.0
    %3106 = vmatpush1.msra.mxu0 0.0
    %3107 = vmatprep.subr.mxu0 0.0
    %3108 = vmatpush1.msra.mxu0 0.0
    %3109 = vmatprep.subr.mxu0 0.0
    %3110 = vmatpush1.msra.mxu0 0.0
    %3111 = vmatprep.subr.mxu0 0.0
    %3112 = vmatpush1.msra.mxu0 0.0
    %3113 = vmatprep.subr.mxu0 0.0
    %3114 = vmatpush1.msra.mxu0 0.0
    %3115 = vmatprep.subr.mxu0 0.0
    %3116 = vmatpush1.msra.mxu0 0.0
    %3117 = vmatprep.subr.mxu0 0.0
    %3118 = vmatpush1.msra.mxu0 0.0
    %3119 = vmatprep.subr.mxu0 0.0
    %3120 = vmatpush1.msra.mxu0 0.0
    %3121 = vmatprep.subr.mxu0 0.0
    %3122 = vmatpush1.msra.mxu0 0.0
    %3123 = vmatprep.subr.mxu0 0.0
    %3124 = vmatpush1.msra.mxu0 0.0
    %3125 = vmatprep.subr.mxu0 0.0
    %3126 = vmatpush1.msra.mxu0 0.0
    %3127 = vmatprep.subr.mxu0 0.0
    %3128 = vmatpush1.msra.mxu0 0.0
    %3129 = vmatprep.mubr.f32.mxu0 0.0
    %3130 = vmatmul.mubr.f32.gmra.mrb[0].mxu0 %v3063
    %v3131 = vpop.f32.mrb[0].mxu0
    %v3132 = vadd.f32 0.0, %v3131
    %v3133 = vpop.f32.mrb[0].mxu0
    %3134 = vmatprep.mubr.f32.mxu0 0.0
    %3135 = vmatmul.mubr.f32.gmra.mrb[0].mxu0 %v3064
    %v3136 = vpop.f32.mrb[0].mxu0
    %v3137 = vadd.f32 0.0, %v3136
    %v3138 = vpop.f32.mrb[0].mxu0
    %3139 = vdwg.mxu0
    %v3140 = vadd.f32 %v2934, %v3132
    %v3141 = vadd.f32 %v2935, %v3137
    %v3142 = vadd.f32 %v3140, %v1653
    %v3143 = vadd.f32 %v3141, %v1653
    %v3144 = vsel %vm79, %v3142, 0.0
    %3145 = vadd.xlane.f32.xlu0 %v3144
    %v3146 = vpop.xlane.xlu0 %3145
    %v3147 = vsel %vm79, %v3143, 0.0
    %3148 = vadd.xlane.f32.xlu0 %v3147
    %v3149 = vpop.xlane.xlu0 %3148
    %v3150 = vmul.f32 %v3146, %v86
    %v3151 = vmul.f32 %v3149, %v86
    %v3152 = vsub.f32 %v3142, %v3150
    %v3153 = vsub.f32 %v3143, %v3151
    %v3154 = vmul.f32 %v3152, %v3152
    %v3155 = vmul.f32 %v3153, %v3153
    %v3156 = vsel %vm79, %v3154, 0.0
    %3157 = vadd.xlane.f32.xlu0 %v3156
    %v3158 = vpop.xlane.xlu0 %3157
    %v3159 = vsel %vm79, %v3155, 0.0
    %3160 = vadd.xlane.f32.xlu0 %v3159
    %v3161 = vpop.xlane.xlu0 %3160
    %v3162 = vmul.f32 %v3158, %v86
    %v3163 = vmul.f32 %v3161, %v86
    %v3164 = vadd.f32 %v3162, 1e-05
    %v3165 = vadd.f32 %v3163, 1e-05
    %v3166 = vrsqrt.pop %v3164
    %v3167 = vrsqrt.pop %v3165
    %v3168 = vmul.f32 %v3152, %v3166
    %v3169 = vmul.f32 %v3153, %v3167
    %v3170 = vmul.f32 %v3168, %v1673
    %v3171 = vmul.f32 %v3169, %v1673
    %v3172 = vadd.f32 %v3170, %v1678
    %v3173 = vadd.f32 %v3171, %v1678
    %3174 = vrot.lane.b32.xlu0 %v35, 127
    %v3175 = vpop.permute.xlu0 %3174
    %v3177 = vld [vmem:[%s1] sm:$0xff]
    %v3178 = vld [vmem:[%s1 + $0x8] sm:$0xff]
    %v3179 = vld [vmem:[%s2] sm:$0xff]
    %v3180 = vld [vmem:[%s2 + $0x8] sm:$0xff]
    %v3181 = vmul.f32 %v3177, %v3177
    %v3182 = vmul.f32 %v3178, %v3178
    %v3183 = vmul.f32 %v3177, %v3179
    %v3184 = vmul.f32 %v3178, %v3180
    %v3185 = vadd.f32 %v35, %v3183
    %v3186 = vadd.f32 %v3175, %v3184
    %v3187 = vadd.f32 %v3181, 0.25
    %v3188 = vadd.f32 %v3182, 0.25
    %v3189 = vrsqrt.pop %v3187
    %v3190 = vrsqrt.pop %v3188
    %v3191 = vrcp.pop %v3187
    %v3192 = vmul.f32 0.25, %v3191
    %v3193 = vrcp.pop %v3188
    %v3194 = vmul.f32 0.25, %v3193
    %v3195 = vmul.f32 %v3177, 0.5
    %v3196 = vmul.f32 %v3178, 0.5
    %v3197 = vmul.f32 %v3195, %v3189
    %v3198 = vmul.f32 %v3196, %v3190
    %v3199 = vmax.f32 %v3177, 1e-20
    %v3200 = vmax.f32 %v3178, 1e-20
    %v3201 = vlog2.pop %v3199
    %v3202 = vmul.f32 %v3201, 0.6931472
    %v3203 = vlog2.pop %v3200
    %v3204 = vmul.f32 %v3203, 0.6931472
    %v3205 = vmul.f32 %v3202, 0.25
    %v3206 = vmul.f32 %v3204, 0.25
    %v3207 = vld [vmem:[#allocation2 + $0x21f] sm:$0x1]
    %3209 = vset.pattern.permute.xlu0 0
    %3210 = vperm.xlu0 %3209, %v3205
    %v3211 = vpop.permute.xlu0 %3210
    %3214 = vset.pattern.permute.xlu0 0
    %3215 = vperm.xlu0 %3214, %v3206
    %v3216 = vpop.permute.xlu0 %3215
    %v3218 = vlaneseq
    %v3219 = vshrl.u32 %v3218, 7
    %v3220 = vsub.s32 0, %v3219
    %v3221 = vrot.slane %v3207, %v3220
    %v3222 = vmul.f32 %v3211, %v3221
    %v3223 = vmul.f32 %v3216, %v3221
    %v3224 = vmul.f32 %v3222, 6.2831855
    %v3225 = vmul.f32 %v3223, 6.2831855
    %v3226 = vld [vmem:[#allocation2 + $0x220] sm:$0x1]
    %v3227 = vlaneseq
    %v3228 = vshrl.u32 %v3227, 7
    %v3229 = vsub.s32 0, %v3228
    %v3230 = vrot.slane %v3226, %v3229
    %v3231 = vmul.f32 %v3211, %v3230
    %v3232 = vmul.f32 %v3216, %v3230
    %v3233 = vand.u32 2147483647, %v3224
    %vm3234 = vcmp.le.f32.partialorder %v3233, 0.7853982
    %vm3235 = vcmp.lt.s32.totalorder %v3224, 0
    %v3236 = vand.u32 %v3224, 2139095040
    %v3237 = vshrl.u32 %v3236, 23
    %v3238 = vsub.s32 %v3237, 127
    %v3239 = vand.u32 2147483647, %v3224
    %v3240 = vand.u32 %v3239, 8388607
    %v3241 = vor.u32 %v3240, 8388608
    %v3242 = vsub.s32 0, %v3241
    %v3243 = vadd.s32 %v3238, 1
    %vm3244 = vcmp.gt.s32.totalorder %v3243, 0
    %v3245 = vsel %vm3244, %v3243, 0
    %v3246 = vshrl.u32 %v3245, 5
    %v3247 = vand.u32 %v3245, 31
    %v3248 = vsub.s32 32, %v3247
    %v3249 = vshrl.u32 683565275, %v3248
    %v3250 = vshll.u32 683565275, %v3247
    %v3251 = vshrl.u32 2475754826, %v3248
    %v3252 = vor.u32 %v3250, %v3251
    %v3253 = vshll.u32 2475754826, %v3247
    %v3254 = vshrl.u32 2131351028, %v3248
    %v3255 = vor.u32 %v3253, %v3254
    %v3256 = vshll.u32 2131351028, %v3247
    %v3257 = vshrl.u32 2102212464, %v3248
    %v3258 = vor.u32 %v3256, %v3257
    %v3259 = vshll.u32 2102212464, %v3247
    %v3260 = vshrl.u32 920167782, %v3248
    %v3261 = vor.u32 %v3259, %v3260
    %v3262 = vshll.u32 920167782, %v3247
    %v3263 = vshrl.u32 1326507024, %v3248
    %v3264 = vor.u32 %v3262, %v3263
    %vm3265 = vcmp.lt.s32.totalorder %v3246, 1
    %vm3266 = vcmp.lt.s32.totalorder %v3246, 2
    %vm3267 = vcmp.lt.s32.totalorder %v3246, 3
    %vm3268 = vcmp.lt.s32.totalorder %v3246, 4
    %v3269 = vsel %vm3265, %v3249, %v3252
    %v3270 = vsel %vm3268, %v3258, 2102212464
    %v3271 = vsel %vm3267, %v3255, %v3270
    %v3272 = vsel %vm3266, %v3269, %v3271
    %v3273 = vsel %vm3265, %v3252, %v3255
    %v3274 = vsel %vm3268, %v3261, 920167782
    %v3275 = vsel %vm3267, %v3258, %v3274
    %v3276 = vsel %vm3266, %v3273, %v3275
    %v3277 = vsel %vm3265, %v3255, %v3258
    %v3278 = vsel %vm3268, %v3264, 1326507024
    %v3279 = vsel %vm3267, %v3261, %v3278
    %v3280 = vsel %vm3266, %v3277, %v3279
    %v3281 = vshll.u32 %v3241, 8
    %v3282 = vmul.u32.u64.compose %v3281, %v3280
    %v3283 = vextract.low.u32 %v3282
    %v3284 = vextract.high.u32 %v3282
    %v3285 = vmul.u32.u64.compose %v3281, %v3276
    %v3286 = vextract.low.u32 %v3285
    %v3287 = vextract.high.u32 %v3285
    %v3288 = vmul.u32 %v3281, %v3272
    %v3289 = vadd.s32 %v3284, %v3286
    %vm3290 = vc.u32 %v3284, %v3286
    %v3291 = vadd.s32 %v3287, 1
    %v3292 = vsel %vm3290, %v3291, %v3287
    %v3293 = vadd.s32 %v3288, %v3292
    %v3294 = vadd.s32 %v3293, 536870912
    %v3295 = vshrl.u32 %v3294, 30
    %v3296 = vshll.u32 %v3295, 30
    %v3297 = vsub.s32 %v3293, %v3296
    %vm3298 = vcmp.lt.s32.totalorder %v3297, 0
    %v3299 = vsub.s32 0, %v3297
    %v3300 = vsel %vm3298, %v3299, %v3297
    %v3301 = vclz %v3300
    %v3302 = vsub.s32 %v3301, 2
    %vm3303 = vcmp.gt.s32.totalorder 0, %v3302
    %v3304 = vsel %vm3303, 0, %v3302
    %v3305 = vsub.s32 32, %v3304
    %v3306 = vshll.u32 %v3297, %v3304
    %v3307 = vshrl.u32 %v3289, %v3305
    %v3308 = vor.u32 %v3306, %v3307
    %v3309 = vsub.s32 4294967266, %v3304
    %v3310 = vadd.s32 %v3309, 127
    %v3311 = vshll.u32 %v3310, 23
    %v3312 = vor.u32 4788187, %v3311
    %v3313 = vand.u32 2147483647, %v3312
    %v3315 = vcvt.s32.f32 %v3308
    %v3316 = vmul.f32 %v3315, %v3313
    %v3317 = vxor.u32 %v3316, 2147483648
    %v3318 = vsel %vm3235, %v3317, %v3316
    %v3319 = vsub.s32 4, %v3295
    %v3320 = vsel %vm3235, %v3319, %v3295
    %v3321 = vsel %vm3234, %v3224, %v3318
    %v3322 = vsel %vm3234, 0, %v3320
    %v3323 = vcosq.f32.pop %v3321
    %v3324 = vsinq.f32.pop %v3321
    %vm3325 = vweird.f32 %v3224
    %v3326 = vadd.s32 %v3322, 3
    %v3327 = vand.u32 %v3326, 3
    %vm3328 = vcmp.lt.s32.totalorder %v3327, 2
    %vm3329 = vcmp.eq.s32.totalorder %v3327, 0
    %v3330 = vxor.u32 %v3324, 2147483648
    %v3331 = vsel %vm3329, %v3323, %v3330
    %vm3332 = vcmp.eq.s32.totalorder %v3327, 2
    %v3333 = vxor.u32 %v3323, 2147483648
    %v3334 = vsel %vm3332, %v3333, %v3324
    %v3335 = vsel %vm3328, %v3331, %v3334
    %v3336 = vsel %vm3325, nan, %v3335
    %v3337 = vand.u32 2147483647, %v3225
    %vm3338 = vcmp.le.f32.partialorder %v3337, 0.7853982
    %vm3339 = vcmp.lt.s32.totalorder %v3225, 0
    %v3340 = vand.u32 %v3225, 2139095040
    %v3341 = vshrl.u32 %v3340, 23
    %v3342 = vsub.s32 %v3341, 127
    %v3343 = vand.u32 2147483647, %v3225
    %v3344 = vand.u32 %v3343, 8388607
    %v3345 = vor.u32 %v3344, 8388608
    %v3346 = vsub.s32 0, %v3345
    %v3347 = vadd.s32 %v3342, 1
    %vm3348 = vcmp.gt.s32.totalorder %v3347, 0
    %v3349 = vsel %vm3348, %v3347, 0
    %v3350 = vshrl.u32 %v3349, 5
    %v3351 = vand.u32 %v3349, 31
    %v3352 = vsub.s32 32, %v3351
    %v3353 = vshrl.u32 683565275, %v3352
    %v3354 = vshll.u32 683565275, %v3351
    %v3355 = vshrl.u32 2475754826, %v3352
    %v3356 = vor.u32 %v3354, %v3355
    %v3357 = vshll.u32 2475754826, %v3351
    %v3358 = vshrl.u32 2131351028, %v3352
    %v3359 = vor.u32 %v3357, %v3358
    %v3360 = vshll.u32 2131351028, %v3351
    %v3361 = vshrl.u32 2102212464, %v3352
    %v3362 = vor.u32 %v3360, %v3361
    %v3363 = vshll.u32 2102212464, %v3351
    %v3364 = vshrl.u32 920167782, %v3352
    %v3365 = vor.u32 %v3363, %v3364
    %v3366 = vshll.u32 920167782, %v3351
    %v3367 = vshrl.u32 1326507024, %v3352
    %v3368 = vor.u32 %v3366, %v3367
    %vm3369 = vcmp.lt.s32.totalorder %v3350, 1
    %vm3370 = vcmp.lt.s32.totalorder %v3350, 2
    %vm3371 = vcmp.lt.s32.totalorder %v3350, 3
    %vm3372 = vcmp.lt.s32.totalorder %v3350, 4
    %v3373 = vsel %vm3369, %v3353, %v3356
    %v3374 = vsel %vm3372, %v3362, 2102212464
    %v3375 = vsel %vm3371, %v3359, %v3374
    %v3376 = vsel %vm3370, %v3373, %v3375
    %v3377 = vsel %vm3369, %v3356, %v3359
    %v3378 = vsel %vm3372, %v3365, 920167782
    %v3379 = vsel %vm3371, %v3362, %v3378
    %v3380 = vsel %vm3370, %v3377, %v3379
    %v3381 = vsel %vm3369, %v3359, %v3362
    %v3382 = vsel %vm3372, %v3368, 1326507024
    %v3383 = vsel %vm3371, %v3365, %v3382
    %v3384 = vsel %vm3370, %v3381, %v3383
    %v3385 = vshll.u32 %v3345, 8
    %v3386 = vmul.u32.u64.compose %v3385, %v3384
    %v3387 = vextract.low.u32 %v3386
    %v3388 = vextract.high.u32 %v3386
    %v3389 = vmul.u32.u64.compose %v3385, %v3380
    %v3390 = vextract.low.u32 %v3389
    %v3391 = vextract.high.u32 %v3389
    %v3392 = vmul.u32 %v3385, %v3376
    %v3393 = vadd.s32 %v3388, %v3390
    %vm3394 = vc.u32 %v3388, %v3390
    %v3395 = vadd.s32 %v3391, 1
    %v3396 = vsel %vm3394, %v3395, %v3391
    %v3397 = vadd.s32 %v3392, %v3396
    %v3398 = vadd.s32 %v3397, 536870912
    %v3399 = vshrl.u32 %v3398, 30
    %v3400 = vshll.u32 %v3399, 30
    %v3401 = vsub.s32 %v3397, %v3400
    %vm3402 = vcmp.lt.s32.totalorder %v3401, 0
    %v3403 = vsub.s32 0, %v3401
    %v3404 = vsel %vm3402, %v3403, %v3401
    %v3405 = vclz %v3404
    %v3406 = vsub.s32 %v3405, 2
    %vm3407 = vcmp.gt.s32.totalorder 0, %v3406
    %v3408 = vsel %vm3407, 0, %v3406
    %v3409 = vsub.s32 32, %v3408
    %v3410 = vshll.u32 %v3401, %v3408
    %v3411 = vshrl.u32 %v3393, %v3409
    %v3412 = vor.u32 %v3410, %v3411
    %v3413 = vsub.s32 4294967266, %v3408
    %v3414 = vadd.s32 %v3413, 127
    %v3415 = vshll.u32 %v3414, 23
    %v3416 = vor.u32 4788187, %v3415
    %v3417 = vand.u32 2147483647, %v3416
    %v3419 = vcvt.s32.f32 %v3412
    %v3420 = vmul.f32 %v3419, %v3417
    %v3421 = vxor.u32 %v3420, 2147483648
    %v3422 = vsel %vm3339, %v3421, %v3420
    %v3423 = vsub.s32 4, %v3399
    %v3424 = vsel %vm3339, %v3423, %v3399
    %v3425 = vsel %vm3338, %v3225, %v3422
    %v3426 = vsel %vm3338, 0, %v3424
    %v3427 = vcosq.f32.pop %v3425
    %v3428 = vsinq.f32.pop %v3425
    %vm3429 = vweird.f32 %v3225
    %v3430 = vadd.s32 %v3426, 3
    %v3431 = vand.u32 %v3430, 3
    %vm3432 = vcmp.lt.s32.totalorder %v3431, 2
    %vm3433 = vcmp.eq.s32.totalorder %v3431, 0
    %v3434 = vxor.u32 %v3428, 2147483648
    %v3435 = vsel %vm3433, %v3427, %v3434
    %vm3436 = vcmp.eq.s32.totalorder %v3431, 2
    %v3437 = vxor.u32 %v3427, 2147483648
    %v3438 = vsel %vm3436, %v3437, %v3428
    %v3439 = vsel %vm3432, %v3435, %v3438
    %v3440 = vsel %vm3429, nan, %v3439
    %v3441 = vld [vmem:[#allocation2 + $0x1f8] sm:$0xff]
    %v3442 = vld [vmem:[#allocation2 + $0x200] sm:$0xff]
    %vm3443 = vcmask 130048
    %v3445 = vsel %vm3443, %v3336, 0
    %v3448 = vsel %vm3443, %v3440, 0
    %3450 = vmatprep.subr.mxu0 0.0
    %3451 = vmatpush1.msra.mxu0 %v3441
    %3452 = vmatprep.subr.mxu0 0.0
    %3453 = vmatpush1.msra.mxu0 %v3442
    %3454 = vmatprep.subr.mxu0 0.0
    %3455 = vmatpush1.msra.mxu0 0.0
    %3456 = vmatprep.subr.mxu0 0.0
    %3457 = vmatpush1.msra.mxu0 0.0
    %3458 = vmatprep.subr.mxu0 0.0
    %3459 = vmatpush1.msra.mxu0 0.0
    %3460 = vmatprep.subr.mxu0 0.0
    %3461 = vmatpush1.msra.mxu0 0.0
    %3462 = vmatprep.subr.mxu0 0.0
    %3463 = vmatpush1.msra.mxu0 0.0
    %3464 = vmatprep.subr.mxu0 0.0
    %3465 = vmatpush1.msra.mxu0 0.0
    %3466 = vmatprep.subr.mxu0 0.0
    %3467 = vmatpush1.msra.mxu0 0.0
    %3468 = vmatprep.subr.mxu0 0.0
    %3469 = vmatpush1.msra.mxu0 0.0
    %3470 = vmatprep.subr.mxu0 0.0
    %3471 = vmatpush1.msra.mxu0 0.0
    %3472 = vmatprep.subr.mxu0 0.0
    %3473 = vmatpush1.msra.mxu0 0.0
    %3474 = vmatprep.subr.mxu0 0.0
    %3475 = vmatpush1.msra.mxu0 0.0
    %3476 = vmatprep.subr.mxu0 0.0
    %3477 = vmatpush1.msra.mxu0 0.0
    %3478 = vmatprep.subr.mxu0 0.0
    %3479 = vmatpush1.msra.mxu0 0.0
    %3480 = vmatprep.subr.mxu0 0.0
    %3481 = vmatpush1.msra.mxu0 0.0
    %3482 = vmatprep.subr.mxu0 0.0
    %3483 = vmatpush1.msra.mxu0 0.0
    %3484 = vmatprep.subr.mxu0 0.0
    %3485 = vmatpush1.msra.mxu0 0.0
    %3486 = vmatprep.subr.mxu0 0.0
    %3487 = vmatpush1.msra.mxu0 0.0
    %3488 = vmatprep.subr.mxu0 0.0
    %3489 = vmatpush1.msra.mxu0 0.0
    %3490 = vmatprep.subr.mxu0 0.0
    %3491 = vmatpush1.msra.mxu0 0.0
    %3492 = vmatprep.subr.mxu0 0.0
    %3493 = vmatpush1.msra.mxu0 0.0
    %3494 = vmatprep.subr.mxu0 0.0
    %3495 = vmatpush1.msra.mxu0 0.0
    %3496 = vmatprep.subr.mxu0 0.0
    %3497 = vmatpush1.msra.mxu0 0.0
    %3498 = vmatprep.subr.mxu0 0.0
    %3499 = vmatpush1.msra.mxu0 0.0
    %3500 = vmatprep.subr.mxu0 0.0
    %3501 = vmatpush1.msra.mxu0 0.0
    %3502 = vmatprep.subr.mxu0 0.0
    %3503 = vmatpush1.msra.mxu0 0.0
    %3504 = vmatprep.subr.mxu0 0.0
    %3505 = vmatpush1.msra.mxu0 0.0
    %3506 = vmatprep.subr.mxu0 0.0
    %3507 = vmatpush1.msra.mxu0 0.0
    %3508 = vmatprep.subr.mxu0 0.0
    %3509 = vmatpush1.msra.mxu0 0.0
    %3510 = vmatprep.subr.mxu0 0.0
    %3511 = vmatpush1.msra.mxu0 0.0
    %3512 = vmatprep.subr.mxu0 0.0
    %3513 = vmatpush1.msra.mxu0 0.0
    %3514 = vmatprep.mubr.f32.mxu0 0.0
    %3515 = vmatmul.mubr.f32.gmra.mrb[0].mxu0 %v3445
    %v3516 = vpop.f32.mrb[0].mxu0
    %v3517 = vadd.f32 0.0, %v3516
    %v3518 = vpop.f32.mrb[0].mxu0
    %3519 = vmatprep.mubr.f32.mxu0 0.0
    %3520 = vmatmul.mubr.f32.gmra.mrb[0].mxu0 %v3448
    %v3521 = vpop.f32.mrb[0].mxu0
    %v3522 = vadd.f32 0.0, %v3521
    %v3523 = vpop.f32.mrb[0].mxu0
    %3524 = vdwg.mxu0
    %v3525 = vadd.f32 %v3231, %v3517
    %v3526 = vadd.f32 %v3232, %v3522
    %v3527 = vand.u32 2147483647, %v3224
    %vm3528 = vcmp.le.f32.partialorder %v3527, 0.7853982
    %vm3529 = vcmp.lt.s32.totalorder %v3224, 0
    %v3530 = vand.u32 %v3224, 2139095040
    %v3531 = vshrl.u32 %v3530, 23
    %v3532 = vsub.s32 %v3531, 127
    %v3533 = vand.u32 2147483647, %v3224
    %v3534 = vand.u32 %v3533, 8388607
    %v3535 = vor.u32 %v3534, 8388608
    %v3536 = vsub.s32 0, %v3535
    %v3537 = vadd.s32 %v3532, 1
    %vm3538 = vcmp.gt.s32.totalorder %v3537, 0
    %v3539 = vsel %vm3538, %v3537, 0
    %v3540 = vshrl.u32 %v3539, 5
    %v3541 = vand.u32 %v3539, 31
    %v3542 = vsub.s32 32, %v3541
    %v3543 = vshrl.u32 683565275, %v3542
    %v3544 = vshll.u32 683565275, %v3541
    %v3545 = vshrl.u32 2475754826, %v3542
    %v3546 = vor.u32 %v3544, %v3545
    %v3547 = vshll.u32 2475754826, %v3541
    %v3548 = vshrl.u32 2131351028, %v3542
    %v3549 = vor.u32 %v3547, %v3548
    %v3550 = vshll.u32 2131351028, %v3541
    %v3551 = vshrl.u32 2102212464, %v3542
    %v3552 = vor.u32 %v3550, %v3551
    %v3553 = vshll.u32 2102212464, %v3541
    %v3554 = vshrl.u32 920167782, %v3542
    %v3555 = vor.u32 %v3553, %v3554
    %v3556 = vshll.u32 920167782, %v3541
    %v3557 = vshrl.u32 1326507024, %v3542
    %v3558 = vor.u32 %v3556, %v3557
    %vm3559 = vcmp.lt.s32.totalorder %v3540, 1
    %vm3560 = vcmp.lt.s32.totalorder %v3540, 2
    %vm3561 = vcmp.lt.s32.totalorder %v3540, 3
    %vm3562 = vcmp.lt.s32.totalorder %v3540, 4
    %v3563 = vsel %vm3559, %v3543, %v3546
    %v3564 = vsel %vm3562, %v3552, 2102212464
    %v3565 = vsel %vm3561, %v3549, %v3564
    %v3566 = vsel %vm3560, %v3563, %v3565
    %v3567 = vsel %vm3559, %v3546, %v3549
    %v3568 = vsel %vm3562, %v3555, 920167782
    %v3569 = vsel %vm3561, %v3552, %v3568
    %v3570 = vsel %vm3560, %v3567, %v3569
    %v3571 = vsel %vm3559, %v3549, %v3552
    %v3572 = vsel %vm3562, %v3558, 1326507024
    %v3573 = vsel %vm3561, %v3555, %v3572
    %v3574 = vsel %vm3560, %v3571, %v3573
    %v3575 = vshll.u32 %v3535, 8
    %v3576 = vmul.u32.u64.compose %v3575, %v3574
    %v3577 = vextract.low.u32 %v3576
    %v3578 = vextract.high.u32 %v3576
    %v3579 = vmul.u32.u64.compose %v3575, %v3570
    %v3580 = vextract.low.u32 %v3579
    %v3581 = vextract.high.u32 %v3579
    %v3582 = vmul.u32 %v3575, %v3566
    %v3583 = vadd.s32 %v3578, %v3580
    %vm3584 = vc.u32 %v3578, %v3580
    %v3585 = vadd.s32 %v3581, 1
    %v3586 = vsel %vm3584, %v3585, %v3581
    %v3587 = vadd.s32 %v3582, %v3586
    %v3588 = vadd.s32 %v3587, 536870912
    %v3589 = vshrl.u32 %v3588, 30
    %v3590 = vshll.u32 %v3589, 30
    %v3591 = vsub.s32 %v3587, %v3590
    %vm3592 = vcmp.lt.s32.totalorder %v3591, 0
    %v3593 = vsub.s32 0, %v3591
    %v3594 = vsel %vm3592, %v3593, %v3591
    %v3595 = vclz %v3594
    %v3596 = vsub.s32 %v3595, 2
    %vm3597 = vcmp.gt.s32.totalorder 0, %v3596
    %v3598 = vsel %vm3597, 0, %v3596
    %v3599 = vsub.s32 32, %v3598
    %v3600 = vshll.u32 %v3591, %v3598
    %v3601 = vshrl.u32 %v3583, %v3599
    %v3602 = vor.u32 %v3600, %v3601
    %v3603 = vsub.s32 4294967266, %v3598
    %v3604 = vadd.s32 %v3603, 127
    %v3605 = vshll.u32 %v3604, 23
    %v3606 = vor.u32 4788187, %v3605
    %v3607 = vand.u32 2147483647, %v3606
    %v3609 = vcvt.s32.f32 %v3602
    %v3610 = vmul.f32 %v3609, %v3607
    %v3611 = vxor.u32 %v3610, 2147483648
    %v3612 = vsel %vm3529, %v3611, %v3610
    %v3613 = vsub.s32 4, %v3589
    %v3614 = vsel %vm3529, %v3613, %v3589
    %v3615 = vsel %vm3528, %v3224, %v3612
    %v3616 = vsel %vm3528, 0, %v3614
    %v3617 = vcosq.f32.pop %v3615
    %v3618 = vsinq.f32.pop %v3615
    %vm3619 = vweird.f32 %v3224
    %v3620 = vand.u32 %v3616, 3
    %vm3621 = vcmp.lt.s32.totalorder %v3620, 2
    %vm3622 = vcmp.eq.s32.totalorder %v3620, 0
    %v3623 = vxor.u32 %v3618, 2147483648
    %v3624 = vsel %vm3622, %v3617, %v3623
    %vm3625 = vcmp.eq.s32.totalorder %v3620, 2
    %v3626 = vxor.u32 %v3617, 2147483648
    %v3627 = vsel %vm3625, %v3626, %v3618
    %v3628 = vsel %vm3621, %v3624, %v3627
    %v3629 = vsel %vm3619, nan, %v3628
    %v3630 = vand.u32 2147483647, %v3225
    %vm3631 = vcmp.le.f32.partialorder %v3630, 0.7853982
    %vm3632 = vcmp.lt.s32.totalorder %v3225, 0
    %v3633 = vand.u32 %v3225, 2139095040
    %v3634 = vshrl.u32 %v3633, 23
    %v3635 = vsub.s32 %v3634, 127
    %v3636 = vand.u32 2147483647, %v3225
    %v3637 = vand.u32 %v3636, 8388607
    %v3638 = vor.u32 %v3637, 8388608
    %v3639 = vsub.s32 0, %v3638
    %v3640 = vadd.s32 %v3635, 1
    %vm3641 = vcmp.gt.s32.totalorder %v3640, 0
    %v3642 = vsel %vm3641, %v3640, 0
    %v3643 = vshrl.u32 %v3642, 5
    %v3644 = vand.u32 %v3642, 31
    %v3645 = vsub.s32 32, %v3644
    %v3646 = vshrl.u32 683565275, %v3645
    %v3647 = vshll.u32 683565275, %v3644
    %v3648 = vshrl.u32 2475754826, %v3645
    %v3649 = vor.u32 %v3647, %v3648
    %v3650 = vshll.u32 2475754826, %v3644
    %v3651 = vshrl.u32 2131351028, %v3645
    %v3652 = vor.u32 %v3650, %v3651
    %v3653 = vshll.u32 2131351028, %v3644
    %v3654 = vshrl.u32 2102212464, %v3645
    %v3655 = vor.u32 %v3653, %v3654
    %v3656 = vshll.u32 2102212464, %v3644
    %v3657 = vshrl.u32 920167782, %v3645
    %v3658 = vor.u32 %v3656, %v3657
    %v3659 = vshll.u32 920167782, %v3644
    %v3660 = vshrl.u32 1326507024, %v3645
    %v3661 = vor.u32 %v3659, %v3660
    %vm3662 = vcmp.lt.s32.totalorder %v3643, 1
    %vm3663 = vcmp.lt.s32.totalorder %v3643, 2
    %vm3664 = vcmp.lt.s32.totalorder %v3643, 3
    %vm3665 = vcmp.lt.s32.totalorder %v3643, 4
    %v3666 = vsel %vm3662, %v3646, %v3649
    %v3667 = vsel %vm3665, %v3655, 2102212464
    %v3668 = vsel %vm3664, %v3652, %v3667
    %v3669 = vsel %vm3663, %v3666, %v3668
    %v3670 = vsel %vm3662, %v3649, %v3652
    %v3671 = vsel %vm3665, %v3658, 920167782
    %v3672 = vsel %vm3664, %v3655, %v3671
    %v3673 = vsel %vm3663, %v3670, %v3672
    %v3674 = vsel %vm3662, %v3652, %v3655
    %v3675 = vsel %vm3665, %v3661, 1326507024
    %v3676 = vsel %vm3664, %v3658, %v3675
    %v3677 = vsel %vm3663, %v3674, %v3676
    %v3678 = vshll.u32 %v3638, 8
    %v3679 = vmul.u32.u64.compose %v3678, %v3677
    %v3680 = vextract.low.u32 %v3679
    %v3681 = vextract.high.u32 %v3679
    %v3682 = vmul.u32.u64.compose %v3678, %v3673
    %v3683 = vextract.low.u32 %v3682
    %v3684 = vextract.high.u32 %v3682
    %v3685 = vmul.u32 %v3678, %v3669
    %v3686 = vadd.s32 %v3681, %v3683
    %vm3687 = vc.u32 %v3681, %v3683
    %v3688 = vadd.s32 %v3684, 1
    %v3689 = vsel %vm3687, %v3688, %v3684
    %v3690 = vadd.s32 %v3685, %v3689
    %v3691 = vadd.s32 %v3690, 536870912
    %v3692 = vshrl.u32 %v3691, 30
    %v3693 = vshll.u32 %v3692, 30
    %v3694 = vsub.s32 %v3690, %v3693
    %vm3695 = vcmp.lt.s32.totalorder %v3694, 0
    %v3696 = vsub.s32 0, %v3694
    %v3697 = vsel %vm3695, %v3696, %v3694
    %v3698 = vclz %v3697
    %v3699 = vsub.s32 %v3698, 2
    %vm3700 = vcmp.gt.s32.totalorder 0, %v3699
    %v3701 = vsel %vm3700, 0, %v3699
    %v3702 = vsub.s32 32, %v3701
    %v3703 = vshll.u32 %v3694, %v3701
    %v3704 = vshrl.u32 %v3686, %v3702
    %v3705 = vor.u32 %v3703, %v3704
    %v3706 = vsub.s32 4294967266, %v3701
    %v3707 = vadd.s32 %v3706, 127
    %v3708 = vshll.u32 %v3707, 23
    %v3709 = vor.u32 4788187, %v3708
    %v3710 = vand.u32 2147483647, %v3709
    %v3712 = vcvt.s32.f32 %v3705
    %v3713 = vmul.f32 %v3712, %v3710
    %v3714 = vxor.u32 %v3713, 2147483648
    %v3715 = vsel %vm3632, %v3714, %v3713
    %v3716 = vsub.s32 4, %v3692
    %v3717 = vsel %vm3632, %v3716, %v3692
    %v3718 = vsel %vm3631, %v3225, %v3715
    %v3719 = vsel %vm3631, 0, %v3717
    %v3720 = vcosq.f32.pop %v3718
    %v3721 = vsinq.f32.pop %v3718
    %vm3722 = vweird.f32 %v3225
    %v3723 = vand.u32 %v3719, 3
    %vm3724 = vcmp.lt.s32.totalorder %v3723, 2
    %vm3725 = vcmp.eq.s32.totalorder %v3723, 0
    %v3726 = vxor.u32 %v3721, 2147483648
    %v3727 = vsel %vm3725, %v3720, %v3726
    %vm3728 = vcmp.eq.s32.totalorder %v3723, 2
    %v3729 = vxor.u32 %v3720, 2147483648
    %v3730 = vsel %vm3728, %v3729, %v3721
    %v3731 = vsel %vm3724, %v3727, %v3730
    %v3732 = vsel %vm3722, nan, %v3731
    %v3733 = vld [vmem:[#allocation2 + $0x208] sm:$0xff]
    %v3734 = vld [vmem:[#allocation2 + $0x210] sm:$0xff]
    %v3736 = vsel %vm3443, %v3629, 0
    %v3739 = vsel %vm3443, %v3732, 0
    %3741 = vmatprep.subr.mxu0 0.0
    %3742 = vmatpush1.msra.mxu0 %v3733
    %3743 = vmatprep.subr.mxu0 0.0
    %3744 = vmatpush1.msra.mxu0 %v3734
    %3745 = vmatprep.subr.mxu0 0.0
    %3746 = vmatpush1.msra.mxu0 0.0
    %3747 = vmatprep.subr.mxu0 0.0
    %3748 = vmatpush1.msra.mxu0 0.0
    %3749 = vmatprep.subr.mxu0 0.0
    %3750 = vmatpush1.msra.mxu0 0.0
    %3751 = vmatprep.subr.mxu0 0.0
    %3752 = vmatpush1.msra.mxu0 0.0
    %3753 = vmatprep.subr.mxu0 0.0
    %3754 = vmatpush1.msra.mxu0 0.0
    %3755 = vmatprep.subr.mxu0 0.0
    %3756 = vmatpush1.msra.mxu0 0.0
    %3757 = vmatprep.subr.mxu0 0.0
    %3758 = vmatpush1.msra.mxu0 0.0
    %3759 = vmatprep.subr.mxu0 0.0
    %3760 = vmatpush1.msra.mxu0 0.0
    %3761 = vmatprep.subr.mxu0 0.0
    %3762 = vmatpush1.msra.mxu0 0.0
    %3763 = vmatprep.subr.mxu0 0.0
    %3764 = vmatpush1.msra.mxu0 0.0
    %3765 = vmatprep.subr.mxu0 0.0
    %3766 = vmatpush1.msra.mxu0 0.0
    %3767 = vmatprep.subr.mxu0 0.0
    %3768 = vmatpush1.msra.mxu0 0.0
    %3769 = vmatprep.subr.mxu0 0.0
    %3770 = vmatpush1.msra.mxu0 0.0
    %3771 = vmatprep.subr.mxu0 0.0
    %3772 = vmatpush1.msra.mxu0 0.0
    %3773 = vmatprep.subr.mxu0 0.0
    %3774 = vmatpush1.msra.mxu0 0.0
    %3775 = vmatprep.subr.mxu0 0.0
    %3776 = vmatpush1.msra.mxu0 0.0
    %3777 = vmatprep.subr.mxu0 0.0
    %3778 = vmatpush1.msra.mxu0 0.0
    %3779 = vmatprep.subr.mxu0 0.0
    %3780 = vmatpush1.msra.mxu0 0.0
    %3781 = vmatprep.subr.mxu0 0.0
    %3782 = vmatpush1.msra.mxu0 0.0
    %3783 = vmatprep.subr.mxu0 0.0
    %3784 = vmatpush1.msra.mxu0 0.0
    %3785 = vmatprep.subr.mxu0 0.0
    %3786 = vmatpush1.msra.mxu0 0.0
    %3787 = vmatprep.subr.mxu0 0.0
    %3788 = vmatpush1.msra.mxu0 0.0
    %3789 = vmatprep.subr.mxu0 0.0
    %3790 = vmatpush1.msra.mxu0 0.0
    %3791 = vmatprep.subr.mxu0 0.0
    %3792 = vmatpush1.msra.mxu0 0.0
    %3793 = vmatprep.subr.mxu0 0.0
    %3794 = vmatpush1.msra.mxu0 0.0
    %3795 = vmatprep.subr.mxu0 0.0
    %3796 = vmatpush1.msra.mxu0 0.0
    %3797 = vmatprep.subr.mxu0 0.0
    %3798 = vmatpush1.msra.mxu0 0.0
    %3799 = vmatprep.subr.mxu0 0.0
    %3800 = vmatpush1.msra.mxu0 0.0
    %3801 = vmatprep.subr.mxu0 0.0
    %3802 = vmatpush1.msra.mxu0 0.0
    %3803 = vmatprep.subr.mxu0 0.0
    %3804 = vmatpush1.msra.mxu0 0.0
    %3805 = vmatprep.mubr.f32.mxu0 0.0
    %3806 = vmatmul.mubr.f32.gmra.mrb[0].mxu0 %v3736
    %v3807 = vpop.f32.mrb[0].mxu0
    %v3808 = vadd.f32 0.0, %v3807
    %v3809 = vpop.f32.mrb[0].mxu0
    %3810 = vmatprep.mubr.f32.mxu0 0.0
    %3811 = vmatmul.mubr.f32.gmra.mrb[0].mxu0 %v3739
    %v3812 = vpop.f32.mrb[0].mxu0
    %v3813 = vadd.f32 0.0, %v3812
    %v3814 = vpop.f32.mrb[0].mxu0
    %3815 = vdwg.mxu0
    %v3816 = vadd.f32 %v3525, %v3808
    %v3817 = vadd.f32 %v3526, %v3813
    %v3818 = vld [vmem:[#allocation2 + $0x221] sm:$0x1]
    %v3819 = vlaneseq
    %v3820 = vshrl.u32 %v3819, 7
    %v3821 = vsub.s32 0, %v3820
    %v3822 = vrot.slane %v3818, %v3821
    %v3823 = vadd.f32 %v3816, %v3822
    %v3824 = vadd.f32 %v3817, %v3822
    %v3825 = vadd.f32 %v3823, %v3172
    %v3826 = vadd.f32 %v3824, %v3173
    %v3827 = vxor.u32 %v3825, 2147483648
    %v3828 = vxor.u32 %v3826, 2147483648
    %v3829 = vmul.f32 %v3827, 1.442695
    %v3830 = vpow.pop %v3829
    %v3831 = vmul.f32 %v3828, 1.442695
    %v3832 = vpow.pop %v3831
    %v3833 = vadd.f32 %v3830, 1.0
    %v3834 = vadd.f32 %v3832, 1.0
    %v3835 = vrcp.pop %v3833
    %v3836 = vmul.f32 1.0, %v3835
    %v3837 = vrcp.pop %v3834
    %v3838 = vmul.f32 1.0, %v3837
    %v3839 = vmul.f32 %v3825, %v3836
    %v3840 = vmul.f32 %v3826, %v3838
    %v3841 = vmul.f32 %v3189, %v3185
    %v3842 = vmul.f32 %v3190, %v3186
    %v3843 = vadd.f32 %v3841, 0.0
    %v3844 = vadd.f32 %v3842, 0.0
    %v3845 = vsub.f32 %v3841, %v3843
    %v3846 = vsub.f32 %v3842, %v3844
    %v3847 = vmul.f32 %v3845, %v3845
    %v3848 = vmul.f32 %v3846, %v3846
    %v3849 = vadd.f32 %v3847, 0.0
    %v3850 = vadd.f32 %v3848, 0.0
    %v3851 = vadd.f32 %v3849, 1e-05
    %v3852 = vadd.f32 %v3850, 1e-05
    %v3853 = vrsqrt.pop %v3851
    %v3854 = vrsqrt.pop %v3852
    %v3855 = vmul.f32 %v3845, %v3853
    %v3856 = vmul.f32 %v3846, %v3854
    %v3857 = vld [vmem:[#allocation2 + $0x226] sm:$0x1]
    %v3858 = vlaneseq
    %v3859 = vshrl.u32 %v3858, 7
    %v3860 = vsub.s32 0, %v3859
    %v3861 = vrot.slane %v3857, %v3860
    %v3862 = vmul.f32 %v3839, %v3861
    %v3863 = vmul.f32 %v3840, %v3861
    %v3864 = vsel %vm79, %v3862, 0.0
    %3865 = vadd.xlane.f32.xlu0 %v3864
    %v3866 = vpop.xlane.xlu0 %3865
    %v3867 = vsel %vm79, %v3863, 0.0
    %3868 = vadd.xlane.f32.xlu0 %v3867
    %v3869 = vpop.xlane.xlu0 %3868
    %v3870 = vadd.f32 %v3866, 1.0
    %v3871 = vadd.f32 %v3869, 1.0
    %v3872 = vmul.f32 %v3855, %v3870
    %v3873 = vmul.f32 %v3856, %v3871
    %v3874 = vld [vmem:[#allocation2 + $0x224] sm:$0x1]
    %3876 = vset.pattern.permute.xlu0 0
    %3877 = vperm.xlu0 %3876, %v3872
    %v3878 = vpop.permute.xlu0 %3877
    %3881 = vset.pattern.permute.xlu0 0
    %3882 = vperm.xlu0 %3881, %v3873
    %v3883 = vpop.permute.xlu0 %3882
    %v3885 = vlaneseq
    %v3886 = vshrl.u32 %v3885, 7
    %v3887 = vsub.s32 0, %v3886
    %v3888 = vrot.slane %v3874, %v3887
    %v3889 = vmul.f32 %v3878, %v3888
    %v3890 = vmul.f32 %v3883, %v3888
    %v3891 = vld [vmem:[#allocation2 + $0x223] sm:$0x1]
    %v3892 = vlaneseq
    %v3893 = vshrl.u32 %v3892, 7
    %v3894 = vsub.s32 0, %v3893
    %v3895 = vrot.slane %v3891, %v3894
    %v3896 = vadd.f32 %v3889, %v3895
    %v3897 = vadd.f32 %v3890, %v3895
    %v3898 = vxor.u32 %v3896, 2147483648
    %v3899 = vxor.u32 %v3897, 2147483648
    %v3900 = vmul.f32 %v3898, 1.442695
    %v3901 = vpow.pop %v3900
    %v3902 = vmul.f32 %v3899, 1.442695
    %v3903 = vpow.pop %v3902
    %v3904 = vadd.f32 %v3901, 1.0
    %v3905 = vadd.f32 %v3903, 1.0
    %v3906 = vrcp.pop %v3904
    %v3907 = vmul.f32 1.0, %v3906
    %v3908 = vrcp.pop %v3905
    %v3909 = vmul.f32 1.0, %v3908
    %v3910 = vmul.f32 %v3896, %v3907
    %v3911 = vmul.f32 %v3897, %v3909
    %v3912 = vld [vmem:[#allocation2 + $0x222] sm:$0x1]
    %v3913 = vld [vmem:[#allocation2 + $0x225] sm:$0x1]
    %v3914 = vlaneseq
    %v3915 = vshrl.u32 %v3914, 7
    %v3916 = vsub.s32 0, %v3915
    %v3917 = vrot.slane %v3913, %v3916
    %v3918 = vmul.f32 %v3910, %v3917
    %v3919 = vmul.f32 %v3911, %v3917
    %v3920 = vsel %vm79, %v3918, 0.0
    %3921 = vadd.xlane.f32.xlu0 %v3920
    %v3922 = vpop.xlane.xlu0 %3921
    %v3923 = vsel %vm79, %v3919, 0.0
    %3924 = vadd.xlane.f32.xlu0 %v3923
    %v3925 = vpop.xlane.xlu0 %3924
    %v3926 = vlaneseq
    %v3927 = vshrl.u32 %v3926, 7
    %v3928 = vsub.s32 0, %v3927
    %v3929 = vrot.slane %v3912, %v3928
    %v3930 = vadd.f32 %v3922, %v3929
    %v3931 = vadd.f32 %v3925, %v3929
    %v3932 = vld [vmem:[#allocation2 + $0x227] sm:$0x1]
    %v3933 = vlaneseq
    %v3934 = vshrl.u32 %v3933, 7
    %v3935 = vsub.s32 0, %v3934
    %v3936 = vrot.slane %v3932, %v3935
    %v3937 = vmul.f32 %v3839, %v3936
    %v3938 = vmul.f32 %v3840, %v3936
    %v3939 = vsel %vm79, %v3937, 0.0
    %3940 = vadd.xlane.f32.xlu0 %v3939
    %v3941 = vpop.xlane.xlu0 %3940
    %v3942 = vsel %vm79, %v3938, 0.0
    %3943 = vadd.xlane.f32.xlu0 %v3942
    %v3944 = vpop.xlane.xlu0 %3943
    %v3945 = vadd.f32 %v3941, 1.0
    %v3946 = vadd.f32 %v3944, 1.0
    %v3947 = vmul.f32 %v3930, %v3945
    %v3948 = vmul.f32 %v3931, %v3946
    %v3949 = vadd.f32 %v3947, %v3841
    %v3950 = vadd.f32 %v3948, %v3842
    %v3951 = vadd.f32 %v3949, 0.0
    %v3952 = vadd.f32 %v3950, 0.0
    %v3953 = vsub.f32 %v3949, %v3951
    %v3954 = vsub.f32 %v3950, %v3952
    %v3955 = vmul.f32 %v3953, %v3953
    %v3956 = vmul.f32 %v3954, %v3954
    %v3957 = vadd.f32 %v3955, 0.0
    %v3958 = vadd.f32 %v3956, 0.0
    %v3959 = vadd.f32 %v3957, 1e-05
    %v3960 = vadd.f32 %v3958, 1e-05
    %v3961 = vrsqrt.pop %v3959
    %v3962 = vrsqrt.pop %v3960
    %v3963 = vmul.f32 %v3953, %v3961
    %v3964 = vmul.f32 %v3954, %v3962
    %v3965 = vld [vmem:[#allocation2 + $0x22b] sm:$0x1]
    %v3966 = vlaneseq
    %v3967 = vshrl.u32 %v3966, 7
    %v3968 = vsub.s32 0, %v3967
    %v3969 = vrot.slane %v3965, %v3968
    %v3970 = vmul.f32 %v3839, %v3969
    %v3971 = vmul.f32 %v3840, %v3969
    %v3972 = vsel %vm79, %v3970, 0.0
    %3973 = vadd.xlane.f32.xlu0 %v3972
    %v3974 = vpop.xlane.xlu0 %3973
    %v3975 = vsel %vm79, %v3971, 0.0
    %3976 = vadd.xlane.f32.xlu0 %v3975
    %v3977 = vpop.xlane.xlu0 %3976
    %v3978 = vadd.f32 %v3974, 1.0
    %v3979 = vadd.f32 %v3977, 1.0
    %v3980 = vmul.f32 %v3963, %v3978
    %v3981 = vmul.f32 %v3964, %v3979
    %v3982 = vld [vmem:[#allocation2 + $0x229] sm:$0x1]
    %3984 = vset.pattern.permute.xlu0 0
    %3985 = vperm.xlu0 %3984, %v3980
    %v3986 = vpop.permute.xlu0 %3985
    %3989 = vset.pattern.permute.xlu0 0
    %3990 = vperm.xlu0 %3989, %v3981
    %v3991 = vpop.permute.xlu0 %3990
    %v3993 = vlaneseq
    %v3994 = vshrl.u32 %v3993, 7
    %v3995 = vsub.s32 0, %v3994
    %v3996 = vrot.slane %v3982, %v3995
    %v3997 = vmul.f32 %v3986, %v3996
    %v3998 = vmul.f32 %v3991, %v3996
    %v3999 = vld [vmem:[#allocation2 + $0x228] sm:$0x1]
    %v4000 = vlaneseq
    %v4001 = vshrl.u32 %v4000, 7
    %v4002 = vsub.s32 0, %v4001
    %v4003 = vrot.slane %v3999, %v4002
    %v4004 = vadd.f32 %v3997, %v4003
    %v4005 = vadd.f32 %v3998, %v4003
    %v4006 = vxor.u32 %v4004, 2147483648
    %v4007 = vxor.u32 %v4005, 2147483648
    %v4008 = vmul.f32 %v4006, 1.442695
    %v4009 = vpow.pop %v4008
    %v4010 = vmul.f32 %v4007, 1.442695
    %v4011 = vpow.pop %v4010
    %v4012 = vadd.f32 %v4009, 1.0
    %v4013 = vadd.f32 %v4011, 1.0
    %v4014 = vrcp.pop %v4012
    %v4015 = vmul.f32 1.0, %v4014
    %v4016 = vrcp.pop %v4013
    %v4017 = vmul.f32 1.0, %v4016
    %v4018 = vmul.f32 %v4004, %v4015
    %v4019 = vmul.f32 %v4005, %v4017
    %v4020 = vld [vmem:[#allocation2 + $0x22a] sm:$0x1]
    %v4021 = vlaneseq
    %v4022 = vshrl.u32 %v4021, 7
    %v4023 = vsub.s32 0, %v4022
    %v4024 = vrot.slane %v4020, %v4023
    %v4025 = vmul.f32 %v4018, %v4024
    %v4026 = vmul.f32 %v4019, %v4024
    %v4027 = vsel %vm79, %v4025, 0.0
    %4028 = vadd.xlane.f32.xlu0 %v4027
    %v4029 = vpop.xlane.xlu0 %4028
    %v4030 = vsel %vm79, %v4026, 0.0
    %4031 = vadd.xlane.f32.xlu0 %v4030
    %v4032 = vpop.xlane.xlu0 %4031
    %v4033 = vadd.f32 %v4029, %v3929
    %v4034 = vadd.f32 %v4032, %v3929
    %v4035 = vld [vmem:[#allocation2 + $0x22c] sm:$0x1]
    %v4036 = vlaneseq
    %v4037 = vshrl.u32 %v4036, 7
    %v4038 = vsub.s32 0, %v4037
    %v4039 = vrot.slane %v4035, %v4038
    %v4040 = vmul.f32 %v3839, %v4039
    %v4041 = vmul.f32 %v3840, %v4039
    %v4042 = vsel %vm79, %v4040, 0.0
    %4043 = vadd.xlane.f32.xlu0 %v4042
    %v4044 = vpop.xlane.xlu0 %4043
    %v4045 = vsel %vm79, %v4041, 0.0
    %4046 = vadd.xlane.f32.xlu0 %v4045
    %v4047 = vpop.xlane.xlu0 %4046
    %v4048 = vadd.f32 %v4044, 1.0
    %v4049 = vadd.f32 %v4047, 1.0
    %v4050 = vmul.f32 %v4033, %v4048
    %v4051 = vmul.f32 %v4034, %v4049
    %4054 = vrot.lane.b32.xlu0 %v3949, 1
    %v4055 = vpop.permute.xlu0 %4054
    %4056 = vrot.lane.b32.xlu0 %v3950, 1
    %v4057 = vpop.permute.xlu0 %4056
    %v4060 = vadd.f32 %v4050, %v4055
    %v4061 = vadd.f32 %v4051, %v4057
    %v4062 = vmul.f32 %v3192, %v3185
    %v4063 = vmul.f32 %v3194, %v3186
    %4066 = vrot.lane.b32.xlu0 %v4060, 127
    %v4067 = vpop.permute.xlu0 %4066
    %4068 = vrot.lane.b32.xlu0 %v4061, 127
    %v4069 = vpop.permute.xlu0 %4068
    %v4072 = vmul.f32 %v3197, %v4067
    %v4073 = vmul.f32 %v3198, %v4069
    %v4074 = vadd.f32 %v4062, %v4072
    %v4075 = vadd.f32 %v4063, %v4073
    %v4076 = vmax.f32 %v4074, -1.0
    %v4077 = vmax.f32 %v4075, -1.0
    %v4078 = vmin.f32 %v4076, 1.0
    %v4079 = vmin.f32 %v4077, 1.0
    %v4080 = vsub.f32 %v4078, %v35
    %v4081 = vsub.f32 %v4079, %v3175
    %v4082 = vmul.f32 %v4080, %v4080
    %v4083 = vmul.f32 %v4081, %v4081
    %v4084 = vadd.f32 %v4082, 0.0
    %v4085 = vadd.f32 %v4083, 0.0
    %v4086 = vmul.f32 %v3181, 0.25
    %v4087 = vmul.f32 %v3182, 0.25
    %v4088 = vrcp.pop %v4086
    %v4089 = vmul.f32 %v3187, %v4088
    %v4090 = vrcp.pop %v4087
    %v4091 = vmul.f32 %v3188, %v4090
    %v4092 = vmul.f32 %v4084, %v4089
    %v4093 = vmul.f32 %v4085, %v4091
    %vm4094 = vcmask 7168
    %v4095 = vsel %vm4094, %v4092, 0.0
    %v4096 = vsel %vm4094, %v4093, 0.0
    %v4097 = vadd.f32 %v4095, %v4096
    %v4098 = vrot.slane %v4097, 4
    %v4099 = vadd.f32 %v4097, %v4098
    %v4100 = vrot.slane %v4099, 2
    %v4101 = vadd.f32 %v4099, %v4100
    %v4102 = vrot.slane %v4101, 1
    %v4103 = vadd.f32 %v4101, %v4102
    %v4104 = vrcp.pop 16.0
    %v4105 = vmul.f32 %v4103, %v4104
    %vm4106 = vcmask 0
    %4107 = vst.msk [vmem:[#allocation5] sm:$0x1] %vm4106, %v4105
    %v4108 = vsel %vm4094, %v4084, 0.0
    %v4109 = vsel %vm4094, %v4085, 0.0
    %v4110 = vadd.f32 %v4108, %v4109
    %v4111 = vrot.slane %v4110, 4
    %v4112 = vadd.f32 %v4110, %v4111
    %v4113 = vrot.slane %v4112, 2
    %v4114 = vadd.f32 %v4112, %v4113
    %v4115 = vrot.slane %v4114, 1
    %v4116 = vadd.f32 %v4114, %v4115
    %v4117 = vmul.f32 %v4116, %v4104
    %4118 = vst.msk [vmem:[#allocation6] sm:$0x1] %vm4106, %v4117
    // Predicated region
    $region22: #{image_autoregressive_diffusion_forward.3} parent=1 // pred_check
      _
    $region23: #{image_autoregressive_diffusion_forward.3} parent=1 // pred_check_branch
      %4120 = sbr.rel (0) target = $region25
    $region24: #{image_autoregressive_diffusion_forward.3} parent=1 // pred_region
      %s4122 = ssub.s32 16, 16
      %4123 = vsyncadd [#allocation4], %s4122
      %s4125 = sshll.u32 [#allocation5], 4
      %s4126 = int_to_ptr.vmem [resolvable:$true] %s4125
      %4128 = dma.vmem_to_hbm [thread:$0]  %s4126, 16, %s4, [#allocation4]
    $region25: #{image_autoregressive_diffusion_forward.3} parent=1 // pred_fallthru
      _
    // Predicated region
    $region26: #{image_autoregressive_diffusion_forward.3} parent=1 // pred_check
      _
    $region27: #{image_autoregressive_diffusion_forward.3} parent=1 // pred_check_branch
      %4130 = sbr.rel (0) target = $region29
    $region28: #{image_autoregressive_diffusion_forward.3} parent=1 // pred_region
      %s4132 = ssub.s32 16, 16
      %4133 = vsyncadd [#allocation7], %s4132
      %s4135 = sshll.u32 [#allocation6], 4
      %s4136 = int_to_ptr.vmem [resolvable:$true] %s4135
      %4138 = dma.vmem_to_hbm [thread:$0]  %s4136, 16, %s5, [#allocation7]
    $region29: #{image_autoregressive_diffusion_forward.3} parent=1 // pred_fallthru
      _
    // Predicated region
    $region30: #{image_autoregressive_diffusion_forward.3} parent=1 // pred_check
      _
    $region31: #{image_autoregressive_diffusion_forward.3} parent=1 // pred_check_branch
      %4140 = sbr.rel (0) target = $region33
    $region32: #{image_autoregressive_diffusion_forward.3} parent=1 // pred_region
      %4141 = dma.done [#allocation4], 16
    $region33: #{image_autoregressive_diffusion_forward.3} parent=1 // pred_fallthru
      _
    // Predicated region
    $region34: #{image_autoregressive_diffusion_forward.3} parent=1 // pred_check
      _
    $region35: #{image_autoregressive_diffusion_forward.3} parent=1 // pred_check_branch
      %4143 = sbr.rel (0) target = $region37
    $region36: #{image_autoregressive_diffusion_forward.3} parent=1 // pred_region
      %4144 = dma.done [#allocation7], 16
    $region37: #{image_autoregressive_diffusion_forward.3} parent=1 // pred_fallthru
      _
    %4145 = vsyncpa [#allocation3], 1
    %4146 = vsyncpa [#allocation4], 1
    %4147 = vsyncpa [#allocation7], 1

</llo_original>
